<compile_context>
chip_gen: v5e
topology: v5e:2x2
jax: 0.10.0
libtpu: 0.0.40
codegen_flags: <defaults>
</compile_context>

<pallas_src>
import functools
import math

import jax
import jax.numpy as jnp
from jax.experimental import pallas as pl
from jax.experimental.pallas import tpu as pltpu


# ---------------------------------------------------------------------------
# Host-side helpers
# ---------------------------------------------------------------------------
def _tap_masks_host(H, W):
    """(9, H*W) f32 border masks, one per 3x3 tap (implements zero padding)."""
    hw = H * W
    pos = jnp.arange(hw, dtype=jnp.int32)
    hh = pos // W
    ww = pos % W
    rows = []
    for ky in range(3):
        for kx in range(3):
            dy, dx = ky - 1, kx - 1
            valid = ((hh + dy >= 0) & (hh + dy < H) &
                     (ww + dx >= 0) & (ww + dx < W))
            rows.append(valid.astype(jnp.float32))
    return jnp.stack(rows, axis=0)


def _tap_shifts(H, W):
    """Static lane-roll amounts so rolled[:, p] == x[:, (p + dy*W + dx) % hw]."""
    hw = H * W
    return [(-(dy * W + dx)) % hw for dy in (-1, 0, 1) for dx in (-1, 0, 1)]


def _flatten_conv3x3_chunked(w_oyxi, chunk_sizes):
    """(Cout,3,3,Cin) -> (Cout, 9*Cin) in chunk-major (chunk, tap, ci) column
    order, matching the incrementally-built patch scratch layout."""
    cout = w_oyxi.shape[0]
    cols, start = [], 0
    for sz in chunk_sizes:
        blk = w_oyxi[:, :, :, start:start + sz]        # (Cout, 3, 3, sz)
        cols.append(blk.reshape(cout, 9 * sz))         # column = tap*sz + ci_local
        start += sz
    return jnp.concatenate(cols, axis=1)


# ---------------------------------------------------------------------------
# In-kernel helpers (operate on (C, H*W) f32 values; MXU operands are bf16)
# ---------------------------------------------------------------------------
def _lrelu(x):
    return jnp.where(x >= 0, x, 0.2 * x)


def _tap_columns(x, masks, shifts):
    """9 rolled+masked bf16 copies of x (C, HW).  Center tap is unmasked;
    wrapped lanes of the other taps are always out-of-image so the cyclic
    roll + mask exactly reproduces zero padding."""
    cols = []
    for t in range(9):
        shifted = pltpu.roll(x, shifts[t], axis=1) if shifts[t] != 0 else x
        col = shifted if t == 4 else shifted * masks[t:t + 1, :]
        cols.append(col.astype(jnp.bfloat16))
    return cols


def _conv3x3_value(x, w_bf16, b_f32, masks, shifts):
    """3x3 'same' conv as one bf16 MXU matmul with f32 accumulation."""
    patch = jnp.concatenate(_tap_columns(x, masks, shifts), axis=0)  # (9*Cin, HW) bf16
    out = jnp.dot(w_bf16, patch, preferred_element_type=jnp.float32)
    return out + b_f32


def _append_patch(patch_ref, chan_start, chunk, masks, shifts):
    """Write the 9 tap copies of `chunk` (C, HW) into the dense-stack patch
    scratch at rows [9*chan_start, 9*(chan_start+C))."""
    c = chunk.shape[0]
    base = 9 * chan_start
    cols = _tap_columns(chunk, masks, shifts)
    for t in range(9):
        patch_ref[base + t * c: base + (t + 1) * c, :] = cols[t]


def _se_gate(x, w1, b1, w2, b2):
    """SqueezeExcitation gate: sigmoid(W2 @ relu(W1 @ avgpool(x) + b1) + b2)."""
    pooled = jnp.mean(x, axis=1, keepdims=True)                          # (C, 1)
    h = jnp.dot(w1, pooled, preferred_element_type=jnp.float32) + b1
    h = jnp.maximum(h, 0.0)
    g = jnp.dot(w2, h, preferred_element_type=jnp.float32) + b2
    return 1.0 / (1.0 + jnp.exp(-g))                                     # (C, 1)


# ---------------------------------------------------------------------------
# Fused whole-network kernel
# ---------------------------------------------------------------------------
def _rrdbnet_kernel(*args, H, W, nf, gr, num_layers, num_blocks):
    L = num_layers
    x_ref, m_ref, wf_ref, bf_ref = args[0:4]
    rdb_refs = args[4:4 + 2 * L]                        # (w, b) per dense layer
    se_rdb = args[4 + 2 * L: 8 + 2 * L]                 # shared RDB SE (w1,b1,w2,b2)
    se_rrdb = args[8 + 2 * L: 12 + 2 * L]               # RRDB-level SE
    wm_ref, bm_ref, wl_ref, bl_ref = args[12 + 2 * L: 16 + 2 * L]
    o_ref = args[16 + 2 * L]
    patch_ref = args[17 + 2 * L]                        # (9*c_stack, HW) bf16 scratch
    y_ref = args[18 + 2 * L]                            # (nf, HW) f32 scratch

    shifts = _tap_shifts(H, W)
    masks = m_ref[...]                                  # (9, HW) f32, loaded once
    x = x_ref[0]                                        # (in_ch, HW) f32

    # conv_first
    feats = _conv3x3_value(x, wf_ref[...], bf_ref[...], masks, shifts)   # (nf, HW) f32

    # RRDBCA trunk: the SAME ResidualDenseBlockCA repeated num_blocks times.
    y_ref[...] = feats

    @pl.loop(0, num_blocks)
    def _(b):
        y = y_ref[...]
        _append_patch(patch_ref, 0, y, masks, shifts)   # chunk 0 of the dense stack
        out = None
        for l in range(L):                              # static: layer shapes differ
            w_ref, b_ref = rdb_refs[2 * l], rdb_refs[2 * l + 1]
            cin9 = 9 * (nf + l * gr)
            out = jnp.dot(w_ref[...], patch_ref[0:cin9, :],
                          preferred_element_type=jnp.float32) + b_ref[...]
            out = _lrelu(out)
            if l < L - 1:                               # append to dense-stack patch
                _append_patch(patch_ref, nf + l * gr, out, masks, shifts)
        gate = _se_gate(out, se_rdb[0][...], se_rdb[1][...],
                        se_rdb[2][...], se_rdb[3][...])
        y_ref[...] = y + out * gate                     # RDB: x + SE(out)

    y = y_ref[...]
    gate = _se_gate(y, se_rrdb[0][...], se_rrdb[1][...],
                    se_rrdb[2][...], se_rrdb[3][...])
    rrdb_out = feats + y * gate                         # RRDBCA: inputs + SE(layers(inputs))
    feats = feats + _conv3x3_value(rrdb_out, wm_ref[...], bm_ref[...], masks, shifts)
    out_img = _conv3x3_value(_lrelu(feats), wl_ref[...], bl_ref[...], masks, shifts)
    o_ref[0] = out_img.astype(o_ref.dtype)              # conv_last(lrelu(features))


def rrdbnet_ca_forward(x_nchw, params, *, num_blocks):
    """x_nchw: (N, in_ch, H, W) f32, same layout as the PyTorch module."""
    N, in_ch, H, W = x_nchw.shape
    HW = H * W
    x = x_nchw.reshape(N, in_ch, HW)                    # lane-dense channel-major
    masks = _tap_masks_host(H, W)                       # (9, HW) f32, built once

    num_layers = len(params["rdb"])
    nf = params["conv_first"][0].shape[0]
    gr = params["rdb"][0][0].shape[0] if num_layers > 1 else nf
    c_stack = nf + (num_layers - 1) * gr

    inputs = [x, masks]
    in_specs = [
        pl.BlockSpec((1, in_ch, HW), lambda n: (n, 0, 0)),
        pl.BlockSpec((9, HW), lambda n: (0, 0)),
    ]

    def add_param(arr):
        shape = tuple(arr.shape)
        inputs.append(arr)
        in_specs.append(pl.BlockSpec(shape, lambda n, _s=shape: (0,) * len(_s)))

    wf, bf = params["conv_first"]
    add_param(wf); add_param(bf)
    for w, b in params["rdb"]:
        add_param(w); add_param(b)
    for a in params["rdb_se"]:
        add_param(a)
    for a in params["rrdb_se"]:
        add_param(a)
    for name in ("conv_mid", "conv_last"):
        w, b = params[name]
        add_param(w); add_param(b)

    kernel = functools.partial(_rrdbnet_kernel, H=H, W=W, nf=nf, gr=gr,
                               num_layers=num_layers, num_blocks=num_blocks)
    out = pl.pallas_call(
        kernel,
        out_shape=jax.ShapeDtypeStruct((N, in_ch, HW), x.dtype),
        grid=(N,),
        in_specs=in_specs,
        out_specs=pl.BlockSpec((1, in_ch, HW), lambda n: (n, 0, 0)),
        scratch_shapes=[
            pltpu.VMEM((9 * c_stack, HW), jnp.bfloat16),   # incremental im2col patch
            pltpu.VMEM((nf, HW), jnp.float32),             # RDB running residual y
        ],
        compiler_params=pltpu.CompilerParams(dimension_semantics=("parallel",)),
    )(*inputs)
    return out.reshape(N, in_ch, H, W)


# ---------------------------------------------------------------------------
# Parameter initialization (kaiming_normal fan_in, zero bias, like torch)
# Weight layout: torch weight[co, ci, ky, kx] -> chunk-major flat (Cout, 9*Cin)
# columns (chunk, tap=ky*3+kx, ci_local), cast to bf16 (MXU operand dtype).
# ---------------------------------------------------------------------------
def _kaiming_conv3x3_oyxi(key, cin, cout, scale):
    std = math.sqrt(2.0 / (cin * 9))
    return jax.random.normal(key, (cout, 3, 3, cin), jnp.float32) * std * scale


def _kaiming_conv1x1(key, cin, cout, scale):
    std = math.sqrt(2.0 / cin)
    return jax.random.normal(key, (cout, cin), jnp.float32) * std * scale


def init_params(key, in_ch, nf, gr, red, num_layers):
    keys = jax.random.split(key, 8)

    def conv3(k, cin, cout, scale, chunk_sizes):
        w = _kaiming_conv3x3_oyxi(k, cin, cout, scale)
        return (_flatten_conv3x3_chunked(w, chunk_sizes).astype(jnp.bfloat16),
                jnp.zeros((cout, 1), jnp.float32))

    p = {}
    p["conv_first"] = conv3(keys[0], in_ch, nf, 1.0, [in_ch])
    p["conv_mid"] = conv3(keys[1], nf, nf, 1.0, [nf])
    p["conv_last"] = conv3(keys[2], nf, in_ch, 1.0, [nf])
    rdb = []
    lkeys = jax.random.split(keys[3], num_layers)
    for idx in range(num_layers):
        cin = nf + idx * gr
        cout = gr if idx < num_layers - 1 else nf
        chunk_sizes = [nf] + [gr] * idx                 # concat([x, out_0, ...])
        rdb.append(conv3(lkeys[idx], cin, cout, 0.1, chunk_sizes))
    p["rdb"] = rdb
    cr = nf // red
    p["rdb_se"] = (_kaiming_conv1x1(keys[4], nf, cr, 0.1), jnp.zeros((cr, 1), jnp.float32),
                   _kaiming_conv1x1(keys[5], cr, nf, 0.1), jnp.zeros((nf, 1), jnp.float32))
    p["rrdb_se"] = (_kaiming_conv1x1(keys[6], nf, cr, 0.1), jnp.zeros((cr, 1), jnp.float32),
                    _kaiming_conv1x1(keys[7], cr, nf, 0.1), jnp.zeros((nf, 1), jnp.float32))
    return p


# ---------------------------------------------------------------------------
if __name__ == "__main__":
    key = jax.random.PRNGKey(0)
    k_in, k_p = jax.random.split(key)

    N, H, W = 2, 16, 16
    in_channels, num_features, growth_rate = 4, 16, 8
    reduction, num_blocks, num_layers = 4, 2, 3

    x = jax.random.normal(k_in, (N, in_channels, H, W), jnp.float32)   # NCHW
    params = init_params(k_p, in_channels, num_features, growth_rate,
                         reduction, num_layers)

    fwd = jax.jit(functools.partial(rrdbnet_ca_forward, num_blocks=num_blocks))
    out = fwd(x, params)
    jax.block_until_ready(out)
    assert out.shape == (N, in_channels, H, W) and out.dtype == jnp.float32
    print("KERNEL_OK")
</pallas_src>

<mosaic_0001>
module attributes {stable_mosaic.version = 11 : i64} {
  func.func @_rrdbnet_kernel(%arg0: i32, %arg1: memref<1x4x256xf32, #tpu.memory_space<vmem>>, %arg2: memref<9x256xf32, #tpu.memory_space<vmem>>, %arg3: memref<16x36xbf16, #tpu.memory_space<vmem>>, %arg4: memref<16x1xf32, #tpu.memory_space<vmem>>, %arg5: memref<8x144xbf16, #tpu.memory_space<vmem>>, %arg6: memref<8x1xf32, #tpu.memory_space<vmem>>, %arg7: memref<8x216xbf16, #tpu.memory_space<vmem>>, %arg8: memref<8x1xf32, #tpu.memory_space<vmem>>, %arg9: memref<16x288xbf16, #tpu.memory_space<vmem>>, %arg10: memref<16x1xf32, #tpu.memory_space<vmem>>, %arg11: memref<4x16xf32, #tpu.memory_space<vmem>>, %arg12: memref<4x1xf32, #tpu.memory_space<vmem>>, %arg13: memref<16x4xf32, #tpu.memory_space<vmem>>, %arg14: memref<16x1xf32, #tpu.memory_space<vmem>>, %arg15: memref<4x16xf32, #tpu.memory_space<vmem>>, %arg16: memref<4x1xf32, #tpu.memory_space<vmem>>, %arg17: memref<16x4xf32, #tpu.memory_space<vmem>>, %arg18: memref<16x1xf32, #tpu.memory_space<vmem>>, %arg19: memref<16x144xbf16, #tpu.memory_space<vmem>>, %arg20: memref<16x1xf32, #tpu.memory_space<vmem>>, %arg21: memref<4x144xbf16, #tpu.memory_space<vmem>>, %arg22: memref<4x1xf32, #tpu.memory_space<vmem>>, %arg23: memref<1x4x256xf32, #tpu.memory_space<vmem>>, %arg24: memref<288x256xbf16, #tpu.memory_space<vmem>>, %arg25: memref<16x256xf32, #tpu.memory_space<vmem>>) attributes {dimension_semantics = [#tpu.dimension_semantics<parallel>], iteration_bounds = array<i64: 2>, scalar_prefetch = 0 : i64, scratch_operands = 2 : i64, tpu.core_type = #tpu.core_type<tc>, window_params = [{transform_indices = @transform_0, window_bounds = array<i64: 1, 4, 256>}, {pipeline_mode = #tpu.pipeline_mode<synchronous>, transform_indices = @transform_1, window_bounds = array<i64: 9, 256>}, {pipeline_mode = #tpu.pipeline_mode<synchronous>, transform_indices = @transform_2, window_bounds = array<i64: 16, 36>}, {pipeline_mode = #tpu.pipeline_mode<synchronous>, transform_indices = @transform_3, window_bounds = array<i64: 16, 1>}, {pipeline_mode = #tpu.pipeline_mode<synchronous>, transform_indices = @transform_4, window_bounds = array<i64: 8, 144>}, {pipeline_mode = #tpu.pipeline_mode<synchronous>, transform_indices = @transform_5, window_bounds = array<i64: 8, 1>}, {pipeline_mode = #tpu.pipeline_mode<synchronous>, transform_indices = @transform_6, window_bounds = array<i64: 8, 216>}, {pipeline_mode = #tpu.pipeline_mode<synchronous>, transform_indices = @transform_7, window_bounds = array<i64: 8, 1>}, {pipeline_mode = #tpu.pipeline_mode<synchronous>, transform_indices = @transform_8, window_bounds = array<i64: 16, 288>}, {pipeline_mode = #tpu.pipeline_mode<synchronous>, transform_indices = @transform_9, window_bounds = array<i64: 16, 1>}, {pipeline_mode = #tpu.pipeline_mode<synchronous>, transform_indices = @transform_10, window_bounds = array<i64: 4, 16>}, {pipeline_mode = #tpu.pipeline_mode<synchronous>, transform_indices = @transform_11, window_bounds = array<i64: 4, 1>}, {pipeline_mode = #tpu.pipeline_mode<synchronous>, transform_indices = @transform_12, window_bounds = array<i64: 16, 4>}, {pipeline_mode = #tpu.pipeline_mode<synchronous>, transform_indices = @transform_13, window_bounds = array<i64: 16, 1>}, {pipeline_mode = #tpu.pipeline_mode<synchronous>, transform_indices = @transform_14, window_bounds = array<i64: 4, 16>}, {pipeline_mode = #tpu.pipeline_mode<synchronous>, transform_indices = @transform_15, window_bounds = array<i64: 4, 1>}, {pipeline_mode = #tpu.pipeline_mode<synchronous>, transform_indices = @transform_16, window_bounds = array<i64: 16, 4>}, {pipeline_mode = #tpu.pipeline_mode<synchronous>, transform_indices = @transform_17, window_bounds = array<i64: 16, 1>}, {pipeline_mode = #tpu.pipeline_mode<synchronous>, transform_indices = @transform_18, window_bounds = array<i64: 16, 144>}, {pipeline_mode = #tpu.pipeline_mode<synchronous>, transform_indices = @transform_19, window_bounds = array<i64: 16, 1>}, {pipeline_mode = #tpu.pipeline_mode<synchronous>, transform_indices = @transform_20, window_bounds = array<i64: 4, 144>}, {pipeline_mode = #tpu.pipeline_mode<synchronous>, transform_indices = @transform_21, window_bounds = array<i64: 4, 1>}, {transform_indices = @transform_22, window_bounds = array<i64: 1, 4, 256>}]} {
    %c0 = arith.constant 0 : index
    %c0_0 = arith.constant 0 : index
    %0 = vector.load %arg2[%c0, %c0_0] : memref<9x256xf32, #tpu.memory_space<vmem>>, vector<9x256xf32>
    %c0_1 = arith.constant 0 : index
    %c0_2 = arith.constant 0 : index
    %c0_3 = arith.constant 0 : index
    %1 = vector.load %arg1[%c0_1, %c0_2, %c0_3] : memref<1x4x256xf32, #tpu.memory_space<vmem>>, vector<1x4x256xf32>
    %2 = vector.shape_cast %1 : vector<1x4x256xf32> to vector<4x256xf32>
    %c0_4 = arith.constant 0 : index
    %c0_5 = arith.constant 0 : index
    %3 = vector.load %arg3[%c0_4, %c0_5] : memref<16x36xbf16, #tpu.memory_space<vmem>>, vector<16x36xbf16>
    %c0_6 = arith.constant 0 : index
    %c0_7 = arith.constant 0 : index
    %4 = vector.load %arg4[%c0_6, %c0_7] : memref<16x1xf32, #tpu.memory_space<vmem>>, vector<16x1xf32>
    %c17_i32 = arith.constant 17 : i32
    %5 = tpu.dynamic_rotate %2 by %c17_i32 dim 1 : vector<4x256xf32>, i32 -> vector<4x256xf32>
    %6 = vector.extract_strided_slice %0 {offsets = [0, 0], sizes = [1, 256], strides = [1, 1]} : vector<9x256xf32> to vector<1x256xf32>
    %7 = vector.broadcast %6 : vector<1x256xf32> to vector<4x256xf32>
    %8 = arith.mulf %5, %7 : vector<4x256xf32>
    %9 = arith.truncf %8 : vector<4x256xf32> to vector<4x256xbf16>
    %c16_i32 = arith.constant 16 : i32
    %10 = tpu.dynamic_rotate %2 by %c16_i32 dim 1 : vector<4x256xf32>, i32 -> vector<4x256xf32>
    %11 = vector.extract_strided_slice %0 {offsets = [1, 0], sizes = [1, 256], strides = [1, 1]} : vector<9x256xf32> to vector<1x256xf32>
    %12 = vector.broadcast %11 : vector<1x256xf32> to vector<4x256xf32>
    %13 = arith.mulf %10, %12 : vector<4x256xf32>
    %14 = arith.truncf %13 : vector<4x256xf32> to vector<4x256xbf16>
    %c15_i32 = arith.constant 15 : i32
    %15 = tpu.dynamic_rotate %2 by %c15_i32 dim 1 : vector<4x256xf32>, i32 -> vector<4x256xf32>
    %16 = vector.extract_strided_slice %0 {offsets = [2, 0], sizes = [1, 256], strides = [1, 1]} : vector<9x256xf32> to vector<1x256xf32>
    %17 = vector.broadcast %16 : vector<1x256xf32> to vector<4x256xf32>
    %18 = arith.mulf %15, %17 : vector<4x256xf32>
    %19 = arith.truncf %18 : vector<4x256xf32> to vector<4x256xbf16>
    %c1_i32 = arith.constant 1 : i32
    %20 = tpu.dynamic_rotate %2 by %c1_i32 dim 1 : vector<4x256xf32>, i32 -> vector<4x256xf32>
    %21 = vector.extract_strided_slice %0 {offsets = [3, 0], sizes = [1, 256], strides = [1, 1]} : vector<9x256xf32> to vector<1x256xf32>
    %22 = vector.broadcast %21 : vector<1x256xf32> to vector<4x256xf32>
    %23 = arith.mulf %20, %22 : vector<4x256xf32>
    %24 = arith.truncf %23 : vector<4x256xf32> to vector<4x256xbf16>
    %25 = arith.truncf %2 : vector<4x256xf32> to vector<4x256xbf16>
    %c255_i32 = arith.constant 255 : i32
    %26 = tpu.dynamic_rotate %2 by %c255_i32 dim 1 : vector<4x256xf32>, i32 -> vector<4x256xf32>
    %27 = vector.extract_strided_slice %0 {offsets = [5, 0], sizes = [1, 256], strides = [1, 1]} : vector<9x256xf32> to vector<1x256xf32>
    %28 = vector.broadcast %27 : vector<1x256xf32> to vector<4x256xf32>
    %29 = arith.mulf %26, %28 : vector<4x256xf32>
    %30 = arith.truncf %29 : vector<4x256xf32> to vector<4x256xbf16>
    %c241_i32 = arith.constant 241 : i32
    %31 = tpu.dynamic_rotate %2 by %c241_i32 dim 1 : vector<4x256xf32>, i32 -> vector<4x256xf32>
    %32 = vector.extract_strided_slice %0 {offsets = [6, 0], sizes = [1, 256], strides = [1, 1]} : vector<9x256xf32> to vector<1x256xf32>
    %33 = vector.broadcast %32 : vector<1x256xf32> to vector<4x256xf32>
    %34 = arith.mulf %31, %33 : vector<4x256xf32>
    %35 = arith.truncf %34 : vector<4x256xf32> to vector<4x256xbf16>
    %c240_i32 = arith.constant 240 : i32
    %36 = tpu.dynamic_rotate %2 by %c240_i32 dim 1 : vector<4x256xf32>, i32 -> vector<4x256xf32>
    %37 = vector.extract_strided_slice %0 {offsets = [7, 0], sizes = [1, 256], strides = [1, 1]} : vector<9x256xf32> to vector<1x256xf32>
    %38 = vector.broadcast %37 : vector<1x256xf32> to vector<4x256xf32>
    %39 = arith.mulf %36, %38 : vector<4x256xf32>
    %40 = arith.truncf %39 : vector<4x256xf32> to vector<4x256xbf16>
    %c239_i32 = arith.constant 239 : i32
    %41 = tpu.dynamic_rotate %2 by %c239_i32 dim 1 : vector<4x256xf32>, i32 -> vector<4x256xf32>
    %42 = vector.extract_strided_slice %0 {offsets = [8, 0], sizes = [1, 256], strides = [1, 1]} : vector<9x256xf32> to vector<1x256xf32>
    %43 = vector.broadcast %42 : vector<1x256xf32> to vector<4x256xf32>
    %44 = arith.mulf %41, %43 : vector<4x256xf32>
    %45 = arith.truncf %44 : vector<4x256xf32> to vector<4x256xbf16>
    %46 = tpu.concatenate %9, %14, %19, %24, %25, %30, %35, %40, %45 in 0 : vector<4x256xbf16>, vector<4x256xbf16>, vector<4x256xbf16>, vector<4x256xbf16>, vector<4x256xbf16>, vector<4x256xbf16>, vector<4x256xbf16>, vector<4x256xbf16>, vector<4x256xbf16> -> vector<36x256xbf16>
    %cst = arith.constant dense<0.000000e+00> : vector<16x256xf32>
    %47 = tpu.matmul %3, %46, %cst {dimension_numbers = #tpu.dot_dimension_numbers<[1], [0], [0], [1], [0, 0, 1, 1], [], []>} : vector<16x36xbf16>, vector<36x256xbf16>, vector<16x256xf32> -> vector<16x256xf32>
    %48 = vector.broadcast %4 : vector<16x1xf32> to vector<16x256xf32>
    %49 = arith.addf %47, %48 : vector<16x256xf32>
    %c0_8 = arith.constant 0 : index
    %c0_9 = arith.constant 0 : index
    %50 = vector.load %arg25[%c0_8, %c0_9] : memref<16x256xf32, #tpu.memory_space<vmem>>, vector<16x256xf32>
    tpu.vector_store %arg25[%c0_8, %c0_9], %49 {strides = array<i32>} : memref<16x256xf32, #tpu.memory_space<vmem>>, vector<16x256xf32>,
    %c0_i32 = arith.constant 0 : i32
    %c2_i32 = arith.constant 2 : i32
    %51 = arith.addi %c0_i32, %c2_i32 : i32
    %c1_i32_10 = arith.constant 1 : i32
    scf.for %arg26 = %c0_i32 to %51 step %c1_i32_10  : i32 {
      %c0_60 = arith.constant 0 : index
      %c0_61 = arith.constant 0 : index
      %180 = vector.load %arg25[%c0_60, %c0_61] : memref<16x256xf32, #tpu.memory_space<vmem>>, vector<16x256xf32>
      %c17_i32_62 = arith.constant 17 : i32
      %181 = tpu.dynamic_rotate %180 by %c17_i32_62 dim 1 : vector<16x256xf32>, i32 -> vector<16x256xf32>
      %182 = vector.extract_strided_slice %0 {offsets = [0, 0], sizes = [1, 256], strides = [1, 1]} : vector<9x256xf32> to vector<1x256xf32>
      %183 = vector.broadcast %182 : vector<1x256xf32> to vector<16x256xf32>
      %184 = arith.mulf %181, %183 : vector<16x256xf32>
      %185 = arith.truncf %184 : vector<16x256xf32> to vector<16x256xbf16>
      %c16_i32_63 = arith.constant 16 : i32
      %186 = tpu.dynamic_rotate %180 by %c16_i32_63 dim 1 : vector<16x256xf32>, i32 -> vector<16x256xf32>
      %187 = vector.extract_strided_slice %0 {offsets = [1, 0], sizes = [1, 256], strides = [1, 1]} : vector<9x256xf32> to vector<1x256xf32>
      %188 = vector.broadcast %187 : vector<1x256xf32> to vector<16x256xf32>
      %189 = arith.mulf %186, %188 : vector<16x256xf32>
      %190 = arith.truncf %189 : vector<16x256xf32> to vector<16x256xbf16>
      %c15_i32_64 = arith.constant 15 : i32
      %191 = tpu.dynamic_rotate %180 by %c15_i32_64 dim 1 : vector<16x256xf32>, i32 -> vector<16x256xf32>
      %192 = vector.extract_strided_slice %0 {offsets = [2, 0], sizes = [1, 256], strides = [1, 1]} : vector<9x256xf32> to vector<1x256xf32>
      %193 = vector.broadcast %192 : vector<1x256xf32> to vector<16x256xf32>
      %194 = arith.mulf %191, %193 : vector<16x256xf32>
      %195 = arith.truncf %194 : vector<16x256xf32> to vector<16x256xbf16>
      %c1_i32_65 = arith.constant 1 : i32
      %196 = tpu.dynamic_rotate %180 by %c1_i32_65 dim 1 : vector<16x256xf32>, i32 -> vector<16x256xf32>
      %197 = vector.extract_strided_slice %0 {offsets = [3, 0], sizes = [1, 256], strides = [1, 1]} : vector<9x256xf32> to vector<1x256xf32>
      %198 = vector.broadcast %197 : vector<1x256xf32> to vector<16x256xf32>
      %199 = arith.mulf %196, %198 : vector<16x256xf32>
      %200 = arith.truncf %199 : vector<16x256xf32> to vector<16x256xbf16>
      %201 = arith.truncf %180 : vector<16x256xf32> to vector<16x256xbf16>
      %c255_i32_66 = arith.constant 255 : i32
      %202 = tpu.dynamic_rotate %180 by %c255_i32_66 dim 1 : vector<16x256xf32>, i32 -> vector<16x256xf32>
      %203 = vector.extract_strided_slice %0 {offsets = [5, 0], sizes = [1, 256], strides = [1, 1]} : vector<9x256xf32> to vector<1x256xf32>
      %204 = vector.broadcast %203 : vector<1x256xf32> to vector<16x256xf32>
      %205 = arith.mulf %202, %204 : vector<16x256xf32>
      %206 = arith.truncf %205 : vector<16x256xf32> to vector<16x256xbf16>
      %c241_i32_67 = arith.constant 241 : i32
      %207 = tpu.dynamic_rotate %180 by %c241_i32_67 dim 1 : vector<16x256xf32>, i32 -> vector<16x256xf32>
      %208 = vector.extract_strided_slice %0 {offsets = [6, 0], sizes = [1, 256], strides = [1, 1]} : vector<9x256xf32> to vector<1x256xf32>
      %209 = vector.broadcast %208 : vector<1x256xf32> to vector<16x256xf32>
      %210 = arith.mulf %207, %209 : vector<16x256xf32>
      %211 = arith.truncf %210 : vector<16x256xf32> to vector<16x256xbf16>
      %c240_i32_68 = arith.constant 240 : i32
      %212 = tpu.dynamic_rotate %180 by %c240_i32_68 dim 1 : vector<16x256xf32>, i32 -> vector<16x256xf32>
      %213 = vector.extract_strided_slice %0 {offsets = [7, 0], sizes = [1, 256], strides = [1, 1]} : vector<9x256xf32> to vector<1x256xf32>
      %214 = vector.broadcast %213 : vector<1x256xf32> to vector<16x256xf32>
      %215 = arith.mulf %212, %214 : vector<16x256xf32>
      %216 = arith.truncf %215 : vector<16x256xf32> to vector<16x256xbf16>
      %c239_i32_69 = arith.constant 239 : i32
      %217 = tpu.dynamic_rotate %180 by %c239_i32_69 dim 1 : vector<16x256xf32>, i32 -> vector<16x256xf32>
      %218 = vector.extract_strided_slice %0 {offsets = [8, 0], sizes = [1, 256], strides = [1, 1]} : vector<9x256xf32> to vector<1x256xf32>
      %219 = vector.broadcast %218 : vector<1x256xf32> to vector<16x256xf32>
      %220 = arith.mulf %217, %219 : vector<16x256xf32>
      %221 = arith.truncf %220 : vector<16x256xf32> to vector<16x256xbf16>
      %c0_70 = arith.constant 0 : index
      %c0_71 = arith.constant 0 : index
      %222 = vector.load %arg24[%c0_70, %c0_71] : memref<288x256xbf16, #tpu.memory_space<vmem>>, vector<16x256xbf16>
      tpu.vector_store %arg24[%c0_70, %c0_71], %185 {strides = array<i32>} : memref<288x256xbf16, #tpu.memory_space<vmem>>, vector<16x256xbf16>,
      %c16 = arith.constant 16 : index
      %c0_72 = arith.constant 0 : index
      %223 = vector.load %arg24[%c16, %c0_72] : memref<288x256xbf16, #tpu.memory_space<vmem>>, vector<16x256xbf16>
      tpu.vector_store %arg24[%c16, %c0_72], %190 {strides = array<i32>} : memref<288x256xbf16, #tpu.memory_space<vmem>>, vector<16x256xbf16>,
      %c32 = arith.constant 32 : index
      %c0_73 = arith.constant 0 : index
      %224 = vector.load %arg24[%c32, %c0_73] : memref<288x256xbf16, #tpu.memory_space<vmem>>, vector<16x256xbf16>
      tpu.vector_store %arg24[%c32, %c0_73], %195 {strides = array<i32>} : memref<288x256xbf16, #tpu.memory_space<vmem>>, vector<16x256xbf16>,
      %c48 = arith.constant 48 : index
      %c0_74 = arith.constant 0 : index
      %225 = vector.load %arg24[%c48, %c0_74] : memref<288x256xbf16, #tpu.memory_space<vmem>>, vector<16x256xbf16>
      tpu.vector_store %arg24[%c48, %c0_74], %200 {strides = array<i32>} : memref<288x256xbf16, #tpu.memory_space<vmem>>, vector<16x256xbf16>,
      %c64 = arith.constant 64 : index
      %c0_75 = arith.constant 0 : index
      %226 = vector.load %arg24[%c64, %c0_75] : memref<288x256xbf16, #tpu.memory_space<vmem>>, vector<16x256xbf16>
      tpu.vector_store %arg24[%c64, %c0_75], %201 {strides = array<i32>} : memref<288x256xbf16, #tpu.memory_space<vmem>>, vector<16x256xbf16>,
      %c80 = arith.constant 80 : index
      %c0_76 = arith.constant 0 : index
      %227 = vector.load %arg24[%c80, %c0_76] : memref<288x256xbf16, #tpu.memory_space<vmem>>, vector<16x256xbf16>
      tpu.vector_store %arg24[%c80, %c0_76], %206 {strides = array<i32>} : memref<288x256xbf16, #tpu.memory_space<vmem>>, vector<16x256xbf16>,
      %c96 = arith.constant 96 : index
      %c0_77 = arith.constant 0 : index
      %228 = vector.load %arg24[%c96, %c0_77] : memref<288x256xbf16, #tpu.memory_space<vmem>>, vector<16x256xbf16>
      tpu.vector_store %arg24[%c96, %c0_77], %211 {strides = array<i32>} : memref<288x256xbf16, #tpu.memory_space<vmem>>, vector<16x256xbf16>,
      %c112 = arith.constant 112 : index
      %c0_78 = arith.constant 0 : index
      %229 = vector.load %arg24[%c112, %c0_78] : memref<288x256xbf16, #tpu.memory_space<vmem>>, vector<16x256xbf16>
      tpu.vector_store %arg24[%c112, %c0_78], %216 {strides = array<i32>} : memref<288x256xbf16, #tpu.memory_space<vmem>>, vector<16x256xbf16>,
      %c128 = arith.constant 128 : index
      %c0_79 = arith.constant 0 : index
      %230 = vector.load %arg24[%c128, %c0_79] : memref<288x256xbf16, #tpu.memory_space<vmem>>, vector<16x256xbf16>
      tpu.vector_store %arg24[%c128, %c0_79], %221 {strides = array<i32>} : memref<288x256xbf16, #tpu.memory_space<vmem>>, vector<16x256xbf16>,
      %c0_80 = arith.constant 0 : index
      %c0_81 = arith.constant 0 : index
      %231 = vector.load %arg5[%c0_80, %c0_81] : memref<8x144xbf16, #tpu.memory_space<vmem>>, vector<8x144xbf16>
      %c0_82 = arith.constant 0 : index
      %c0_83 = arith.constant 0 : index
      %232 = vector.load %arg24[%c0_82, %c0_83] : memref<288x256xbf16, #tpu.memory_space<vmem>>, vector<144x256xbf16>
      %cst_84 = arith.constant dense<0.000000e+00> : vector<8x256xf32>
      %233 = tpu.matmul %231, %232, %cst_84 {dimension_numbers = #tpu.dot_dimension_numbers<[1], [0], [0], [1], [0, 0, 1, 1], [], []>} : vector<8x144xbf16>, vector<144x256xbf16>, vector<8x256xf32> -> vector<8x256xf32>
      %c0_85 = arith.constant 0 : index
      %c0_86 = arith.constant 0 : index
      %234 = vector.load %arg6[%c0_85, %c0_86] : memref<8x1xf32, #tpu.memory_space<vmem>>, vector<8x1xf32>
      %235 = vector.broadcast %234 : vector<8x1xf32> to vector<8x256xf32>
      %236 = arith.addf %233, %235 : vector<8x256xf32>
      %cst_87 = arith.constant 0.000000e+00 : f32
      %237 = vector.broadcast %cst_87 : f32 to vector<8x256xf32>
      %238 = arith.cmpf oge, %236, %237 : vector<8x256xf32>
      %cst_88 = arith.constant 2.000000e-01 : f32
      %239 = vector.broadcast %cst_88 : f32 to vector<8x256xf32>
      %240 = arith.mulf %239, %236 : vector<8x256xf32>
      %241 = arith.select %238, %236, %240 : vector<8x256xi1>, vector<8x256xf32>
      %c17_i32_89 = arith.constant 17 : i32
      %242 = tpu.dynamic_rotate %241 by %c17_i32_89 dim 1 : vector<8x256xf32>, i32 -> vector<8x256xf32>
      %243 = vector.extract_strided_slice %0 {offsets = [0, 0], sizes = [1, 256], strides = [1, 1]} : vector<9x256xf32> to vector<1x256xf32>
      %244 = vector.broadcast %243 : vector<1x256xf32> to vector<8x256xf32>
      %245 = arith.mulf %242, %244 : vector<8x256xf32>
      %246 = arith.truncf %245 : vector<8x256xf32> to vector<8x256xbf16>
      %c16_i32_90 = arith.constant 16 : i32
      %247 = tpu.dynamic_rotate %241 by %c16_i32_90 dim 1 : vector<8x256xf32>, i32 -> vector<8x256xf32>
      %248 = vector.extract_strided_slice %0 {offsets = [1, 0], sizes = [1, 256], strides = [1, 1]} : vector<9x256xf32> to vector<1x256xf32>
      %249 = vector.broadcast %248 : vector<1x256xf32> to vector<8x256xf32>
      %250 = arith.mulf %247, %249 : vector<8x256xf32>
      %251 = arith.truncf %250 : vector<8x256xf32> to vector<8x256xbf16>
      %c15_i32_91 = arith.constant 15 : i32
      %252 = tpu.dynamic_rotate %241 by %c15_i32_91 dim 1 : vector<8x256xf32>, i32 -> vector<8x256xf32>
      %253 = vector.extract_strided_slice %0 {offsets = [2, 0], sizes = [1, 256], strides = [1, 1]} : vector<9x256xf32> to vector<1x256xf32>
      %254 = vector.broadcast %253 : vector<1x256xf32> to vector<8x256xf32>
      %255 = arith.mulf %252, %254 : vector<8x256xf32>
      %256 = arith.truncf %255 : vector<8x256xf32> to vector<8x256xbf16>
      %c1_i32_92 = arith.constant 1 : i32
      %257 = tpu.dynamic_rotate %241 by %c1_i32_92 dim 1 : vector<8x256xf32>, i32 -> vector<8x256xf32>
      %258 = vector.extract_strided_slice %0 {offsets = [3, 0], sizes = [1, 256], strides = [1, 1]} : vector<9x256xf32> to vector<1x256xf32>
      %259 = vector.broadcast %258 : vector<1x256xf32> to vector<8x256xf32>
      %260 = arith.mulf %257, %259 : vector<8x256xf32>
      %261 = arith.truncf %260 : vector<8x256xf32> to vector<8x256xbf16>
      %262 = arith.truncf %241 : vector<8x256xf32> to vector<8x256xbf16>
      %c255_i32_93 = arith.constant 255 : i32
      %263 = tpu.dynamic_rotate %241 by %c255_i32_93 dim 1 : vector<8x256xf32>, i32 -> vector<8x256xf32>
      %264 = vector.extract_strided_slice %0 {offsets = [5, 0], sizes = [1, 256], strides = [1, 1]} : vector<9x256xf32> to vector<1x256xf32>
      %265 = vector.broadcast %264 : vector<1x256xf32> to vector<8x256xf32>
      %266 = arith.mulf %263, %265 : vector<8x256xf32>
      %267 = arith.truncf %266 : vector<8x256xf32> to vector<8x256xbf16>
      %c241_i32_94 = arith.constant 241 : i32
      %268 = tpu.dynamic_rotate %241 by %c241_i32_94 dim 1 : vector<8x256xf32>, i32 -> vector<8x256xf32>
      %269 = vector.extract_strided_slice %0 {offsets = [6, 0], sizes = [1, 256], strides = [1, 1]} : vector<9x256xf32> to vector<1x256xf32>
      %270 = vector.broadcast %269 : vector<1x256xf32> to vector<8x256xf32>
      %271 = arith.mulf %268, %270 : vector<8x256xf32>
      %272 = arith.truncf %271 : vector<8x256xf32> to vector<8x256xbf16>
      %c240_i32_95 = arith.constant 240 : i32
      %273 = tpu.dynamic_rotate %241 by %c240_i32_95 dim 1 : vector<8x256xf32>, i32 -> vector<8x256xf32>
      %274 = vector.extract_strided_slice %0 {offsets = [7, 0], sizes = [1, 256], strides = [1, 1]} : vector<9x256xf32> to vector<1x256xf32>
      %275 = vector.broadcast %274 : vector<1x256xf32> to vector<8x256xf32>
      %276 = arith.mulf %273, %275 : vector<8x256xf32>
      %277 = arith.truncf %276 : vector<8x256xf32> to vector<8x256xbf16>
      %c239_i32_96 = arith.constant 239 : i32
      %278 = tpu.dynamic_rotate %241 by %c239_i32_96 dim 1 : vector<8x256xf32>, i32 -> vector<8x256xf32>
      %279 = vector.extract_strided_slice %0 {offsets = [8, 0], sizes = [1, 256], strides = [1, 1]} : vector<9x256xf32> to vector<1x256xf32>
      %280 = vector.broadcast %279 : vector<1x256xf32> to vector<8x256xf32>
      %281 = arith.mulf %278, %280 : vector<8x256xf32>
      %282 = arith.truncf %281 : vector<8x256xf32> to vector<8x256xbf16>
      %c144 = arith.constant 144 : index
      %c0_97 = arith.constant 0 : index
      %283 = vector.load %arg24[%c144, %c0_97] : memref<288x256xbf16, #tpu.memory_space<vmem>>, vector<8x256xbf16>
      tpu.vector_store %arg24[%c144, %c0_97], %246 {strides = array<i32>} : memref<288x256xbf16, #tpu.memory_space<vmem>>, vector<8x256xbf16>,
      %c152 = arith.constant 152 : index
      %c0_98 = arith.constant 0 : index
      %284 = vector.load %arg24[%c152, %c0_98] : memref<288x256xbf16, #tpu.memory_space<vmem>>, vector<8x256xbf16>
      tpu.vector_store %arg24[%c152, %c0_98], %251 {strides = array<i32>} : memref<288x256xbf16, #tpu.memory_space<vmem>>, vector<8x256xbf16>,
      %c160 = arith.constant 160 : index
      %c0_99 = arith.constant 0 : index
      %285 = vector.load %arg24[%c160, %c0_99] : memref<288x256xbf16, #tpu.memory_space<vmem>>, vector<8x256xbf16>
      tpu.vector_store %arg24[%c160, %c0_99], %256 {strides = array<i32>} : memref<288x256xbf16, #tpu.memory_space<vmem>>, vector<8x256xbf16>,
      %c168 = arith.constant 168 : index
      %c0_100 = arith.constant 0 : index
      %286 = vector.load %arg24[%c168, %c0_100] : memref<288x256xbf16, #tpu.memory_space<vmem>>, vector<8x256xbf16>
      tpu.vector_store %arg24[%c168, %c0_100], %261 {strides = array<i32>} : memref<288x256xbf16, #tpu.memory_space<vmem>>, vector<8x256xbf16>,
      %c176 = arith.constant 176 : index
      %c0_101 = arith.constant 0 : index
      %287 = vector.load %arg24[%c176, %c0_101] : memref<288x256xbf16, #tpu.memory_space<vmem>>, vector<8x256xbf16>
      tpu.vector_store %arg24[%c176, %c0_101], %262 {strides = array<i32>} : memref<288x256xbf16, #tpu.memory_space<vmem>>, vector<8x256xbf16>,
      %c184 = arith.constant 184 : index
      %c0_102 = arith.constant 0 : index
      %288 = vector.load %arg24[%c184, %c0_102] : memref<288x256xbf16, #tpu.memory_space<vmem>>, vector<8x256xbf16>
      tpu.vector_store %arg24[%c184, %c0_102], %267 {strides = array<i32>} : memref<288x256xbf16, #tpu.memory_space<vmem>>, vector<8x256xbf16>,
      %c192 = arith.constant 192 : index
      %c0_103 = arith.constant 0 : index
      %289 = vector.load %arg24[%c192, %c0_103] : memref<288x256xbf16, #tpu.memory_space<vmem>>, vector<8x256xbf16>
      tpu.vector_store %arg24[%c192, %c0_103], %272 {strides = array<i32>} : memref<288x256xbf16, #tpu.memory_space<vmem>>, vector<8x256xbf16>,
      %c200 = arith.constant 200 : index
      %c0_104 = arith.constant 0 : index
      %290 = vector.load %arg24[%c200, %c0_104] : memref<288x256xbf16, #tpu.memory_space<vmem>>, vector<8x256xbf16>
      tpu.vector_store %arg24[%c200, %c0_104], %277 {strides = array<i32>} : memref<288x256xbf16, #tpu.memory_space<vmem>>, vector<8x256xbf16>,
      %c208 = arith.constant 208 : index
      %c0_105 = arith.constant 0 : index
      %291 = vector.load %arg24[%c208, %c0_105] : memref<288x256xbf16, #tpu.memory_space<vmem>>, vector<8x256xbf16>
      tpu.vector_store %arg24[%c208, %c0_105], %282 {strides = array<i32>} : memref<288x256xbf16, #tpu.memory_space<vmem>>, vector<8x256xbf16>,
      %c0_106 = arith.constant 0 : index
      %c0_107 = arith.constant 0 : index
      %292 = vector.load %arg7[%c0_106, %c0_107] : memref<8x216xbf16, #tpu.memory_space<vmem>>, vector<8x216xbf16>
      %c0_108 = arith.constant 0 : index
      %c0_109 = arith.constant 0 : index
      %293 = vector.load %arg24[%c0_108, %c0_109] : memref<288x256xbf16, #tpu.memory_space<vmem>>, vector<216x256xbf16>
      %cst_110 = arith.constant dense<0.000000e+00> : vector<8x256xf32>
      %294 = tpu.matmul %292, %293, %cst_110 {dimension_numbers = #tpu.dot_dimension_numbers<[1], [0], [0], [1], [0, 0, 1, 1], [], []>} : vector<8x216xbf16>, vector<216x256xbf16>, vector<8x256xf32> -> vector<8x256xf32>
      %c0_111 = arith.constant 0 : index
      %c0_112 = arith.constant 0 : index
      %295 = vector.load %arg8[%c0_111, %c0_112] : memref<8x1xf32, #tpu.memory_space<vmem>>, vector<8x1xf32>
      %296 = vector.broadcast %295 : vector<8x1xf32> to vector<8x256xf32>
      %297 = arith.addf %294, %296 : vector<8x256xf32>
      %cst_113 = arith.constant 0.000000e+00 : f32
      %298 = vector.broadcast %cst_113 : f32 to vector<8x256xf32>
      %299 = arith.cmpf oge, %297, %298 : vector<8x256xf32>
      %cst_114 = arith.constant 2.000000e-01 : f32
      %300 = vector.broadcast %cst_114 : f32 to vector<8x256xf32>
      %301 = arith.mulf %300, %297 : vector<8x256xf32>
      %302 = arith.select %299, %297, %301 : vector<8x256xi1>, vector<8x256xf32>
      %c17_i32_115 = arith.constant 17 : i32
      %303 = tpu.dynamic_rotate %302 by %c17_i32_115 dim 1 : vector<8x256xf32>, i32 -> vector<8x256xf32>
      %304 = vector.extract_strided_slice %0 {offsets = [0, 0], sizes = [1, 256], strides = [1, 1]} : vector<9x256xf32> to vector<1x256xf32>
      %305 = vector.broadcast %304 : vector<1x256xf32> to vector<8x256xf32>
      %306 = arith.mulf %303, %305 : vector<8x256xf32>
      %307 = arith.truncf %306 : vector<8x256xf32> to vector<8x256xbf16>
      %c16_i32_116 = arith.constant 16 : i32
      %308 = tpu.dynamic_rotate %302 by %c16_i32_116 dim 1 : vector<8x256xf32>, i32 -> vector<8x256xf32>
      %309 = vector.extract_strided_slice %0 {offsets = [1, 0], sizes = [1, 256], strides = [1, 1]} : vector<9x256xf32> to vector<1x256xf32>
      %310 = vector.broadcast %309 : vector<1x256xf32> to vector<8x256xf32>
      %311 = arith.mulf %308, %310 : vector<8x256xf32>
      %312 = arith.truncf %311 : vector<8x256xf32> to vector<8x256xbf16>
      %c15_i32_117 = arith.constant 15 : i32
      %313 = tpu.dynamic_rotate %302 by %c15_i32_117 dim 1 : vector<8x256xf32>, i32 -> vector<8x256xf32>
      %314 = vector.extract_strided_slice %0 {offsets = [2, 0], sizes = [1, 256], strides = [1, 1]} : vector<9x256xf32> to vector<1x256xf32>
      %315 = vector.broadcast %314 : vector<1x256xf32> to vector<8x256xf32>
      %316 = arith.mulf %313, %315 : vector<8x256xf32>
      %317 = arith.truncf %316 : vector<8x256xf32> to vector<8x256xbf16>
      %c1_i32_118 = arith.constant 1 : i32
      %318 = tpu.dynamic_rotate %302 by %c1_i32_118 dim 1 : vector<8x256xf32>, i32 -> vector<8x256xf32>
      %319 = vector.extract_strided_slice %0 {offsets = [3, 0], sizes = [1, 256], strides = [1, 1]} : vector<9x256xf32> to vector<1x256xf32>
      %320 = vector.broadcast %319 : vector<1x256xf32> to vector<8x256xf32>
      %321 = arith.mulf %318, %320 : vector<8x256xf32>
      %322 = arith.truncf %321 : vector<8x256xf32> to vector<8x256xbf16>
      %323 = arith.truncf %302 : vector<8x256xf32> to vector<8x256xbf16>
      %c255_i32_119 = arith.constant 255 : i32
      %324 = tpu.dynamic_rotate %302 by %c255_i32_119 dim 1 : vector<8x256xf32>, i32 -> vector<8x256xf32>
      %325 = vector.extract_strided_slice %0 {offsets = [5, 0], sizes = [1, 256], strides = [1, 1]} : vector<9x256xf32> to vector<1x256xf32>
      %326 = vector.broadcast %325 : vector<1x256xf32> to vector<8x256xf32>
      %327 = arith.mulf %324, %326 : vector<8x256xf32>
      %328 = arith.truncf %327 : vector<8x256xf32> to vector<8x256xbf16>
      %c241_i32_120 = arith.constant 241 : i32
      %329 = tpu.dynamic_rotate %302 by %c241_i32_120 dim 1 : vector<8x256xf32>, i32 -> vector<8x256xf32>
      %330 = vector.extract_strided_slice %0 {offsets = [6, 0], sizes = [1, 256], strides = [1, 1]} : vector<9x256xf32> to vector<1x256xf32>
      %331 = vector.broadcast %330 : vector<1x256xf32> to vector<8x256xf32>
      %332 = arith.mulf %329, %331 : vector<8x256xf32>
      %333 = arith.truncf %332 : vector<8x256xf32> to vector<8x256xbf16>
      %c240_i32_121 = arith.constant 240 : i32
      %334 = tpu.dynamic_rotate %302 by %c240_i32_121 dim 1 : vector<8x256xf32>, i32 -> vector<8x256xf32>
      %335 = vector.extract_strided_slice %0 {offsets = [7, 0], sizes = [1, 256], strides = [1, 1]} : vector<9x256xf32> to vector<1x256xf32>
      %336 = vector.broadcast %335 : vector<1x256xf32> to vector<8x256xf32>
      %337 = arith.mulf %334, %336 : vector<8x256xf32>
      %338 = arith.truncf %337 : vector<8x256xf32> to vector<8x256xbf16>
      %c239_i32_122 = arith.constant 239 : i32
      %339 = tpu.dynamic_rotate %302 by %c239_i32_122 dim 1 : vector<8x256xf32>, i32 -> vector<8x256xf32>
      %340 = vector.extract_strided_slice %0 {offsets = [8, 0], sizes = [1, 256], strides = [1, 1]} : vector<9x256xf32> to vector<1x256xf32>
      %341 = vector.broadcast %340 : vector<1x256xf32> to vector<8x256xf32>
      %342 = arith.mulf %339, %341 : vector<8x256xf32>
      %343 = arith.truncf %342 : vector<8x256xf32> to vector<8x256xbf16>
      %c216 = arith.constant 216 : index
      %c0_123 = arith.constant 0 : index
      %344 = vector.load %arg24[%c216, %c0_123] : memref<288x256xbf16, #tpu.memory_space<vmem>>, vector<8x256xbf16>
      tpu.vector_store %arg24[%c216, %c0_123], %307 {strides = array<i32>} : memref<288x256xbf16, #tpu.memory_space<vmem>>, vector<8x256xbf16>,
      %c224 = arith.constant 224 : index
      %c0_124 = arith.constant 0 : index
      %345 = vector.load %arg24[%c224, %c0_124] : memref<288x256xbf16, #tpu.memory_space<vmem>>, vector<8x256xbf16>
      tpu.vector_store %arg24[%c224, %c0_124], %312 {strides = array<i32>} : memref<288x256xbf16, #tpu.memory_space<vmem>>, vector<8x256xbf16>,
      %c232 = arith.constant 232 : index
      %c0_125 = arith.constant 0 : index
      %346 = vector.load %arg24[%c232, %c0_125] : memref<288x256xbf16, #tpu.memory_space<vmem>>, vector<8x256xbf16>
      tpu.vector_store %arg24[%c232, %c0_125], %317 {strides = array<i32>} : memref<288x256xbf16, #tpu.memory_space<vmem>>, vector<8x256xbf16>,
      %c240 = arith.constant 240 : index
      %c0_126 = arith.constant 0 : index
      %347 = vector.load %arg24[%c240, %c0_126] : memref<288x256xbf16, #tpu.memory_space<vmem>>, vector<8x256xbf16>
      tpu.vector_store %arg24[%c240, %c0_126], %322 {strides = array<i32>} : memref<288x256xbf16, #tpu.memory_space<vmem>>, vector<8x256xbf16>,
      %c248 = arith.constant 248 : index
      %c0_127 = arith.constant 0 : index
      %348 = vector.load %arg24[%c248, %c0_127] : memref<288x256xbf16, #tpu.memory_space<vmem>>, vector<8x256xbf16>
      tpu.vector_store %arg24[%c248, %c0_127], %323 {strides = array<i32>} : memref<288x256xbf16, #tpu.memory_space<vmem>>, vector<8x256xbf16>,
      %c256 = arith.constant 256 : index
      %c0_128 = arith.constant 0 : index
      %349 = vector.load %arg24[%c256, %c0_128] : memref<288x256xbf16, #tpu.memory_space<vmem>>, vector<8x256xbf16>
      tpu.vector_store %arg24[%c256, %c0_128], %328 {strides = array<i32>} : memref<288x256xbf16, #tpu.memory_space<vmem>>, vector<8x256xbf16>,
      %c264 = arith.constant 264 : index
      %c0_129 = arith.constant 0 : index
      %350 = vector.load %arg24[%c264, %c0_129] : memref<288x256xbf16, #tpu.memory_space<vmem>>, vector<8x256xbf16>
      tpu.vector_store %arg24[%c264, %c0_129], %333 {strides = array<i32>} : memref<288x256xbf16, #tpu.memory_space<vmem>>, vector<8x256xbf16>,
      %c272 = arith.constant 272 : index
      %c0_130 = arith.constant 0 : index
      %351 = vector.load %arg24[%c272, %c0_130] : memref<288x256xbf16, #tpu.memory_space<vmem>>, vector<8x256xbf16>
      tpu.vector_store %arg24[%c272, %c0_130], %338 {strides = array<i32>} : memref<288x256xbf16, #tpu.memory_space<vmem>>, vector<8x256xbf16>,
      %c280 = arith.constant 280 : index
      %c0_131 = arith.constant 0 : index
      %352 = vector.load %arg24[%c280, %c0_131] : memref<288x256xbf16, #tpu.memory_space<vmem>>, vector<8x256xbf16>
      tpu.vector_store %arg24[%c280, %c0_131], %343 {strides = array<i32>} : memref<288x256xbf16, #tpu.memory_space<vmem>>, vector<8x256xbf16>,
      %c0_132 = arith.constant 0 : index
      %c0_133 = arith.constant 0 : index
      %353 = vector.load %arg9[%c0_132, %c0_133] : memref<16x288xbf16, #tpu.memory_space<vmem>>, vector<16x288xbf16>
      %c0_134 = arith.constant 0 : index
      %c0_135 = arith.constant 0 : index
      %354 = vector.load %arg24[%c0_134, %c0_135] : memref<288x256xbf16, #tpu.memory_space<vmem>>, vector<288x256xbf16>
      %cst_136 = arith.constant dense<0.000000e+00> : vector<16x256xf32>
      %355 = tpu.matmul %353, %354, %cst_136 {dimension_numbers = #tpu.dot_dimension_numbers<[1], [0], [0], [1], [0, 0, 1, 1], [], []>} : vector<16x288xbf16>, vector<288x256xbf16>, vector<16x256xf32> -> vector<16x256xf32>
      %c0_137 = arith.constant 0 : index
      %c0_138 = arith.constant 0 : index
      %356 = vector.load %arg10[%c0_137, %c0_138] : memref<16x1xf32, #tpu.memory_space<vmem>>, vector<16x1xf32>
      %357 = vector.broadcast %356 : vector<16x1xf32> to vector<16x256xf32>
      %358 = arith.addf %355, %357 : vector<16x256xf32>
      %cst_139 = arith.constant 0.000000e+00 : f32
      %359 = vector.broadcast %cst_139 : f32 to vector<16x256xf32>
      %360 = arith.cmpf oge, %358, %359 : vector<16x256xf32>
      %cst_140 = arith.constant 2.000000e-01 : f32
      %361 = vector.broadcast %cst_140 : f32 to vector<16x256xf32>
      %362 = arith.mulf %361, %358 : vector<16x256xf32>
      %363 = arith.select %360, %358, %362 : vector<16x256xi1>, vector<16x256xf32>
      %c0_141 = arith.constant 0 : index
      %c0_142 = arith.constant 0 : index
      %364 = vector.load %arg11[%c0_141, %c0_142] : memref<4x16xf32, #tpu.memory_space<vmem>>, vector<4x16xf32>
      %c0_143 = arith.constant 0 : index
      %c0_144 = arith.constant 0 : index
      %365 = vector.load %arg12[%c0_143, %c0_144] : memref<4x1xf32, #tpu.memory_space<vmem>>, vector<4x1xf32>
      %c0_145 = arith.constant 0 : index
      %c0_146 = arith.constant 0 : index
      %366 = vector.load %arg13[%c0_145, %c0_146] : memref<16x4xf32, #tpu.memory_space<vmem>>, vector<16x4xf32>
      %c0_147 = arith.constant 0 : index
      %c0_148 = arith.constant 0 : index
      %367 = vector.load %arg14[%c0_147, %c0_148] : memref<16x1xf32, #tpu.memory_space<vmem>>, vector<16x1xf32>
      %cst_149 = arith.constant dense<0.000000e+00> : vector<16xf32>
      %368 = vector.multi_reduction <add>, %363, %cst_149 [1] : vector<16x256xf32> to vector<16xf32>
      %369 = vector.shape_cast %368 : vector<16xf32> to vector<16x1xf32>
      %cst_150 = arith.constant 2.560000e+02 : f32
      %370 = vector.broadcast %cst_150 : f32 to vector<16x1xf32>
      %371 = arith.divf %369, %370 : vector<16x1xf32>
      %cst_151 = arith.constant dense<0.000000e+00> : vector<4x1xf32>
      %372 = tpu.matmul %364, %371, %cst_151 {dimension_numbers = #tpu.dot_dimension_numbers<[1], [0], [0], [1], [0, 0, 1, 1], [], []>} : vector<4x16xf32>, vector<16x1xf32>, vector<4x1xf32> -> vector<4x1xf32>
      %373 = arith.addf %372, %365 : vector<4x1xf32>
      %cst_152 = arith.constant 0.000000e+00 : f32
      %374 = vector.broadcast %cst_152 : f32 to vector<4x1xf32>
      %375 = arith.maximumf %373, %374 : vector<4x1xf32>
      %cst_153 = arith.constant dense<0.000000e+00> : vector<16x1xf32>
      %376 = tpu.matmul %366, %375, %cst_153 {dimension_numbers = #tpu.dot_dimension_numbers<[1], [0], [0], [1], [0, 0, 1, 1], [], []>} : vector<16x4xf32>, vector<4x1xf32>, vector<16x1xf32> -> vector<16x1xf32>
      %377 = arith.addf %376, %367 : vector<16x1xf32>
      %cst_154 = arith.constant 0.000000e+00 : f32
      %378 = vector.broadcast %cst_154 : f32 to vector<16x1xf32>
      %379 = arith.subf %378, %377 : vector<16x1xf32>
      %380 = math.exp %379 : vector<16x1xf32>
      %cst_155 = arith.constant 1.000000e+00 : f32
      %381 = vector.broadcast %cst_155 : f32 to vector<16x1xf32>
      %382 = arith.addf %381, %380 : vector<16x1xf32>
      %cst_156 = arith.constant 1.000000e+00 : f32
      %383 = vector.broadcast %cst_156 : f32 to vector<16x1xf32>
      %384 = arith.divf %383, %382 : vector<16x1xf32>
      %385 = vector.broadcast %384 : vector<16x1xf32> to vector<16x256xf32>
      %386 = arith.mulf %363, %385 : vector<16x256xf32>
      %387 = arith.addf %180, %386 : vector<16x256xf32>
      %c0_157 = arith.constant 0 : index
      %c0_158 = arith.constant 0 : index
      %388 = vector.load %arg25[%c0_157, %c0_158] : memref<16x256xf32, #tpu.memory_space<vmem>>, vector<16x256xf32>
      tpu.vector_store %arg25[%c0_157, %c0_158], %387 {strides = array<i32>} : memref<16x256xf32, #tpu.memory_space<vmem>>, vector<16x256xf32>,
    }
    %c0_11 = arith.constant 0 : index
    %c0_12 = arith.constant 0 : index
    %52 = vector.load %arg25[%c0_11, %c0_12] : memref<16x256xf32, #tpu.memory_space<vmem>>, vector<16x256xf32>
    %c0_13 = arith.constant 0 : index
    %c0_14 = arith.constant 0 : index
    %53 = vector.load %arg15[%c0_13, %c0_14] : memref<4x16xf32, #tpu.memory_space<vmem>>, vector<4x16xf32>
    %c0_15 = arith.constant 0 : index
    %c0_16 = arith.constant 0 : index
    %54 = vector.load %arg16[%c0_15, %c0_16] : memref<4x1xf32, #tpu.memory_space<vmem>>, vector<4x1xf32>
    %c0_17 = arith.constant 0 : index
    %c0_18 = arith.constant 0 : index
    %55 = vector.load %arg17[%c0_17, %c0_18] : memref<16x4xf32, #tpu.memory_space<vmem>>, vector<16x4xf32>
    %c0_19 = arith.constant 0 : index
    %c0_20 = arith.constant 0 : index
    %56 = vector.load %arg18[%c0_19, %c0_20] : memref<16x1xf32, #tpu.memory_space<vmem>>, vector<16x1xf32>
    %cst_21 = arith.constant dense<0.000000e+00> : vector<16xf32>
    %57 = vector.multi_reduction <add>, %52, %cst_21 [1] : vector<16x256xf32> to vector<16xf32>
    %58 = vector.shape_cast %57 : vector<16xf32> to vector<16x1xf32>
    %cst_22 = arith.constant 2.560000e+02 : f32
    %59 = vector.broadcast %cst_22 : f32 to vector<16x1xf32>
    %60 = arith.divf %58, %59 : vector<16x1xf32>
    %cst_23 = arith.constant dense<0.000000e+00> : vector<4x1xf32>
    %61 = tpu.matmul %53, %60, %cst_23 {dimension_numbers = #tpu.dot_dimension_numbers<[1], [0], [0], [1], [0, 0, 1, 1], [], []>} : vector<4x16xf32>, vector<16x1xf32>, vector<4x1xf32> -> vector<4x1xf32>
    %62 = arith.addf %61, %54 : vector<4x1xf32>
    %cst_24 = arith.constant 0.000000e+00 : f32
    %63 = vector.broadcast %cst_24 : f32 to vector<4x1xf32>
    %64 = arith.maximumf %62, %63 : vector<4x1xf32>
    %cst_25 = arith.constant dense<0.000000e+00> : vector<16x1xf32>
    %65 = tpu.matmul %55, %64, %cst_25 {dimension_numbers = #tpu.dot_dimension_numbers<[1], [0], [0], [1], [0, 0, 1, 1], [], []>} : vector<16x4xf32>, vector<4x1xf32>, vector<16x1xf32> -> vector<16x1xf32>
    %66 = arith.addf %65, %56 : vector<16x1xf32>
    %cst_26 = arith.constant 0.000000e+00 : f32
    %67 = vector.broadcast %cst_26 : f32 to vector<16x1xf32>
    %68 = arith.subf %67, %66 : vector<16x1xf32>
    %69 = math.exp %68 : vector<16x1xf32>
    %cst_27 = arith.constant 1.000000e+00 : f32
    %70 = vector.broadcast %cst_27 : f32 to vector<16x1xf32>
    %71 = arith.addf %70, %69 : vector<16x1xf32>
    %cst_28 = arith.constant 1.000000e+00 : f32
    %72 = vector.broadcast %cst_28 : f32 to vector<16x1xf32>
    %73 = arith.divf %72, %71 : vector<16x1xf32>
    %74 = vector.broadcast %73 : vector<16x1xf32> to vector<16x256xf32>
    %75 = arith.mulf %52, %74 : vector<16x256xf32>
    %76 = arith.addf %49, %75 : vector<16x256xf32>
    %c0_29 = arith.constant 0 : index
    %c0_30 = arith.constant 0 : index
    %77 = vector.load %arg19[%c0_29, %c0_30] : memref<16x144xbf16, #tpu.memory_space<vmem>>, vector<16x144xbf16>
    %c0_31 = arith.constant 0 : index
    %c0_32 = arith.constant 0 : index
    %78 = vector.load %arg20[%c0_31, %c0_32] : memref<16x1xf32, #tpu.memory_space<vmem>>, vector<16x1xf32>
    %c17_i32_33 = arith.constant 17 : i32
    %79 = tpu.dynamic_rotate %76 by %c17_i32_33 dim 1 : vector<16x256xf32>, i32 -> vector<16x256xf32>
    %80 = vector.extract_strided_slice %0 {offsets = [0, 0], sizes = [1, 256], strides = [1, 1]} : vector<9x256xf32> to vector<1x256xf32>
    %81 = vector.broadcast %80 : vector<1x256xf32> to vector<16x256xf32>
    %82 = arith.mulf %79, %81 : vector<16x256xf32>
    %83 = arith.truncf %82 : vector<16x256xf32> to vector<16x256xbf16>
    %c16_i32_34 = arith.constant 16 : i32
    %84 = tpu.dynamic_rotate %76 by %c16_i32_34 dim 1 : vector<16x256xf32>, i32 -> vector<16x256xf32>
    %85 = vector.extract_strided_slice %0 {offsets = [1, 0], sizes = [1, 256], strides = [1, 1]} : vector<9x256xf32> to vector<1x256xf32>
    %86 = vector.broadcast %85 : vector<1x256xf32> to vector<16x256xf32>
    %87 = arith.mulf %84, %86 : vector<16x256xf32>
    %88 = arith.truncf %87 : vector<16x256xf32> to vector<16x256xbf16>
    %c15_i32_35 = arith.constant 15 : i32
    %89 = tpu.dynamic_rotate %76 by %c15_i32_35 dim 1 : vector<16x256xf32>, i32 -> vector<16x256xf32>
    %90 = vector.extract_strided_slice %0 {offsets = [2, 0], sizes = [1, 256], strides = [1, 1]} : vector<9x256xf32> to vector<1x256xf32>
    %91 = vector.broadcast %90 : vector<1x256xf32> to vector<16x256xf32>
    %92 = arith.mulf %89, %91 : vector<16x256xf32>
    %93 = arith.truncf %92 : vector<16x256xf32> to vector<16x256xbf16>
    %c1_i32_36 = arith.constant 1 : i32
    %94 = tpu.dynamic_rotate %76 by %c1_i32_36 dim 1 : vector<16x256xf32>, i32 -> vector<16x256xf32>
    %95 = vector.extract_strided_slice %0 {offsets = [3, 0], sizes = [1, 256], strides = [1, 1]} : vector<9x256xf32> to vector<1x256xf32>
    %96 = vector.broadcast %95 : vector<1x256xf32> to vector<16x256xf32>
    %97 = arith.mulf %94, %96 : vector<16x256xf32>
    %98 = arith.truncf %97 : vector<16x256xf32> to vector<16x256xbf16>
    %99 = arith.truncf %76 : vector<16x256xf32> to vector<16x256xbf16>
    %c255_i32_37 = arith.constant 255 : i32
    %100 = tpu.dynamic_rotate %76 by %c255_i32_37 dim 1 : vector<16x256xf32>, i32 -> vector<16x256xf32>
    %101 = vector.extract_strided_slice %0 {offsets = [5, 0], sizes = [1, 256], strides = [1, 1]} : vector<9x256xf32> to vector<1x256xf32>
    %102 = vector.broadcast %101 : vector<1x256xf32> to vector<16x256xf32>
    %103 = arith.mulf %100, %102 : vector<16x256xf32>
    %104 = arith.truncf %103 : vector<16x256xf32> to vector<16x256xbf16>
    %c241_i32_38 = arith.constant 241 : i32
    %105 = tpu.dynamic_rotate %76 by %c241_i32_38 dim 1 : vector<16x256xf32>, i32 -> vector<16x256xf32>
    %106 = vector.extract_strided_slice %0 {offsets = [6, 0], sizes = [1, 256], strides = [1, 1]} : vector<9x256xf32> to vector<1x256xf32>
    %107 = vector.broadcast %106 : vector<1x256xf32> to vector<16x256xf32>
    %108 = arith.mulf %105, %107 : vector<16x256xf32>
    %109 = arith.truncf %108 : vector<16x256xf32> to vector<16x256xbf16>
    %c240_i32_39 = arith.constant 240 : i32
    %110 = tpu.dynamic_rotate %76 by %c240_i32_39 dim 1 : vector<16x256xf32>, i32 -> vector<16x256xf32>
    %111 = vector.extract_strided_slice %0 {offsets = [7, 0], sizes = [1, 256], strides = [1, 1]} : vector<9x256xf32> to vector<1x256xf32>
    %112 = vector.broadcast %111 : vector<1x256xf32> to vector<16x256xf32>
    %113 = arith.mulf %110, %112 : vector<16x256xf32>
    %114 = arith.truncf %113 : vector<16x256xf32> to vector<16x256xbf16>
    %c239_i32_40 = arith.constant 239 : i32
    %115 = tpu.dynamic_rotate %76 by %c239_i32_40 dim 1 : vector<16x256xf32>, i32 -> vector<16x256xf32>
    %116 = vector.extract_strided_slice %0 {offsets = [8, 0], sizes = [1, 256], strides = [1, 1]} : vector<9x256xf32> to vector<1x256xf32>
    %117 = vector.broadcast %116 : vector<1x256xf32> to vector<16x256xf32>
    %118 = arith.mulf %115, %117 : vector<16x256xf32>
    %119 = arith.truncf %118 : vector<16x256xf32> to vector<16x256xbf16>
    %120 = tpu.concatenate %83, %88, %93, %98, %99, %104, %109, %114, %119 in 0 : vector<16x256xbf16>, vector<16x256xbf16>, vector<16x256xbf16>, vector<16x256xbf16>, vector<16x256xbf16>, vector<16x256xbf16>, vector<16x256xbf16>, vector<16x256xbf16>, vector<16x256xbf16> -> vector<144x256xbf16>
    %cst_41 = arith.constant dense<0.000000e+00> : vector<16x256xf32>
    %121 = tpu.matmul %77, %120, %cst_41 {dimension_numbers = #tpu.dot_dimension_numbers<[1], [0], [0], [1], [0, 0, 1, 1], [], []>} : vector<16x144xbf16>, vector<144x256xbf16>, vector<16x256xf32> -> vector<16x256xf32>
    %122 = vector.broadcast %78 : vector<16x1xf32> to vector<16x256xf32>
    %123 = arith.addf %121, %122 : vector<16x256xf32>
    %124 = arith.addf %49, %123 : vector<16x256xf32>
    %cst_42 = arith.constant 0.000000e+00 : f32
    %125 = vector.broadcast %cst_42 : f32 to vector<16x256xf32>
    %126 = arith.cmpf oge, %124, %125 : vector<16x256xf32>
    %cst_43 = arith.constant 2.000000e-01 : f32
    %127 = vector.broadcast %cst_43 : f32 to vector<16x256xf32>
    %128 = arith.mulf %127, %124 : vector<16x256xf32>
    %129 = arith.select %126, %124, %128 : vector<16x256xi1>, vector<16x256xf32>
    %c0_44 = arith.constant 0 : index
    %c0_45 = arith.constant 0 : index
    %130 = vector.load %arg21[%c0_44, %c0_45] : memref<4x144xbf16, #tpu.memory_space<vmem>>, vector<4x144xbf16>
    %c0_46 = arith.constant 0 : index
    %c0_47 = arith.constant 0 : index
    %131 = vector.load %arg22[%c0_46, %c0_47] : memref<4x1xf32, #tpu.memory_space<vmem>>, vector<4x1xf32>
    %c17_i32_48 = arith.constant 17 : i32
    %132 = tpu.dynamic_rotate %129 by %c17_i32_48 dim 1 : vector<16x256xf32>, i32 -> vector<16x256xf32>
    %133 = vector.extract_strided_slice %0 {offsets = [0, 0], sizes = [1, 256], strides = [1, 1]} : vector<9x256xf32> to vector<1x256xf32>
    %134 = vector.broadcast %133 : vector<1x256xf32> to vector<16x256xf32>
    %135 = arith.mulf %132, %134 : vector<16x256xf32>
    %136 = arith.truncf %135 : vector<16x256xf32> to vector<16x256xbf16>
    %c16_i32_49 = arith.constant 16 : i32
    %137 = tpu.dynamic_rotate %129 by %c16_i32_49 dim 1 : vector<16x256xf32>, i32 -> vector<16x256xf32>
    %138 = vector.extract_strided_slice %0 {offsets = [1, 0], sizes = [1, 256], strides = [1, 1]} : vector<9x256xf32> to vector<1x256xf32>
    %139 = vector.broadcast %138 : vector<1x256xf32> to vector<16x256xf32>
    %140 = arith.mulf %137, %139 : vector<16x256xf32>
    %141 = arith.truncf %140 : vector<16x256xf32> to vector<16x256xbf16>
    %c15_i32_50 = arith.constant 15 : i32
    %142 = tpu.dynamic_rotate %129 by %c15_i32_50 dim 1 : vector<16x256xf32>, i32 -> vector<16x256xf32>
    %143 = vector.extract_strided_slice %0 {offsets = [2, 0], sizes = [1, 256], strides = [1, 1]} : vector<9x256xf32> to vector<1x256xf32>
    %144 = vector.broadcast %143 : vector<1x256xf32> to vector<16x256xf32>
    %145 = arith.mulf %142, %144 : vector<16x256xf32>
    %146 = arith.truncf %145 : vector<16x256xf32> to vector<16x256xbf16>
    %c1_i32_51 = arith.constant 1 : i32
    %147 = tpu.dynamic_rotate %129 by %c1_i32_51 dim 1 : vector<16x256xf32>, i32 -> vector<16x256xf32>
    %148 = vector.extract_strided_slice %0 {offsets = [3, 0], sizes = [1, 256], strides = [1, 1]} : vector<9x256xf32> to vector<1x256xf32>
    %149 = vector.broadcast %148 : vector<1x256xf32> to vector<16x256xf32>
    %150 = arith.mulf %147, %149 : vector<16x256xf32>
    %151 = arith.truncf %150 : vector<16x256xf32> to vector<16x256xbf16>
    %152 = arith.truncf %129 : vector<16x256xf32> to vector<16x256xbf16>
    %c255_i32_52 = arith.constant 255 : i32
    %153 = tpu.dynamic_rotate %129 by %c255_i32_52 dim 1 : vector<16x256xf32>, i32 -> vector<16x256xf32>
    %154 = vector.extract_strided_slice %0 {offsets = [5, 0], sizes = [1, 256], strides = [1, 1]} : vector<9x256xf32> to vector<1x256xf32>
    %155 = vector.broadcast %154 : vector<1x256xf32> to vector<16x256xf32>
    %156 = arith.mulf %153, %155 : vector<16x256xf32>
    %157 = arith.truncf %156 : vector<16x256xf32> to vector<16x256xbf16>
    %c241_i32_53 = arith.constant 241 : i32
    %158 = tpu.dynamic_rotate %129 by %c241_i32_53 dim 1 : vector<16x256xf32>, i32 -> vector<16x256xf32>
    %159 = vector.extract_strided_slice %0 {offsets = [6, 0], sizes = [1, 256], strides = [1, 1]} : vector<9x256xf32> to vector<1x256xf32>
    %160 = vector.broadcast %159 : vector<1x256xf32> to vector<16x256xf32>
    %161 = arith.mulf %158, %160 : vector<16x256xf32>
    %162 = arith.truncf %161 : vector<16x256xf32> to vector<16x256xbf16>
    %c240_i32_54 = arith.constant 240 : i32
    %163 = tpu.dynamic_rotate %129 by %c240_i32_54 dim 1 : vector<16x256xf32>, i32 -> vector<16x256xf32>
    %164 = vector.extract_strided_slice %0 {offsets = [7, 0], sizes = [1, 256], strides = [1, 1]} : vector<9x256xf32> to vector<1x256xf32>
    %165 = vector.broadcast %164 : vector<1x256xf32> to vector<16x256xf32>
    %166 = arith.mulf %163, %165 : vector<16x256xf32>
    %167 = arith.truncf %166 : vector<16x256xf32> to vector<16x256xbf16>
    %c239_i32_55 = arith.constant 239 : i32
    %168 = tpu.dynamic_rotate %129 by %c239_i32_55 dim 1 : vector<16x256xf32>, i32 -> vector<16x256xf32>
    %169 = vector.extract_strided_slice %0 {offsets = [8, 0], sizes = [1, 256], strides = [1, 1]} : vector<9x256xf32> to vector<1x256xf32>
    %170 = vector.broadcast %169 : vector<1x256xf32> to vector<16x256xf32>
    %171 = arith.mulf %168, %170 : vector<16x256xf32>
    %172 = arith.truncf %171 : vector<16x256xf32> to vector<16x256xbf16>
    %173 = tpu.concatenate %136, %141, %146, %151, %152, %157, %162, %167, %172 in 0 : vector<16x256xbf16>, vector<16x256xbf16>, vector<16x256xbf16>, vector<16x256xbf16>, vector<16x256xbf16>, vector<16x256xbf16>, vector<16x256xbf16>, vector<16x256xbf16>, vector<16x256xbf16> -> vector<144x256xbf16>
    %cst_56 = arith.constant dense<0.000000e+00> : vector<4x256xf32>
    %174 = tpu.matmul %130, %173, %cst_56 {dimension_numbers = #tpu.dot_dimension_numbers<[1], [0], [0], [1], [0, 0, 1, 1], [], []>} : vector<4x144xbf16>, vector<144x256xbf16>, vector<4x256xf32> -> vector<4x256xf32>
    %175 = vector.broadcast %131 : vector<4x1xf32> to vector<4x256xf32>
    %176 = arith.addf %174, %175 : vector<4x256xf32>
    %c0_57 = arith.constant 0 : index
    %c0_58 = arith.constant 0 : index
    %c0_59 = arith.constant 0 : index
    %177 = vector.load %arg23[%c0_57, %c0_58, %c0_59] : memref<1x4x256xf32, #tpu.memory_space<vmem>>, vector<1x4x256xf32>
    %178 = vector.shape_cast %177 : vector<1x4x256xf32> to vector<4x256xf32>
    %179 = vector.shape_cast %176 : vector<4x256xf32> to vector<1x4x256xf32>
    tpu.vector_store %arg23[%c0_57, %c0_58, %c0_59], %179 {strides = array<i32>} : memref<1x4x256xf32, #tpu.memory_space<vmem>>, vector<1x4x256xf32>,
    return
  }
  func.func @transform_0(%arg0: i32) -> (i32, i32, i32) {
    %c0_i32 = arith.constant 0 : i32
    %c0_i32_0 = arith.constant 0 : i32
    %c0_i32_1 = arith.constant 0 : i32
    return %arg0, %c0_i32, %c0_i32_0 : i32, i32, i32
  }
  func.func @transform_1(%arg0: i32) -> (i32, i32) {
    %c0_i32 = arith.constant 0 : i32
    %c0_i32_0 = arith.constant 0 : i32
    %c0_i32_1 = arith.constant 0 : i32
    return %c0_i32, %c0_i32_0 : i32, i32
  }
  func.func @transform_2(%arg0: i32) -> (i32, i32) {
    %c0_i32 = arith.constant 0 : i32
    %c0_i32_0 = arith.constant 0 : i32
    %c0_i32_1 = arith.constant 0 : i32
    return %c0_i32, %c0_i32_0 : i32, i32
  }
  func.func @transform_3(%arg0: i32) -> (i32, i32) {
    %c0_i32 = arith.constant 0 : i32
    %c0_i32_0 = arith.constant 0 : i32
    %c0_i32_1 = arith.constant 0 : i32
    return %c0_i32, %c0_i32_0 : i32, i32
  }
  func.func @transform_4(%arg0: i32) -> (i32, i32) {
    %c0_i32 = arith.constant 0 : i32
    %c0_i32_0 = arith.constant 0 : i32
    %c0_i32_1 = arith.constant 0 : i32
    return %c0_i32, %c0_i32_0 : i32, i32
  }
  func.func @transform_5(%arg0: i32) -> (i32, i32) {
    %c0_i32 = arith.constant 0 : i32
    %c0_i32_0 = arith.constant 0 : i32
    %c0_i32_1 = arith.constant 0 : i32
    return %c0_i32, %c0_i32_0 : i32, i32
  }
  func.func @transform_6(%arg0: i32) -> (i32, i32) {
    %c0_i32 = arith.constant 0 : i32
    %c0_i32_0 = arith.constant 0 : i32
    %c0_i32_1 = arith.constant 0 : i32
    return %c0_i32, %c0_i32_0 : i32, i32
  }
  func.func @transform_7(%arg0: i32) -> (i32, i32) {
    %c0_i32 = arith.constant 0 : i32
    %c0_i32_0 = arith.constant 0 : i32
    %c0_i32_1 = arith.constant 0 : i32
    return %c0_i32, %c0_i32_0 : i32, i32
  }
  func.func @transform_8(%arg0: i32) -> (i32, i32) {
    %c0_i32 = arith.constant 0 : i32
    %c0_i32_0 = arith.constant 0 : i32
    %c0_i32_1 = arith.constant 0 : i32
    return %c0_i32, %c0_i32_0 : i32, i32
  }
  func.func @transform_9(%arg0: i32) -> (i32, i32) {
    %c0_i32 = arith.constant 0 : i32
    %c0_i32_0 = arith.constant 0 : i32
    %c0_i32_1 = arith.constant 0 : i32
    return %c0_i32, %c0_i32_0 : i32, i32
  }
  func.func @transform_10(%arg0: i32) -> (i32, i32) {
    %c0_i32 = arith.constant 0 : i32
    %c0_i32_0 = arith.constant 0 : i32
    %c0_i32_1 = arith.constant 0 : i32
    return %c0_i32, %c0_i32_0 : i32, i32
  }
  func.func @transform_11(%arg0: i32) -> (i32, i32) {
    %c0_i32 = arith.constant 0 : i32
    %c0_i32_0 = arith.constant 0 : i32
    %c0_i32_1 = arith.constant 0 : i32
    return %c0_i32, %c0_i32_0 : i32, i32
  }
  func.func @transform_12(%arg0: i32) -> (i32, i32) {
    %c0_i32 = arith.constant 0 : i32
    %c0_i32_0 = arith.constant 0 : i32
    %c0_i32_1 = arith.constant 0 : i32
    return %c0_i32, %c0_i32_0 : i32, i32
  }
  func.func @transform_13(%arg0: i32) -> (i32, i32) {
    %c0_i32 = arith.constant 0 : i32
    %c0_i32_0 = arith.constant 0 : i32
    %c0_i32_1 = arith.constant 0 : i32
    return %c0_i32, %c0_i32_0 : i32, i32
  }
  func.func @transform_14(%arg0: i32) -> (i32, i32) {
    %c0_i32 = arith.constant 0 : i32
    %c0_i32_0 = arith.constant 0 : i32
    %c0_i32_1 = arith.constant 0 : i32
    return %c0_i32, %c0_i32_0 : i32, i32
  }
  func.func @transform_15(%arg0: i32) -> (i32, i32) {
    %c0_i32 = arith.constant 0 : i32
    %c0_i32_0 = arith.constant 0 : i32
    %c0_i32_1 = arith.constant 0 : i32
    return %c0_i32, %c0_i32_0 : i32, i32
  }
  func.func @transform_16(%arg0: i32) -> (i32, i32) {
    %c0_i32 = arith.constant 0 : i32
    %c0_i32_0 = arith.constant 0 : i32
    %c0_i32_1 = arith.constant 0 : i32
    return %c0_i32, %c0_i32_0 : i32, i32
  }
  func.func @transform_17(%arg0: i32) -> (i32, i32) {
    %c0_i32 = arith.constant 0 : i32
    %c0_i32_0 = arith.constant 0 : i32
    %c0_i32_1 = arith.constant 0 : i32
    return %c0_i32, %c0_i32_0 : i32, i32
  }
  func.func @transform_18(%arg0: i32) -> (i32, i32) {
    %c0_i32 = arith.constant 0 : i32
    %c0_i32_0 = arith.constant 0 : i32
    %c0_i32_1 = arith.constant 0 : i32
    return %c0_i32, %c0_i32_0 : i32, i32
  }
  func.func @transform_19(%arg0: i32) -> (i32, i32) {
    %c0_i32 = arith.constant 0 : i32
    %c0_i32_0 = arith.constant 0 : i32
    %c0_i32_1 = arith.constant 0 : i32
    return %c0_i32, %c0_i32_0 : i32, i32
  }
  func.func @transform_20(%arg0: i32) -> (i32, i32) {
    %c0_i32 = arith.constant 0 : i32
    %c0_i32_0 = arith.constant 0 : i32
    %c0_i32_1 = arith.constant 0 : i32
    return %c0_i32, %c0_i32_0 : i32, i32
  }
  func.func @transform_21(%arg0: i32) -> (i32, i32) {
    %c0_i32 = arith.constant 0 : i32
    %c0_i32_0 = arith.constant 0 : i32
    %c0_i32_1 = arith.constant 0 : i32
    return %c0_i32, %c0_i32_0 : i32, i32
  }
  func.func @transform_22(%arg0: i32) -> (i32, i32, i32) {
    %c0_i32 = arith.constant 0 : i32
    %c0_i32_0 = arith.constant 0 : i32
    %c0_i32_1 = arith.constant 0 : i32
    return %arg0, %c0_i32, %c0_i32_0 : i32, i32, i32
  }
}

</mosaic_0001>

<llo_original>
// kernel: rrdbnet_ca_forward.1
$region0: #{rrdbnet_ca_forward.1}
  #allocation0 [shape = 'u32[]', space=smem, size = 0x4, offset = 0x4, fixed_abs, tag = 'smem constant byte address 0x4 - core index']
  #allocation1 [shape = 'u32[72,128]{1,0:T(1,128)}', space=vmem, size = 0x9000, scoped, tag = 'internal scratch']
  #allocation2 [shape = 'bf16[288,256]{1,0:T(8,128)(2,1)}', space=vmem, size = 0x24000, scoped, tag = 'scratch operand']
  #allocation3 [shape = 'f32[16,256]{1,0:T(8,128)}', space=vmem, size = 0x4000, scoped, tag = 'scratch operand']
  %s0 = inlined_call_operand.vmem [shape: f32[2,4,256], index: 0, kind: input, shape index: {}]
  %s1 = inlined_call_operand.vmem [shape: f32[9,256], index: 1, kind: input, shape index: {}]
  %s2 = inlined_call_operand.vmem [shape: bf16[16,36], index: 2, kind: input, shape index: {}]
  %s3 = inlined_call_operand.vmem [shape: f32[16,1], index: 3, kind: input, shape index: {}]
  %s4 = inlined_call_operand.vmem [shape: bf16[8,144], index: 4, kind: input, shape index: {}]
  %s5 = inlined_call_operand.vmem [shape: f32[8,1], index: 5, kind: input, shape index: {}]
  %s6 = inlined_call_operand.vmem [shape: bf16[8,216], index: 6, kind: input, shape index: {}]
  %s7 = inlined_call_operand.vmem [shape: f32[8,1], index: 7, kind: input, shape index: {}]
  %s8 = inlined_call_operand.vmem [shape: bf16[16,288], index: 8, kind: input, shape index: {}]
  %s9 = inlined_call_operand.vmem [shape: f32[16,1], index: 9, kind: input, shape index: {}]
  %s10 = inlined_call_operand.vmem [shape: f32[4,16], index: 10, kind: input, shape index: {}]
  %s11 = inlined_call_operand.vmem [shape: f32[4,1], index: 11, kind: input, shape index: {}]
  %s12 = inlined_call_operand.vmem [shape: f32[16,4], index: 12, kind: input, shape index: {}]
  %s13 = inlined_call_operand.vmem [shape: f32[16,1], index: 13, kind: input, shape index: {}]
  %s14 = inlined_call_operand.vmem [shape: f32[4,16], index: 14, kind: input, shape index: {}]
  %s15 = inlined_call_operand.vmem [shape: f32[4,1], index: 15, kind: input, shape index: {}]
  %s16 = inlined_call_operand.vmem [shape: f32[16,4], index: 16, kind: input, shape index: {}]
  %s17 = inlined_call_operand.vmem [shape: f32[16,1], index: 17, kind: input, shape index: {}]
  %s18 = inlined_call_operand.vmem [shape: bf16[16,144], index: 18, kind: input, shape index: {}]
  %s19 = inlined_call_operand.vmem [shape: f32[16,1], index: 19, kind: input, shape index: {}]
  %s20 = inlined_call_operand.vmem [shape: bf16[4,144], index: 20, kind: input, shape index: {}]
  %s21 = inlined_call_operand.vmem [shape: f32[4,1], index: 21, kind: input, shape index: {}]
  %s22 = inlined_call_operand.vmem [shape: f32[2,4,256], index: 22, kind: output, shape index: {}]
  %s23 = sld [smem:[#allocation0]]
  $region128: #{rrdbnet_ca_forward.1} parent=0
    _
  %s25 = ssub.s32 1, %s23
  %s26 = scalar_select 0, %s25, %s23
  loop: start=0, step=1, limit=4
  $region2: #{rrdbnet_ca_forward.1} parent=0 // loop_pre_header
    _
  $region3: #{rrdbnet_ca_forward.1} parent=0 // loop_header
    %s28 = sphi 0, %s32
    %p29 = scmp.ge.s32.totalorder %s28, 4
    %s38 = sphi 0, %s40
    %s41 = sphi 0, %s38
    %s42 = sphi 0, %s41
    %s58 = sphi 0, %s42
    %s62 = sphi 0, %s62
    %s64 = sphi 0, %s62
    %s65 = sphi 0, %s64
    %s79 = sphi 0, %s65
    %s83 = sphi 0, %s83
    %s85 = sphi 0, %s83
    %s86 = sphi 0, %s85
    %s100 = sphi 0, %s86
    %s104 = sphi 0, %s104
    %s106 = sphi 0, %s104
    %s107 = sphi 0, %s106
    %s121 = sphi 0, %s107
    %s125 = sphi 0, %s125
    %s127 = sphi 0, %s125
    %s128 = sphi 0, %s127
    %s142 = sphi 0, %s128
    %s146 = sphi 0, %s146
    %s148 = sphi 0, %s146
    %s149 = sphi 0, %s148
    %s163 = sphi 0, %s149
    %s167 = sphi 0, %s167
    %s169 = sphi 0, %s167
    %s170 = sphi 0, %s169
    %s184 = sphi 0, %s170
    %s188 = sphi 0, %s188
    %s190 = sphi 0, %s188
    %s191 = sphi 0, %s190
    %s205 = sphi 0, %s191
    %s209 = sphi 0, %s209
    %s211 = sphi 0, %s209
    %s212 = sphi 0, %s211
    %s226 = sphi 0, %s212
    %s230 = sphi 0, %s230
    %s232 = sphi 0, %s230
    %s233 = sphi 0, %s232
    %s247 = sphi 0, %s233
    %s251 = sphi 0, %s251
    %s253 = sphi 0, %s251
    %s254 = sphi 0, %s253
    %s268 = sphi 0, %s254
    %s272 = sphi 0, %s272
    %s274 = sphi 0, %s272
    %s275 = sphi 0, %s274
    %s289 = sphi 0, %s275
    %s293 = sphi 0, %s293
    %s295 = sphi 0, %s293
    %s296 = sphi 0, %s295
    %s310 = sphi 0, %s296
    %s314 = sphi 0, %s314
    %s316 = sphi 0, %s314
    %s317 = sphi 0, %s316
    %s331 = sphi 0, %s317
    %s335 = sphi 0, %s335
    %s337 = sphi 0, %s335
    %s338 = sphi 0, %s337
    %s352 = sphi 0, %s338
    %s356 = sphi 0, %s356
    %s358 = sphi 0, %s356
    %s359 = sphi 0, %s358
    %s373 = sphi 0, %s359
    %s377 = sphi 0, %s377
    %s379 = sphi 0, %s377
    %s380 = sphi 0, %s379
    %s394 = sphi 0, %s380
    %s398 = sphi 0, %s398
    %s400 = sphi 0, %s398
    %s401 = sphi 0, %s400
    %s415 = sphi 0, %s401
    %s419 = sphi 0, %s419
    %s421 = sphi 0, %s419
    %s422 = sphi 0, %s421
    %s436 = sphi 0, %s422
    %s440 = sphi 0, %s440
    %s442 = sphi 0, %s440
    %s443 = sphi 0, %s442
    %s457 = sphi 0, %s443
    %s461 = sphi 0, %s461
    %s463 = sphi 0, %s461
    %s464 = sphi 0, %s463
    %s478 = sphi 0, %s464
    %s482 = sphi 0, %s482
    %s484 = sphi 0, %s482
    %s485 = sphi 0, %s484
    %s499 = sphi 0, %s485
    %s505 = sphi 0, %s507
    %s508 = sphi 0, %s505
    %s509 = sphi 0, %s508
    %s525 = sphi 0, %s509
  $region4: #{rrdbnet_ca_forward.1} parent=0 // loop_header_branch
    %31 = sbr.rel (%p29) target = $region8
  $region5: #{rrdbnet_ca_forward.1} parent=0 // loop_body
    %s33 = ssub.s32 %s28, 1
    %s34 = ssub.s32 %s28, 2
    %s35 = sadd.s32 %s28, 1
    %s36 = ssub.s32 %s28, %s35
    %p37 = scmp.eq.s32.totalorder %s36, 0
    %s39 = sadd.s32 %s38, 1
    %s40 = scalar_select %p37, %s38, %s39
    %p43 = pneg %p37
    %p44 = scmp.eq.s32.totalorder %s28, 1
    %p45 = por %p43, %p44
    %p46 = scmp.ne.s32.totalorder %s38, %s41
    %p47 = scmp.eq.s32.totalorder %s28, 0
    %p48 = por %p46, %p47
    %p49 = scmp.ne.s32.totalorder %s38, %s41
    %p50 = scmp.eq.s32.totalorder %s33, 1
    %p51 = por %p49, %p50
    %p52 = scmp.ne.s32.totalorder %s41, %s42
    %p53 = scmp.eq.s32.totalorder %s33, 0
    %p54 = por %p52, %p53
    %p55 = scmp.ne.s32.totalorder %s41, %s42
    %p56 = scmp.eq.s32.totalorder %s34, 1
    %p57 = por %p55, %p56
    %p59 = scmp.ne.s32.totalorder %s42, %s58
    %p60 = scmp.eq.s32.totalorder %s34, 0
    %p61 = por %p59, %p60
    %s63 = sadd.s32 %s62, 1
    %p66 = scmp.eq.s32.totalorder %s28, 1
    %p67 = scmp.ne.s32.totalorder %s62, %s64
    %p68 = scmp.eq.s32.totalorder %s28, 0
    %p69 = por %p67, %p68
    %p70 = scmp.ne.s32.totalorder %s62, %s64
    %p71 = scmp.eq.s32.totalorder %s33, 1
    %p72 = por %p70, %p71
    %p73 = scmp.ne.s32.totalorder %s64, %s65
    %p74 = scmp.eq.s32.totalorder %s33, 0
    %p75 = por %p73, %p74
    %p76 = scmp.ne.s32.totalorder %s64, %s65
    %p77 = scmp.eq.s32.totalorder %s34, 1
    %p78 = por %p76, %p77
    %p80 = scmp.ne.s32.totalorder %s65, %s79
    %p81 = scmp.eq.s32.totalorder %s34, 0
    %p82 = por %p80, %p81
    %s84 = sadd.s32 %s83, 1
    %p87 = scmp.eq.s32.totalorder %s28, 1
    %p88 = scmp.ne.s32.totalorder %s83, %s85
    %p89 = scmp.eq.s32.totalorder %s28, 0
    %p90 = por %p88, %p89
    %p91 = scmp.ne.s32.totalorder %s83, %s85
    %p92 = scmp.eq.s32.totalorder %s33, 1
    %p93 = por %p91, %p92
    %p94 = scmp.ne.s32.totalorder %s85, %s86
    %p95 = scmp.eq.s32.totalorder %s33, 0
    %p96 = por %p94, %p95
    %p97 = scmp.ne.s32.totalorder %s85, %s86
    %p98 = scmp.eq.s32.totalorder %s34, 1
    %p99 = por %p97, %p98
    %p101 = scmp.ne.s32.totalorder %s86, %s100
    %p102 = scmp.eq.s32.totalorder %s34, 0
    %p103 = por %p101, %p102
    %s105 = sadd.s32 %s104, 1
    %p108 = scmp.eq.s32.totalorder %s28, 1
    %p109 = scmp.ne.s32.totalorder %s104, %s106
    %p110 = scmp.eq.s32.totalorder %s28, 0
    %p111 = por %p109, %p110
    %p112 = scmp.ne.s32.totalorder %s104, %s106
    %p113 = scmp.eq.s32.totalorder %s33, 1
    %p114 = por %p112, %p113
    %p115 = scmp.ne.s32.totalorder %s106, %s107
    %p116 = scmp.eq.s32.totalorder %s33, 0
    %p117 = por %p115, %p116
    %p118 = scmp.ne.s32.totalorder %s106, %s107
    %p119 = scmp.eq.s32.totalorder %s34, 1
    %p120 = por %p118, %p119
    %p122 = scmp.ne.s32.totalorder %s107, %s121
    %p123 = scmp.eq.s32.totalorder %s34, 0
    %p124 = por %p122, %p123
    %s126 = sadd.s32 %s125, 1
    %p129 = scmp.eq.s32.totalorder %s28, 1
    %p130 = scmp.ne.s32.totalorder %s125, %s127
    %p131 = scmp.eq.s32.totalorder %s28, 0
    %p132 = por %p130, %p131
    %p133 = scmp.ne.s32.totalorder %s125, %s127
    %p134 = scmp.eq.s32.totalorder %s33, 1
    %p135 = por %p133, %p134
    %p136 = scmp.ne.s32.totalorder %s127, %s128
    %p137 = scmp.eq.s32.totalorder %s33, 0
    %p138 = por %p136, %p137
    %p139 = scmp.ne.s32.totalorder %s127, %s128
    %p140 = scmp.eq.s32.totalorder %s34, 1
    %p141 = por %p139, %p140
    %p143 = scmp.ne.s32.totalorder %s128, %s142
    %p144 = scmp.eq.s32.totalorder %s34, 0
    %p145 = por %p143, %p144
    %s147 = sadd.s32 %s146, 1
    %p150 = scmp.eq.s32.totalorder %s28, 1
    %p151 = scmp.ne.s32.totalorder %s146, %s148
    %p152 = scmp.eq.s32.totalorder %s28, 0
    %p153 = por %p151, %p152
    %p154 = scmp.ne.s32.totalorder %s146, %s148
    %p155 = scmp.eq.s32.totalorder %s33, 1
    %p156 = por %p154, %p155
    %p157 = scmp.ne.s32.totalorder %s148, %s149
    %p158 = scmp.eq.s32.totalorder %s33, 0
    %p159 = por %p157, %p158
    %p160 = scmp.ne.s32.totalorder %s148, %s149
    %p161 = scmp.eq.s32.totalorder %s34, 1
    %p162 = por %p160, %p161
    %p164 = scmp.ne.s32.totalorder %s149, %s163
    %p165 = scmp.eq.s32.totalorder %s34, 0
    %p166 = por %p164, %p165
    %s168 = sadd.s32 %s167, 1
    %p171 = scmp.eq.s32.totalorder %s28, 1
    %p172 = scmp.ne.s32.totalorder %s167, %s169
    %p173 = scmp.eq.s32.totalorder %s28, 0
    %p174 = por %p172, %p173
    %p175 = scmp.ne.s32.totalorder %s167, %s169
    %p176 = scmp.eq.s32.totalorder %s33, 1
    %p177 = por %p175, %p176
    %p178 = scmp.ne.s32.totalorder %s169, %s170
    %p179 = scmp.eq.s32.totalorder %s33, 0
    %p180 = por %p178, %p179
    %p181 = scmp.ne.s32.totalorder %s169, %s170
    %p182 = scmp.eq.s32.totalorder %s34, 1
    %p183 = por %p181, %p182
    %p185 = scmp.ne.s32.totalorder %s170, %s184
    %p186 = scmp.eq.s32.totalorder %s34, 0
    %p187 = por %p185, %p186
    %s189 = sadd.s32 %s188, 1
    %p192 = scmp.eq.s32.totalorder %s28, 1
    %p193 = scmp.ne.s32.totalorder %s188, %s190
    %p194 = scmp.eq.s32.totalorder %s28, 0
    %p195 = por %p193, %p194
    %p196 = scmp.ne.s32.totalorder %s188, %s190
    %p197 = scmp.eq.s32.totalorder %s33, 1
    %p198 = por %p196, %p197
    %p199 = scmp.ne.s32.totalorder %s190, %s191
    %p200 = scmp.eq.s32.totalorder %s33, 0
    %p201 = por %p199, %p200
    %p202 = scmp.ne.s32.totalorder %s190, %s191
    %p203 = scmp.eq.s32.totalorder %s34, 1
    %p204 = por %p202, %p203
    %p206 = scmp.ne.s32.totalorder %s191, %s205
    %p207 = scmp.eq.s32.totalorder %s34, 0
    %p208 = por %p206, %p207
    %s210 = sadd.s32 %s209, 1
    %p213 = scmp.eq.s32.totalorder %s28, 1
    %p214 = scmp.ne.s32.totalorder %s209, %s211
    %p215 = scmp.eq.s32.totalorder %s28, 0
    %p216 = por %p214, %p215
    %p217 = scmp.ne.s32.totalorder %s209, %s211
    %p218 = scmp.eq.s32.totalorder %s33, 1
    %p219 = por %p217, %p218
    %p220 = scmp.ne.s32.totalorder %s211, %s212
    %p221 = scmp.eq.s32.totalorder %s33, 0
    %p222 = por %p220, %p221
    %p223 = scmp.ne.s32.totalorder %s211, %s212
    %p224 = scmp.eq.s32.totalorder %s34, 1
    %p225 = por %p223, %p224
    %p227 = scmp.ne.s32.totalorder %s212, %s226
    %p228 = scmp.eq.s32.totalorder %s34, 0
    %p229 = por %p227, %p228
    %s231 = sadd.s32 %s230, 1
    %p234 = scmp.eq.s32.totalorder %s28, 1
    %p235 = scmp.ne.s32.totalorder %s230, %s232
    %p236 = scmp.eq.s32.totalorder %s28, 0
    %p237 = por %p235, %p236
    %p238 = scmp.ne.s32.totalorder %s230, %s232
    %p239 = scmp.eq.s32.totalorder %s33, 1
    %p240 = por %p238, %p239
    %p241 = scmp.ne.s32.totalorder %s232, %s233
    %p242 = scmp.eq.s32.totalorder %s33, 0
    %p243 = por %p241, %p242
    %p244 = scmp.ne.s32.totalorder %s232, %s233
    %p245 = scmp.eq.s32.totalorder %s34, 1
    %p246 = por %p244, %p245
    %p248 = scmp.ne.s32.totalorder %s233, %s247
    %p249 = scmp.eq.s32.totalorder %s34, 0
    %p250 = por %p248, %p249
    %s252 = sadd.s32 %s251, 1
    %p255 = scmp.eq.s32.totalorder %s28, 1
    %p256 = scmp.ne.s32.totalorder %s251, %s253
    %p257 = scmp.eq.s32.totalorder %s28, 0
    %p258 = por %p256, %p257
    %p259 = scmp.ne.s32.totalorder %s251, %s253
    %p260 = scmp.eq.s32.totalorder %s33, 1
    %p261 = por %p259, %p260
    %p262 = scmp.ne.s32.totalorder %s253, %s254
    %p263 = scmp.eq.s32.totalorder %s33, 0
    %p264 = por %p262, %p263
    %p265 = scmp.ne.s32.totalorder %s253, %s254
    %p266 = scmp.eq.s32.totalorder %s34, 1
    %p267 = por %p265, %p266
    %p269 = scmp.ne.s32.totalorder %s254, %s268
    %p270 = scmp.eq.s32.totalorder %s34, 0
    %p271 = por %p269, %p270
    %s273 = sadd.s32 %s272, 1
    %p276 = scmp.eq.s32.totalorder %s28, 1
    %p277 = scmp.ne.s32.totalorder %s272, %s274
    %p278 = scmp.eq.s32.totalorder %s28, 0
    %p279 = por %p277, %p278
    %p280 = scmp.ne.s32.totalorder %s272, %s274
    %p281 = scmp.eq.s32.totalorder %s33, 1
    %p282 = por %p280, %p281
    %p283 = scmp.ne.s32.totalorder %s274, %s275
    %p284 = scmp.eq.s32.totalorder %s33, 0
    %p285 = por %p283, %p284
    %p286 = scmp.ne.s32.totalorder %s274, %s275
    %p287 = scmp.eq.s32.totalorder %s34, 1
    %p288 = por %p286, %p287
    %p290 = scmp.ne.s32.totalorder %s275, %s289
    %p291 = scmp.eq.s32.totalorder %s34, 0
    %p292 = por %p290, %p291
    %s294 = sadd.s32 %s293, 1
    %p297 = scmp.eq.s32.totalorder %s28, 1
    %p298 = scmp.ne.s32.totalorder %s293, %s295
    %p299 = scmp.eq.s32.totalorder %s28, 0
    %p300 = por %p298, %p299
    %p301 = scmp.ne.s32.totalorder %s293, %s295
    %p302 = scmp.eq.s32.totalorder %s33, 1
    %p303 = por %p301, %p302
    %p304 = scmp.ne.s32.totalorder %s295, %s296
    %p305 = scmp.eq.s32.totalorder %s33, 0
    %p306 = por %p304, %p305
    %p307 = scmp.ne.s32.totalorder %s295, %s296
    %p308 = scmp.eq.s32.totalorder %s34, 1
    %p309 = por %p307, %p308
    %p311 = scmp.ne.s32.totalorder %s296, %s310
    %p312 = scmp.eq.s32.totalorder %s34, 0
    %p313 = por %p311, %p312
    %s315 = sadd.s32 %s314, 1
    %p318 = scmp.eq.s32.totalorder %s28, 1
    %p319 = scmp.ne.s32.totalorder %s314, %s316
    %p320 = scmp.eq.s32.totalorder %s28, 0
    %p321 = por %p319, %p320
    %p322 = scmp.ne.s32.totalorder %s314, %s316
    %p323 = scmp.eq.s32.totalorder %s33, 1
    %p324 = por %p322, %p323
    %p325 = scmp.ne.s32.totalorder %s316, %s317
    %p326 = scmp.eq.s32.totalorder %s33, 0
    %p327 = por %p325, %p326
    %p328 = scmp.ne.s32.totalorder %s316, %s317
    %p329 = scmp.eq.s32.totalorder %s34, 1
    %p330 = por %p328, %p329
    %p332 = scmp.ne.s32.totalorder %s317, %s331
    %p333 = scmp.eq.s32.totalorder %s34, 0
    %p334 = por %p332, %p333
    %s336 = sadd.s32 %s335, 1
    %p339 = scmp.eq.s32.totalorder %s28, 1
    %p340 = scmp.ne.s32.totalorder %s335, %s337
    %p341 = scmp.eq.s32.totalorder %s28, 0
    %p342 = por %p340, %p341
    %p343 = scmp.ne.s32.totalorder %s335, %s337
    %p344 = scmp.eq.s32.totalorder %s33, 1
    %p345 = por %p343, %p344
    %p346 = scmp.ne.s32.totalorder %s337, %s338
    %p347 = scmp.eq.s32.totalorder %s33, 0
    %p348 = por %p346, %p347
    %p349 = scmp.ne.s32.totalorder %s337, %s338
    %p350 = scmp.eq.s32.totalorder %s34, 1
    %p351 = por %p349, %p350
    %p353 = scmp.ne.s32.totalorder %s338, %s352
    %p354 = scmp.eq.s32.totalorder %s34, 0
    %p355 = por %p353, %p354
    %s357 = sadd.s32 %s356, 1
    %p360 = scmp.eq.s32.totalorder %s28, 1
    %p361 = scmp.ne.s32.totalorder %s356, %s358
    %p362 = scmp.eq.s32.totalorder %s28, 0
    %p363 = por %p361, %p362
    %p364 = scmp.ne.s32.totalorder %s356, %s358
    %p365 = scmp.eq.s32.totalorder %s33, 1
    %p366 = por %p364, %p365
    %p367 = scmp.ne.s32.totalorder %s358, %s359
    %p368 = scmp.eq.s32.totalorder %s33, 0
    %p369 = por %p367, %p368
    %p370 = scmp.ne.s32.totalorder %s358, %s359
    %p371 = scmp.eq.s32.totalorder %s34, 1
    %p372 = por %p370, %p371
    %p374 = scmp.ne.s32.totalorder %s359, %s373
    %p375 = scmp.eq.s32.totalorder %s34, 0
    %p376 = por %p374, %p375
    %s378 = sadd.s32 %s377, 1
    %p381 = scmp.eq.s32.totalorder %s28, 1
    %p382 = scmp.ne.s32.totalorder %s377, %s379
    %p383 = scmp.eq.s32.totalorder %s28, 0
    %p384 = por %p382, %p383
    %p385 = scmp.ne.s32.totalorder %s377, %s379
    %p386 = scmp.eq.s32.totalorder %s33, 1
    %p387 = por %p385, %p386
    %p388 = scmp.ne.s32.totalorder %s379, %s380
    %p389 = scmp.eq.s32.totalorder %s33, 0
    %p390 = por %p388, %p389
    %p391 = scmp.ne.s32.totalorder %s379, %s380
    %p392 = scmp.eq.s32.totalorder %s34, 1
    %p393 = por %p391, %p392
    %p395 = scmp.ne.s32.totalorder %s380, %s394
    %p396 = scmp.eq.s32.totalorder %s34, 0
    %p397 = por %p395, %p396
    %s399 = sadd.s32 %s398, 1
    %p402 = scmp.eq.s32.totalorder %s28, 1
    %p403 = scmp.ne.s32.totalorder %s398, %s400
    %p404 = scmp.eq.s32.totalorder %s28, 0
    %p405 = por %p403, %p404
    %p406 = scmp.ne.s32.totalorder %s398, %s400
    %p407 = scmp.eq.s32.totalorder %s33, 1
    %p408 = por %p406, %p407
    %p409 = scmp.ne.s32.totalorder %s400, %s401
    %p410 = scmp.eq.s32.totalorder %s33, 0
    %p411 = por %p409, %p410
    %p412 = scmp.ne.s32.totalorder %s400, %s401
    %p413 = scmp.eq.s32.totalorder %s34, 1
    %p414 = por %p412, %p413
    %p416 = scmp.ne.s32.totalorder %s401, %s415
    %p417 = scmp.eq.s32.totalorder %s34, 0
    %p418 = por %p416, %p417
    %s420 = sadd.s32 %s419, 1
    %p423 = scmp.eq.s32.totalorder %s28, 1
    %p424 = scmp.ne.s32.totalorder %s419, %s421
    %p425 = scmp.eq.s32.totalorder %s28, 0
    %p426 = por %p424, %p425
    %p427 = scmp.ne.s32.totalorder %s419, %s421
    %p428 = scmp.eq.s32.totalorder %s33, 1
    %p429 = por %p427, %p428
    %p430 = scmp.ne.s32.totalorder %s421, %s422
    %p431 = scmp.eq.s32.totalorder %s33, 0
    %p432 = por %p430, %p431
    %p433 = scmp.ne.s32.totalorder %s421, %s422
    %p434 = scmp.eq.s32.totalorder %s34, 1
    %p435 = por %p433, %p434
    %p437 = scmp.ne.s32.totalorder %s422, %s436
    %p438 = scmp.eq.s32.totalorder %s34, 0
    %p439 = por %p437, %p438
    %s441 = sadd.s32 %s440, 1
    %p444 = scmp.eq.s32.totalorder %s28, 1
    %p445 = scmp.ne.s32.totalorder %s440, %s442
    %p446 = scmp.eq.s32.totalorder %s28, 0
    %p447 = por %p445, %p446
    %p448 = scmp.ne.s32.totalorder %s440, %s442
    %p449 = scmp.eq.s32.totalorder %s33, 1
    %p450 = por %p448, %p449
    %p451 = scmp.ne.s32.totalorder %s442, %s443
    %p452 = scmp.eq.s32.totalorder %s33, 0
    %p453 = por %p451, %p452
    %p454 = scmp.ne.s32.totalorder %s442, %s443
    %p455 = scmp.eq.s32.totalorder %s34, 1
    %p456 = por %p454, %p455
    %p458 = scmp.ne.s32.totalorder %s443, %s457
    %p459 = scmp.eq.s32.totalorder %s34, 0
    %p460 = por %p458, %p459
    %s462 = sadd.s32 %s461, 1
    %p465 = scmp.eq.s32.totalorder %s28, 1
    %p466 = scmp.ne.s32.totalorder %s461, %s463
    %p467 = scmp.eq.s32.totalorder %s28, 0
    %p468 = por %p466, %p467
    %p469 = scmp.ne.s32.totalorder %s461, %s463
    %p470 = scmp.eq.s32.totalorder %s33, 1
    %p471 = por %p469, %p470
    %p472 = scmp.ne.s32.totalorder %s463, %s464
    %p473 = scmp.eq.s32.totalorder %s33, 0
    %p474 = por %p472, %p473
    %p475 = scmp.ne.s32.totalorder %s463, %s464
    %p476 = scmp.eq.s32.totalorder %s34, 1
    %p477 = por %p475, %p476
    %p479 = scmp.ne.s32.totalorder %s464, %s478
    %p480 = scmp.eq.s32.totalorder %s34, 0
    %p481 = por %p479, %p480
    %s483 = sadd.s32 %s482, 1
    %p486 = scmp.eq.s32.totalorder %s28, 1
    %p487 = scmp.ne.s32.totalorder %s482, %s484
    %p488 = scmp.eq.s32.totalorder %s28, 0
    %p489 = por %p487, %p488
    %p490 = scmp.ne.s32.totalorder %s482, %s484
    %p491 = scmp.eq.s32.totalorder %s33, 1
    %p492 = por %p490, %p491
    %p493 = scmp.ne.s32.totalorder %s484, %s485
    %p494 = scmp.eq.s32.totalorder %s33, 0
    %p495 = por %p493, %p494
    %p496 = scmp.ne.s32.totalorder %s484, %s485
    %p497 = scmp.eq.s32.totalorder %s34, 1
    %p498 = por %p496, %p497
    %p500 = scmp.ne.s32.totalorder %s485, %s499
    %p501 = scmp.eq.s32.totalorder %s34, 0
    %p502 = por %p500, %p501
    %s503 = ssub.s32 %s28, %s35
    %p504 = scmp.eq.s32.totalorder %s503, 0
    %s506 = sadd.s32 %s505, 1
    %s507 = scalar_select %p504, %s505, %s506
    %p510 = pneg %p504
    %p511 = scmp.eq.s32.totalorder %s28, 1
    %p512 = por %p510, %p511
    %p513 = scmp.ne.s32.totalorder %s505, %s508
    %p514 = scmp.eq.s32.totalorder %s28, 0
    %p515 = por %p513, %p514
    %p516 = scmp.ne.s32.totalorder %s505, %s508
    %p517 = scmp.eq.s32.totalorder %s33, 1
    %p518 = por %p516, %p517
    %p519 = scmp.ne.s32.totalorder %s508, %s509
    %p520 = scmp.eq.s32.totalorder %s33, 0
    %p521 = por %p519, %p520
    %p522 = scmp.ne.s32.totalorder %s508, %s509
    %p523 = scmp.eq.s32.totalorder %s34, 1
    %p524 = por %p522, %p523
    %p526 = scmp.ne.s32.totalorder %s509, %s525
    %p527 = scmp.eq.s32.totalorder %s34, 0
    %p528 = por %p526, %p527
    %p529 = scmp.le.s32.totalorder 1, %s28
    %p530 = scmp.lt.s32.totalorder %s28, 3
    %p531 = pnand %p529, %p530
    %p532 = pneg %p531
    // Predicated region
    $region9: #{rrdbnet_ca_forward.1} parent=5 // pred_check
      _
    $region10: #{rrdbnet_ca_forward.1} parent=5 // pred_check_branch
      %534 = sbr.rel (%p531) target = $region12
    $region11: #{rrdbnet_ca_forward.1} parent=5 // pred_region
      %s535 = ssub.s32 %s28, 1
      // Predicated region
      $region13: #{rrdbnet_ca_forward.1} parent=11 // pred_check
        %p536 = pneg %p75
      $region14: #{rrdbnet_ca_forward.1} parent=11 // pred_check_branch
        %538 = sbr.rel (%p536) target = $region16
      $region15: #{rrdbnet_ca_forward.1} parent=11 // pred_region
        _
      $region16: #{rrdbnet_ca_forward.1} parent=11 // pred_fallthru
        _
      // Predicated region
      $region17: #{rrdbnet_ca_forward.1} parent=11 // pred_check
        %p539 = pneg %p96
      $region18: #{rrdbnet_ca_forward.1} parent=11 // pred_check_branch
        %541 = sbr.rel (%p539) target = $region20
      $region19: #{rrdbnet_ca_forward.1} parent=11 // pred_region
        _
      $region20: #{rrdbnet_ca_forward.1} parent=11 // pred_fallthru
        _
      // Predicated region
      $region21: #{rrdbnet_ca_forward.1} parent=11 // pred_check
        %p542 = pneg %p117
      $region22: #{rrdbnet_ca_forward.1} parent=11 // pred_check_branch
        %544 = sbr.rel (%p542) target = $region24
      $region23: #{rrdbnet_ca_forward.1} parent=11 // pred_region
        _
      $region24: #{rrdbnet_ca_forward.1} parent=11 // pred_fallthru
        _
      // Predicated region
      $region25: #{rrdbnet_ca_forward.1} parent=11 // pred_check
        %p545 = pneg %p138
      $region26: #{rrdbnet_ca_forward.1} parent=11 // pred_check_branch
        %547 = sbr.rel (%p545) target = $region28
      $region27: #{rrdbnet_ca_forward.1} parent=11 // pred_region
        _
      $region28: #{rrdbnet_ca_forward.1} parent=11 // pred_fallthru
        _
      // Predicated region
      $region29: #{rrdbnet_ca_forward.1} parent=11 // pred_check
        %p548 = pneg %p159
      $region30: #{rrdbnet_ca_forward.1} parent=11 // pred_check_branch
        %550 = sbr.rel (%p548) target = $region32
      $region31: #{rrdbnet_ca_forward.1} parent=11 // pred_region
        _
      $region32: #{rrdbnet_ca_forward.1} parent=11 // pred_fallthru
        _
      // Predicated region
      $region33: #{rrdbnet_ca_forward.1} parent=11 // pred_check
        %p551 = pneg %p180
      $region34: #{rrdbnet_ca_forward.1} parent=11 // pred_check_branch
        %553 = sbr.rel (%p551) target = $region36
      $region35: #{rrdbnet_ca_forward.1} parent=11 // pred_region
        _
      $region36: #{rrdbnet_ca_forward.1} parent=11 // pred_fallthru
        _
      // Predicated region
      $region37: #{rrdbnet_ca_forward.1} parent=11 // pred_check
        %p554 = pneg %p201
      $region38: #{rrdbnet_ca_forward.1} parent=11 // pred_check_branch
        %556 = sbr.rel (%p554) target = $region40
      $region39: #{rrdbnet_ca_forward.1} parent=11 // pred_region
        _
      $region40: #{rrdbnet_ca_forward.1} parent=11 // pred_fallthru
        _
      // Predicated region
      $region41: #{rrdbnet_ca_forward.1} parent=11 // pred_check
        %p557 = pneg %p222
      $region42: #{rrdbnet_ca_forward.1} parent=11 // pred_check_branch
        %559 = sbr.rel (%p557) target = $region44
      $region43: #{rrdbnet_ca_forward.1} parent=11 // pred_region
        _
      $region44: #{rrdbnet_ca_forward.1} parent=11 // pred_fallthru
        _
      // Predicated region
      $region45: #{rrdbnet_ca_forward.1} parent=11 // pred_check
        %p560 = pneg %p243
      $region46: #{rrdbnet_ca_forward.1} parent=11 // pred_check_branch
        %562 = sbr.rel (%p560) target = $region48
      $region47: #{rrdbnet_ca_forward.1} parent=11 // pred_region
        _
      $region48: #{rrdbnet_ca_forward.1} parent=11 // pred_fallthru
        _
      // Predicated region
      $region49: #{rrdbnet_ca_forward.1} parent=11 // pred_check
        %p563 = pneg %p264
      $region50: #{rrdbnet_ca_forward.1} parent=11 // pred_check_branch
        %565 = sbr.rel (%p563) target = $region52
      $region51: #{rrdbnet_ca_forward.1} parent=11 // pred_region
        _
      $region52: #{rrdbnet_ca_forward.1} parent=11 // pred_fallthru
        _
      // Predicated region
      $region53: #{rrdbnet_ca_forward.1} parent=11 // pred_check
        %p566 = pneg %p285
      $region54: #{rrdbnet_ca_forward.1} parent=11 // pred_check_branch
        %568 = sbr.rel (%p566) target = $region56
      $region55: #{rrdbnet_ca_forward.1} parent=11 // pred_region
        _
      $region56: #{rrdbnet_ca_forward.1} parent=11 // pred_fallthru
        _
      // Predicated region
      $region57: #{rrdbnet_ca_forward.1} parent=11 // pred_check
        %p569 = pneg %p306
      $region58: #{rrdbnet_ca_forward.1} parent=11 // pred_check_branch
        %571 = sbr.rel (%p569) target = $region60
      $region59: #{rrdbnet_ca_forward.1} parent=11 // pred_region
        _
      $region60: #{rrdbnet_ca_forward.1} parent=11 // pred_fallthru
        _
      // Predicated region
      $region61: #{rrdbnet_ca_forward.1} parent=11 // pred_check
        %p572 = pneg %p327
      $region62: #{rrdbnet_ca_forward.1} parent=11 // pred_check_branch
        %574 = sbr.rel (%p572) target = $region64
      $region63: #{rrdbnet_ca_forward.1} parent=11 // pred_region
        _
      $region64: #{rrdbnet_ca_forward.1} parent=11 // pred_fallthru
        _
      // Predicated region
      $region65: #{rrdbnet_ca_forward.1} parent=11 // pred_check
        %p575 = pneg %p348
      $region66: #{rrdbnet_ca_forward.1} parent=11 // pred_check_branch
        %577 = sbr.rel (%p575) target = $region68
      $region67: #{rrdbnet_ca_forward.1} parent=11 // pred_region
        _
      $region68: #{rrdbnet_ca_forward.1} parent=11 // pred_fallthru
        _
      // Predicated region
      $region69: #{rrdbnet_ca_forward.1} parent=11 // pred_check
        %p578 = pneg %p369
      $region70: #{rrdbnet_ca_forward.1} parent=11 // pred_check_branch
        %580 = sbr.rel (%p578) target = $region72
      $region71: #{rrdbnet_ca_forward.1} parent=11 // pred_region
        _
      $region72: #{rrdbnet_ca_forward.1} parent=11 // pred_fallthru
        _
      // Predicated region
      $region73: #{rrdbnet_ca_forward.1} parent=11 // pred_check
        %p581 = pneg %p390
      $region74: #{rrdbnet_ca_forward.1} parent=11 // pred_check_branch
        %583 = sbr.rel (%p581) target = $region76
      $region75: #{rrdbnet_ca_forward.1} parent=11 // pred_region
        _
      $region76: #{rrdbnet_ca_forward.1} parent=11 // pred_fallthru
        _
      // Predicated region
      $region77: #{rrdbnet_ca_forward.1} parent=11 // pred_check
        %p584 = pneg %p411
      $region78: #{rrdbnet_ca_forward.1} parent=11 // pred_check_branch
        %586 = sbr.rel (%p584) target = $region80
      $region79: #{rrdbnet_ca_forward.1} parent=11 // pred_region
        _
      $region80: #{rrdbnet_ca_forward.1} parent=11 // pred_fallthru
        _
      // Predicated region
      $region81: #{rrdbnet_ca_forward.1} parent=11 // pred_check
        %p587 = pneg %p432
      $region82: #{rrdbnet_ca_forward.1} parent=11 // pred_check_branch
        %589 = sbr.rel (%p587) target = $region84
      $region83: #{rrdbnet_ca_forward.1} parent=11 // pred_region
        _
      $region84: #{rrdbnet_ca_forward.1} parent=11 // pred_fallthru
        _
      // Predicated region
      $region85: #{rrdbnet_ca_forward.1} parent=11 // pred_check
        %p590 = pneg %p453
      $region86: #{rrdbnet_ca_forward.1} parent=11 // pred_check_branch
        %592 = sbr.rel (%p590) target = $region88
      $region87: #{rrdbnet_ca_forward.1} parent=11 // pred_region
        _
      $region88: #{rrdbnet_ca_forward.1} parent=11 // pred_fallthru
        _
      // Predicated region
      $region89: #{rrdbnet_ca_forward.1} parent=11 // pred_check
        %p593 = pneg %p474
      $region90: #{rrdbnet_ca_forward.1} parent=11 // pred_check_branch
        %595 = sbr.rel (%p593) target = $region92
      $region91: #{rrdbnet_ca_forward.1} parent=11 // pred_region
        _
      $region92: #{rrdbnet_ca_forward.1} parent=11 // pred_fallthru
        _
      // Predicated region
      $region93: #{rrdbnet_ca_forward.1} parent=11 // pred_check
        %p596 = pneg %p495
      $region94: #{rrdbnet_ca_forward.1} parent=11 // pred_check_branch
        %598 = sbr.rel (%p596) target = $region96
      $region95: #{rrdbnet_ca_forward.1} parent=11 // pred_region
        _
      $region96: #{rrdbnet_ca_forward.1} parent=11 // pred_fallthru
        _
    $region12: #{rrdbnet_ca_forward.1} parent=5 // pred_fallthru
      _
    %p599 = scmp.lt.s32.totalorder %s28, 2
    // Predicated region
    $region97: #{rrdbnet_ca_forward.1} parent=5 // pred_check
      %p600 = pneg %p599
    $region98: #{rrdbnet_ca_forward.1} parent=5 // pred_check_branch
      %602 = sbr.rel (%p600) target = $region100
    $region99: #{rrdbnet_ca_forward.1} parent=5 // pred_region
      // Predicated region
      $region101: #{rrdbnet_ca_forward.1} parent=99 // pred_check
        %p603 = pneg %p48
      $region102: #{rrdbnet_ca_forward.1} parent=99 // pred_check_branch
        %605 = sbr.rel (%p603) target = $region104
      $region103: #{rrdbnet_ca_forward.1} parent=99 // pred_region
        %p606 = scmp.lt.s32.totalorder %s28, 1
        %s607 = scalar_select %p606, %s28, 1
        %s608 = smul.addr %s607, 2
        %s609 = smul.addr %s608, 4
        %s610 = scalar_lea.vmem %s0, %s609
      $region104: #{rrdbnet_ca_forward.1} parent=99 // pred_fallthru
        _
    $region100: #{rrdbnet_ca_forward.1} parent=5 // pred_fallthru
      _
    %p611 = scmp.le.s32.totalorder 1, %s28
    %p612 = scmp.lt.s32.totalorder %s28, 3
    %p613 = pnand %p611, %p612
    %p614 = pneg %p613
    // Predicated region
    $region105: #{rrdbnet_ca_forward.1} parent=5 // pred_check
      _
    $region106: #{rrdbnet_ca_forward.1} parent=5 // pred_check_branch
      %616 = sbr.rel (%p613) target = $region108
    $region107: #{rrdbnet_ca_forward.1} parent=5 // pred_region
      %s617 = ssub.s32 %s28, 1
      %p618 = scmp.lt.s32.totalorder %s33, 1
      %s619 = scalar_select %p618, %s33, 1
      %s620 = smul.addr %s619, 2
      %s621 = smul.addr %s620, 4
      %s622 = scalar_lea.vmem %s0, %s621
      %p623 = pneg %p54
      %p624 = pneg %p51
      %p625 = pneg %p75
      %p626 = pneg %p72
      %p627 = pneg %p96
      %p628 = pneg %p93
      %p629 = pneg %p117
      %p630 = pneg %p114
      %p631 = pneg %p138
      %p632 = pneg %p135
      %p633 = pneg %p159
      %p634 = pneg %p156
      %p635 = pneg %p180
      %p636 = pneg %p177
      %p637 = pneg %p201
      %p638 = pneg %p198
      %p639 = pneg %p222
      %p640 = pneg %p219
      %p641 = pneg %p243
      %p642 = pneg %p240
      %p643 = pneg %p264
      %p644 = pneg %p261
      %p645 = pneg %p285
      %p646 = pneg %p282
      %p647 = pneg %p306
      %p648 = pneg %p303
      %p649 = pneg %p327
      %p650 = pneg %p324
      %p651 = pneg %p348
      %p652 = pneg %p345
      %p653 = pneg %p369
      %p654 = pneg %p366
      %p655 = pneg %p390
      %p656 = pneg %p387
      %p657 = pneg %p411
      %p658 = pneg %p408
      %p659 = pneg %p432
      %p660 = pneg %p429
      %p661 = pneg %p453
      %p662 = pneg %p450
      %p663 = pneg %p474
      %p664 = pneg %p471
      %p665 = pneg %p495
      %p666 = pneg %p492
      %p667 = pneg %p521
      %p668 = pneg %p518
      %p669 = scmp.lt.s32.totalorder %s33, 1
      %s670 = scalar_select %p669, %s33, 1
      %s671 = smul.addr %s670, 2
      %s672 = smul.addr %s671, 4
      %s673 = scalar_lea.vmem %s22, %s672
      %p674 = scmp.lt.s32.totalorder %s33, 1
      %s675 = scalar_select %p674, %s33, 1
      %s676 = smul.addr %s675, 2
      %s677 = smul.addr %s676, 4
      %s678 = scalar_lea.vmem %s0, %s677
      %p679 = scmp.lt.s32.totalorder %s33, 1
      %s680 = scalar_select %p679, %s33, 1
      %s681 = smul.addr %s680, 2
      %s682 = smul.addr %s681, 4
      %s683 = scalar_lea.vmem %s22, %s682
      %v685 = vld [vmem:[%s1] sm:$0xff]
      %v686 = vld [vmem:[%s1 + $0x8] sm:$0xff]
      %v687 = vld [vmem:[%s1 + $0x10] sm:$0x1]
      %v688 = vld [vmem:[%s1 + $0x18] sm:$0x1]
      %v689 = vld [vmem:[%s678] sm:$0xff]
      %v690 = vld [vmem:[%s2] sm:$0xf]
      %v691 = vld [vmem:[%s2 + $0x4] sm:$0xf]
      %v692 = vld [vmem:[%s3] sm:$0xff]
      %v693 = vld [vmem:[%s3 + $0x8] sm:$0xff]
      %695 = vst [vmem:[#allocation1] ss:$2 sm:$0xff] %v689
      %v696 = vld.sshfl [vmem:[#allocation1] sm:$0xff pattern:$0x75316420]
      %v697 = vld.sshfl [vmem:[#allocation1 + $0x8] sm:$0xff pattern:$0x75316420]
      %700 = vrot.lane.b32.xlu0 %v696, 17
      %v701 = vpop.permute.xlu0 %700
      %702 = vrot.lane.b32.xlu0 %v697, 17
      %v703 = vpop.permute.xlu0 %702
      %v704 = vlaneseq
      %v705 = vand.u32 %v704, 127
      %vm706 = vcmp.lt.s32.totalorder %v705, 17
      %v707 = vsel %vm706, %v701, %v703
      %v708 = vsel %vm706, %v703, %v701
      %v709 = vperm.slane %v685, 0
      %v710 = vperm.slane %v686, 0
      %v711 = vmul.f32 %v708, %v709
      %v712 = vmul.f32 %v707, %v710
      %v713 = vpack.c.bf16 %v712, %v711
      %714 = vst [vmem:[#allocation1] ss:$2 sm:$0xff] %v689
      %v715 = vld.sshfl [vmem:[#allocation1] sm:$0xff pattern:$0x75316420]
      %v716 = vld.sshfl [vmem:[#allocation1 + $0x8] sm:$0xff pattern:$0x75316420]
      %719 = vrot.lane.b32.xlu0 %v715, 16
      %v720 = vpop.permute.xlu0 %719
      %721 = vrot.lane.b32.xlu0 %v716, 16
      %v722 = vpop.permute.xlu0 %721
      %vm723 = vcmp.lt.s32.totalorder %v705, 16
      %v724 = vsel %vm723, %v720, %v722
      %v725 = vsel %vm723, %v722, %v720
      %v726 = vperm.slane %v685, 1
      %v727 = vperm.slane %v686, 1
      %v728 = vmul.f32 %v725, %v726
      %v729 = vmul.f32 %v724, %v727
      %v730 = vpack.c.bf16 %v729, %v728
      %731 = vst [vmem:[#allocation1] ss:$2 sm:$0xff] %v689
      %v732 = vld.sshfl [vmem:[#allocation1] sm:$0xff pattern:$0x75316420]
      %v733 = vld.sshfl [vmem:[#allocation1 + $0x8] sm:$0xff pattern:$0x75316420]
      %736 = vrot.lane.b32.xlu0 %v732, 15
      %v737 = vpop.permute.xlu0 %736
      %738 = vrot.lane.b32.xlu0 %v733, 15
      %v739 = vpop.permute.xlu0 %738
      %vm740 = vcmp.lt.s32.totalorder %v705, 15
      %v741 = vsel %vm740, %v737, %v739
      %v742 = vsel %vm740, %v739, %v737
      %v743 = vperm.slane %v685, 2
      %v744 = vperm.slane %v686, 2
      %v745 = vmul.f32 %v742, %v743
      %v746 = vmul.f32 %v741, %v744
      %v747 = vpack.c.bf16 %v746, %v745
      %748 = vst [vmem:[#allocation1] ss:$2 sm:$0xff] %v689
      %v749 = vld.sshfl [vmem:[#allocation1] sm:$0xff pattern:$0x75316420]
      %v750 = vld.sshfl [vmem:[#allocation1 + $0x8] sm:$0xff pattern:$0x75316420]
      %753 = vrot.lane.b32.xlu0 %v749, 1
      %v754 = vpop.permute.xlu0 %753
      %755 = vrot.lane.b32.xlu0 %v750, 1
      %v756 = vpop.permute.xlu0 %755
      %vm757 = vcmp.lt.s32.totalorder %v705, 1
      %v758 = vsel %vm757, %v754, %v756
      %v759 = vsel %vm757, %v756, %v754
      %v760 = vperm.slane %v685, 3
      %v761 = vperm.slane %v686, 3
      %v762 = vmul.f32 %v759, %v760
      %v763 = vmul.f32 %v758, %v761
      %v764 = vpack.c.bf16 %v763, %v762
      %765 = vst [vmem:[#allocation1] ss:$2 sm:$0xff] %v689
      %v766 = vld.sshfl [vmem:[#allocation1] sm:$0xff pattern:$0x75316420]
      %v767 = vld.sshfl [vmem:[#allocation1 + $0x8] sm:$0xff pattern:$0x75316420]
      %v770 = vpack.c.bf16 %v767, %v766
      %771 = vst [vmem:[#allocation1] ss:$2 sm:$0xff] %v689
      %v772 = vld.sshfl [vmem:[#allocation1] sm:$0xff pattern:$0x75316420]
      %v773 = vld.sshfl [vmem:[#allocation1 + $0x8] sm:$0xff pattern:$0x75316420]
      %776 = vrot.lane.b32.xlu0 %v772, 127
      %v777 = vpop.permute.xlu0 %776
      %778 = vrot.lane.b32.xlu0 %v773, 127
      %v779 = vpop.permute.xlu0 %778
      %vm780 = vcmp.lt.s32.totalorder %v705, 127
      %v781 = vsel %vm780, %v777, %v779
      %v782 = vsel %vm780, %v779, %v777
      %v783 = vperm.slane %v685, 5
      %v784 = vperm.slane %v686, 5
      %v785 = vmul.f32 %v781, %v783
      %v786 = vmul.f32 %v782, %v784
      %v787 = vpack.c.bf16 %v786, %v785
      %788 = vst [vmem:[#allocation1] ss:$2 sm:$0xff] %v689
      %v789 = vld.sshfl [vmem:[#allocation1] sm:$0xff pattern:$0x75316420]
      %v790 = vld.sshfl [vmem:[#allocation1 + $0x8] sm:$0xff pattern:$0x75316420]
      %793 = vrot.lane.b32.xlu0 %v789, 113
      %v794 = vpop.permute.xlu0 %793
      %795 = vrot.lane.b32.xlu0 %v790, 113
      %v796 = vpop.permute.xlu0 %795
      %vm797 = vcmp.lt.s32.totalorder %v705, 113
      %v798 = vsel %vm797, %v794, %v796
      %v799 = vsel %vm797, %v796, %v794
      %v800 = vperm.slane %v685, 6
      %v801 = vperm.slane %v686, 6
      %v802 = vmul.f32 %v798, %v800
      %v803 = vmul.f32 %v799, %v801
      %v804 = vpack.c.bf16 %v803, %v802
      %805 = vst [vmem:[#allocation1] ss:$2 sm:$0xff] %v689
      %v806 = vld.sshfl [vmem:[#allocation1] sm:$0xff pattern:$0x75316420]
      %v807 = vld.sshfl [vmem:[#allocation1 + $0x8] sm:$0xff pattern:$0x75316420]
      %810 = vrot.lane.b32.xlu0 %v806, 112
      %v811 = vpop.permute.xlu0 %810
      %812 = vrot.lane.b32.xlu0 %v807, 112
      %v813 = vpop.permute.xlu0 %812
      %vm814 = vcmp.lt.s32.totalorder %v705, 112
      %v815 = vsel %vm814, %v811, %v813
      %v816 = vsel %vm814, %v813, %v811
      %v817 = vperm.slane %v685, 7
      %v818 = vperm.slane %v686, 7
      %v819 = vmul.f32 %v815, %v817
      %v820 = vmul.f32 %v816, %v818
      %v821 = vpack.c.bf16 %v820, %v819
      %822 = vst [vmem:[#allocation1] ss:$2 sm:$0xff] %v689
      %v823 = vld.sshfl [vmem:[#allocation1] sm:$0xff pattern:$0x75316420]
      %v824 = vld.sshfl [vmem:[#allocation1 + $0x8] sm:$0xff pattern:$0x75316420]
      %827 = vrot.lane.b32.xlu0 %v823, 111
      %v828 = vpop.permute.xlu0 %827
      %829 = vrot.lane.b32.xlu0 %v824, 111
      %v830 = vpop.permute.xlu0 %829
      %vm831 = vcmp.lt.s32.totalorder %v705, 111
      %v832 = vsel %vm831, %v828, %v830
      %v833 = vsel %vm831, %v830, %v828
      %v834 = vperm.slane %v687, 0
      %v835 = vperm.slane %v688, 0
      %v836 = vmul.f32 %v832, %v834
      %v837 = vmul.f32 %v833, %v835
      %v838 = vpack.c.bf16 %v837, %v836
      %v840 = vunpack.c.l.b16 %v713
      %v841 = vunpack.c.h.b16 %v713
      %v842 = vpack.c.b16 %v840, %v840
      %v843 = vpack.c.b16 %v841, %v841
      %v845 = vunpack.c.l.b16 %v730
      %v846 = vunpack.c.h.b16 %v730
      %v847 = vpack.c.b16 %v845, %v845
      %v848 = vpack.c.b16 %v846, %v846
      %v849 = vrot.slane %v847, 6
      %v850 = vrot.slane %v848, 6
      %v852 = vunpack.c.l.b16 %v747
      %v853 = vunpack.c.h.b16 %v747
      %v854 = vpack.c.b16 %v852, %v852
      %v855 = vpack.c.b16 %v853, %v853
      %v857 = vunpack.c.l.b16 %v764
      %v858 = vunpack.c.h.b16 %v764
      %v859 = vpack.c.b16 %v857, %v857
      %v860 = vpack.c.b16 %v858, %v858
      %v861 = vrot.slane %v859, 2
      %v862 = vrot.slane %v860, 2
      %v864 = vunpack.c.l.b16 %v770
      %v865 = vunpack.c.h.b16 %v770
      %v866 = vpack.c.b16 %v864, %v864
      %v867 = vpack.c.b16 %v865, %v865
      %v869 = vunpack.c.l.b16 %v787
      %v870 = vunpack.c.h.b16 %v787
      %v871 = vpack.c.b16 %v869, %v869
      %v872 = vpack.c.b16 %v870, %v870
      %v873 = vrot.slane %v871, 6
      %v874 = vrot.slane %v872, 6
      %v876 = vunpack.c.l.b16 %v804
      %v877 = vunpack.c.h.b16 %v804
      %v878 = vpack.c.b16 %v876, %v876
      %v879 = vpack.c.b16 %v877, %v877
      %v881 = vunpack.c.l.b16 %v821
      %v882 = vunpack.c.h.b16 %v821
      %v883 = vpack.c.b16 %v881, %v881
      %v884 = vpack.c.b16 %v882, %v882
      %v885 = vrot.slane %v883, 2
      %v886 = vrot.slane %v884, 2
      %v888 = vunpack.c.l.b16 %v838
      %v889 = vunpack.c.h.b16 %v838
      %v890 = vpack.c.b16 %v888, %v888
      %v891 = vpack.c.b16 %v889, %v889
      %vm892 = vcmask 1041408
      %v895 = vsel %vm892, %v842, %v849
      %v898 = vsel %vm892, %v843, %v850
      %vm899 = vcmask 1043456
      %v901 = vsel %vm899, %v895, %v854
      %v903 = vsel %vm899, %v898, %v855
      %vm904 = vcmask 1045504
      %v906 = vsel %vm904, %v901, %v861
      %v909 = vsel %vm904, %v903, %v862
      %v913 = vsel %vm892, %v866, %v873
      %v916 = vsel %vm892, %v867, %v874
      %v918 = vsel %vm899, %v913, %v878
      %v920 = vsel %vm899, %v916, %v879
      %v922 = vsel %vm904, %v918, %v885
      %v925 = vsel %vm904, %v920, %v886
      %928 = vset.pattern.permute.xlu0 0
      %929 = vperm.xlu0 %928, %v692
      %v930 = vpop.permute.xlu0 %929
      %933 = vset.pattern.permute.xlu0 0
      %934 = vperm.xlu0 %933, %v693
      %v935 = vpop.permute.xlu0 %934
      %v939 = vunpack.c.l.b16 %v690
      %v940 = vunpack.c.l.b16 %v691
      %v941 = vpack.c.b16 %v940, %v939
      %vm942 = vcmask 293888
      %v944 = vsel %vm942, %v941, 0
      %v947 = vsel %vm892, %v890, 0
      %v950 = vsel %vm892, %v891, 0
      %952 = vmatpush.bf16.msra.mxu0 0
      %953 = vmatpush.bf16.msra.mxu0 0
      %954 = vmatpush.bf16.msra.mxu0 0
      %955 = vmatpush.bf16.msra.mxu0 0
      %956 = vmatpush.bf16.msra.mxu0 0
      %957 = vmatpush.bf16.msra.mxu0 %v947
      %958 = vmatpush.bf16.msra.mxu0 %v922
      %959 = vmatpush.bf16.msra.mxu0 %v906
      %960 = vmatmul.bf16.gmra.mxu0 %v944
      %v961 = vpop.f32.mrf.mxu0
      %v962 = vadd.f32 %v930, %v961
      %v963 = vpop.f32.mrf.mxu0
      %v964 = vadd.f32 %v935, %v963
      %965 = vdwg.mxu0
      %966 = vmatpush.bf16.msra.mxu0 0
      %967 = vmatpush.bf16.msra.mxu0 0
      %968 = vmatpush.bf16.msra.mxu0 0
      %969 = vmatpush.bf16.msra.mxu0 0
      %970 = vmatpush.bf16.msra.mxu0 0
      %971 = vmatpush.bf16.msra.mxu0 %v950
      %972 = vmatpush.bf16.msra.mxu0 %v925
      %973 = vmatpush.bf16.msra.mxu0 %v909
      %974 = vmatmul.bf16.gmra.mxu0 %v944
      %v975 = vpop.f32.mrf.mxu0
      %v976 = vadd.f32 %v930, %v975
      %v977 = vpop.f32.mrf.mxu0
      %v978 = vadd.f32 %v935, %v977
      %979 = vdwg.mxu0
      %980 = vst [vmem:[#allocation3] sm:$0xff] %v962
      %981 = vst [vmem:[#allocation3 + $0x8] sm:$0xff] %v976
      %982 = vst [vmem:[#allocation3 + $0x10] sm:$0xff] %v964
      %983 = vst [vmem:[#allocation3 + $0x18] sm:$0xff] %v978
      loop: start=0, step=1, limit=2
      $region109: #{rrdbnet_ca_forward.1} parent=107 // loop_pre_header
        _
      $region110: #{rrdbnet_ca_forward.1} parent=107 // loop_header
        %s985 = sphi 0, %s989
        %p986 = scmp.ge.s32.totalorder %s985, 2
      $region111: #{rrdbnet_ca_forward.1} parent=107 // loop_header_branch
        %988 = sbr.rel (%p986) target = $region115
      $region112: #{rrdbnet_ca_forward.1} parent=107 // loop_body
        %v990 = vld [vmem:[#allocation3] sm:$0xff]
        %v991 = vld [vmem:[#allocation3 + $0x8] sm:$0xff]
        %v992 = vld [vmem:[#allocation3 + $0x10] sm:$0xff]
        %v993 = vld [vmem:[#allocation3 + $0x18] sm:$0xff]
        %994 = vrot.lane.b32.xlu0 %v990, 17
        %v995 = vpop.permute.xlu0 %994
        %996 = vrot.lane.b32.xlu0 %v992, 17
        %v997 = vpop.permute.xlu0 %996
        %998 = vrot.lane.b32.xlu0 %v991, 17
        %v999 = vpop.permute.xlu0 %998
        %1000 = vrot.lane.b32.xlu0 %v993, 17
        %v1001 = vpop.permute.xlu0 %1000
        %v1002 = vsel %vm706, %v995, %v999
        %v1003 = vsel %vm706, %v997, %v1001
        %v1004 = vsel %vm706, %v999, %v995
        %v1005 = vsel %vm706, %v1001, %v997
        %v1006 = vmul.f32 %v1004, %v709
        %v1007 = vmul.f32 %v1002, %v710
        %v1008 = vmul.f32 %v1005, %v709
        %v1009 = vmul.f32 %v1003, %v710
        %v1010 = vpack.c.bf16 %v1007, %v1006
        %v1011 = vpack.c.bf16 %v1009, %v1008
        %1012 = vrot.lane.b32.xlu0 %v990, 16
        %v1013 = vpop.permute.xlu0 %1012
        %1014 = vrot.lane.b32.xlu0 %v992, 16
        %v1015 = vpop.permute.xlu0 %1014
        %1016 = vrot.lane.b32.xlu0 %v991, 16
        %v1017 = vpop.permute.xlu0 %1016
        %1018 = vrot.lane.b32.xlu0 %v993, 16
        %v1019 = vpop.permute.xlu0 %1018
        %v1020 = vsel %vm723, %v1013, %v1017
        %v1021 = vsel %vm723, %v1015, %v1019
        %v1022 = vsel %vm723, %v1017, %v1013
        %v1023 = vsel %vm723, %v1019, %v1015
        %v1024 = vmul.f32 %v1022, %v726
        %v1025 = vmul.f32 %v1020, %v727
        %v1026 = vmul.f32 %v1023, %v726
        %v1027 = vmul.f32 %v1021, %v727
        %v1028 = vpack.c.bf16 %v1025, %v1024
        %v1029 = vpack.c.bf16 %v1027, %v1026
        %1030 = vrot.lane.b32.xlu0 %v990, 15
        %v1031 = vpop.permute.xlu0 %1030
        %1032 = vrot.lane.b32.xlu0 %v992, 15
        %v1033 = vpop.permute.xlu0 %1032
        %1034 = vrot.lane.b32.xlu0 %v991, 15
        %v1035 = vpop.permute.xlu0 %1034
        %1036 = vrot.lane.b32.xlu0 %v993, 15
        %v1037 = vpop.permute.xlu0 %1036
        %v1038 = vsel %vm740, %v1031, %v1035
        %v1039 = vsel %vm740, %v1033, %v1037
        %v1040 = vsel %vm740, %v1035, %v1031
        %v1041 = vsel %vm740, %v1037, %v1033
        %v1042 = vmul.f32 %v1040, %v743
        %v1043 = vmul.f32 %v1038, %v744
        %v1044 = vmul.f32 %v1041, %v743
        %v1045 = vmul.f32 %v1039, %v744
        %v1046 = vpack.c.bf16 %v1043, %v1042
        %v1047 = vpack.c.bf16 %v1045, %v1044
        %1048 = vrot.lane.b32.xlu0 %v990, 1
        %v1049 = vpop.permute.xlu0 %1048
        %1050 = vrot.lane.b32.xlu0 %v992, 1
        %v1051 = vpop.permute.xlu0 %1050
        %1052 = vrot.lane.b32.xlu0 %v991, 1
        %v1053 = vpop.permute.xlu0 %1052
        %1054 = vrot.lane.b32.xlu0 %v993, 1
        %v1055 = vpop.permute.xlu0 %1054
        %v1056 = vsel %vm757, %v1049, %v1053
        %v1057 = vsel %vm757, %v1051, %v1055
        %v1058 = vsel %vm757, %v1053, %v1049
        %v1059 = vsel %vm757, %v1055, %v1051
        %v1060 = vmul.f32 %v1058, %v760
        %v1061 = vmul.f32 %v1056, %v761
        %v1062 = vmul.f32 %v1059, %v760
        %v1063 = vmul.f32 %v1057, %v761
        %v1064 = vpack.c.bf16 %v1061, %v1060
        %v1065 = vpack.c.bf16 %v1063, %v1062
        %v1066 = vpack.c.bf16 %v991, %v990
        %v1067 = vpack.c.bf16 %v993, %v992
        %1068 = vrot.lane.b32.xlu0 %v990, 127
        %v1069 = vpop.permute.xlu0 %1068
        %1070 = vrot.lane.b32.xlu0 %v992, 127
        %v1071 = vpop.permute.xlu0 %1070
        %1072 = vrot.lane.b32.xlu0 %v991, 127
        %v1073 = vpop.permute.xlu0 %1072
        %1074 = vrot.lane.b32.xlu0 %v993, 127
        %v1075 = vpop.permute.xlu0 %1074
        %v1076 = vsel %vm780, %v1069, %v1073
        %v1077 = vsel %vm780, %v1071, %v1075
        %v1078 = vsel %vm780, %v1073, %v1069
        %v1079 = vsel %vm780, %v1075, %v1071
        %v1080 = vmul.f32 %v1076, %v783
        %v1081 = vmul.f32 %v1078, %v784
        %v1082 = vmul.f32 %v1077, %v783
        %v1083 = vmul.f32 %v1079, %v784
        %v1084 = vpack.c.bf16 %v1081, %v1080
        %v1085 = vpack.c.bf16 %v1083, %v1082
        %1086 = vrot.lane.b32.xlu0 %v990, 113
        %v1087 = vpop.permute.xlu0 %1086
        %1088 = vrot.lane.b32.xlu0 %v992, 113
        %v1089 = vpop.permute.xlu0 %1088
        %1090 = vrot.lane.b32.xlu0 %v991, 113
        %v1091 = vpop.permute.xlu0 %1090
        %1092 = vrot.lane.b32.xlu0 %v993, 113
        %v1093 = vpop.permute.xlu0 %1092
        %v1094 = vsel %vm797, %v1087, %v1091
        %v1095 = vsel %vm797, %v1089, %v1093
        %v1096 = vsel %vm797, %v1091, %v1087
        %v1097 = vsel %vm797, %v1093, %v1089
        %v1098 = vmul.f32 %v1094, %v800
        %v1099 = vmul.f32 %v1096, %v801
        %v1100 = vmul.f32 %v1095, %v800
        %v1101 = vmul.f32 %v1097, %v801
        %v1102 = vpack.c.bf16 %v1099, %v1098
        %v1103 = vpack.c.bf16 %v1101, %v1100
        %1104 = vrot.lane.b32.xlu0 %v990, 112
        %v1105 = vpop.permute.xlu0 %1104
        %1106 = vrot.lane.b32.xlu0 %v992, 112
        %v1107 = vpop.permute.xlu0 %1106
        %1108 = vrot.lane.b32.xlu0 %v991, 112
        %v1109 = vpop.permute.xlu0 %1108
        %1110 = vrot.lane.b32.xlu0 %v993, 112
        %v1111 = vpop.permute.xlu0 %1110
        %v1112 = vsel %vm814, %v1105, %v1109
        %v1113 = vsel %vm814, %v1107, %v1111
        %v1114 = vsel %vm814, %v1109, %v1105
        %v1115 = vsel %vm814, %v1111, %v1107
        %v1116 = vmul.f32 %v1112, %v817
        %v1117 = vmul.f32 %v1114, %v818
        %v1118 = vmul.f32 %v1113, %v817
        %v1119 = vmul.f32 %v1115, %v818
        %v1120 = vpack.c.bf16 %v1117, %v1116
        %v1121 = vpack.c.bf16 %v1119, %v1118
        %1122 = vrot.lane.b32.xlu0 %v990, 111
        %v1123 = vpop.permute.xlu0 %1122
        %1124 = vrot.lane.b32.xlu0 %v992, 111
        %v1125 = vpop.permute.xlu0 %1124
        %1126 = vrot.lane.b32.xlu0 %v991, 111
        %v1127 = vpop.permute.xlu0 %1126
        %1128 = vrot.lane.b32.xlu0 %v993, 111
        %v1129 = vpop.permute.xlu0 %1128
        %v1130 = vsel %vm831, %v1123, %v1127
        %v1131 = vsel %vm831, %v1125, %v1129
        %v1132 = vsel %vm831, %v1127, %v1123
        %v1133 = vsel %vm831, %v1129, %v1125
        %v1134 = vmul.f32 %v1130, %v834
        %v1135 = vmul.f32 %v1132, %v835
        %v1136 = vmul.f32 %v1131, %v834
        %v1137 = vmul.f32 %v1133, %v835
        %v1138 = vpack.c.bf16 %v1135, %v1134
        %v1139 = vpack.c.bf16 %v1137, %v1136
        %1140 = vst [vmem:[#allocation2] sm:$0xff] %v1010
        %1141 = vst [vmem:[#allocation2 + $0x8] sm:$0xff] %v1011
        %1142 = vst [vmem:[#allocation2 + $0x10] sm:$0xff] %v1028
        %1143 = vst [vmem:[#allocation2 + $0x18] sm:$0xff] %v1029
        %1144 = vst [vmem:[#allocation2 + $0x20] sm:$0xff] %v1046
        %1145 = vst [vmem:[#allocation2 + $0x28] sm:$0xff] %v1047
        %1146 = vst [vmem:[#allocation2 + $0x30] sm:$0xff] %v1064
        %1147 = vst [vmem:[#allocation2 + $0x38] sm:$0xff] %v1065
        %1148 = vst [vmem:[#allocation2 + $0x40] sm:$0xff] %v1066
        %1149 = vst [vmem:[#allocation2 + $0x48] sm:$0xff] %v1067
        %1150 = vst [vmem:[#allocation2 + $0x50] sm:$0xff] %v1084
        %1151 = vst [vmem:[#allocation2 + $0x58] sm:$0xff] %v1085
        %1152 = vst [vmem:[#allocation2 + $0x60] sm:$0xff] %v1102
        %1153 = vst [vmem:[#allocation2 + $0x68] sm:$0xff] %v1103
        %1154 = vst [vmem:[#allocation2 + $0x70] sm:$0xff] %v1120
        %1155 = vst [vmem:[#allocation2 + $0x78] sm:$0xff] %v1121
        %1156 = vst [vmem:[#allocation2 + $0x80] sm:$0xff] %v1138
        %1157 = vst [vmem:[#allocation2 + $0x88] sm:$0xff] %v1139
        %v1158 = vld [vmem:[%s4] sm:$0xff]
        %v1159 = vld [vmem:[#allocation2] sm:$0xff]
        %v1160 = vld [vmem:[#allocation2 + $0x8] sm:$0xff]
        %v1161 = vld [vmem:[#allocation2 + $0x10] sm:$0xff]
        %v1162 = vld [vmem:[#allocation2 + $0x18] sm:$0xff]
        %v1163 = vld [vmem:[#allocation2 + $0x20] sm:$0xff]
        %v1164 = vld [vmem:[#allocation2 + $0x28] sm:$0xff]
        %v1165 = vld [vmem:[#allocation2 + $0x30] sm:$0xff]
        %v1166 = vld [vmem:[#allocation2 + $0x38] sm:$0xff]
        %v1167 = vld [vmem:[#allocation2 + $0x40] sm:$0xff]
        %v1168 = vld [vmem:[#allocation2 + $0x48] sm:$0xff]
        %v1169 = vld [vmem:[#allocation2 + $0x50] sm:$0xff]
        %v1170 = vld [vmem:[#allocation2 + $0x58] sm:$0xff]
        %v1171 = vld [vmem:[#allocation2 + $0x60] sm:$0xff]
        %v1172 = vld [vmem:[#allocation2 + $0x68] sm:$0xff]
        %v1173 = vld [vmem:[#allocation2 + $0x70] sm:$0xff]
        %v1174 = vld [vmem:[#allocation2 + $0x78] sm:$0xff]
        %v1175 = vld [vmem:[#allocation2 + $0x80] sm:$0xff]
        %v1176 = vld [vmem:[#allocation2 + $0x88] sm:$0xff]
        %v1177 = vld [vmem:[%s5] sm:$0xff]
        %1179 = vset.pattern.permute.xlu0 0
        %1180 = vperm.xlu0 %1179, %v1177
        %v1181 = vpop.permute.xlu0 %1180
        %v1184 = vunpack.c.l.b16 %v1158
        %v1185 = vunpack.c.h.b16 %v1158
        %v1186 = vpack.c.b16 %v1184, %v1184
        %v1187 = vpack.c.b16 %v1185, %v1185
        %v1207 = vunpack.c.l.b16 %v1159
        %v1208 = vunpack.c.h.b16 %v1159
        %v1209 = vunpack.c.l.b16 %v1160
        %v1210 = vunpack.c.h.b16 %v1160
        %v1211 = vunpack.c.l.b16 %v1161
        %v1212 = vunpack.c.h.b16 %v1161
        %v1213 = vunpack.c.l.b16 %v1162
        %v1214 = vunpack.c.h.b16 %v1162
        %v1215 = vunpack.c.l.b16 %v1163
        %v1216 = vunpack.c.h.b16 %v1163
        %v1217 = vunpack.c.l.b16 %v1164
        %v1218 = vunpack.c.h.b16 %v1164
        %v1219 = vunpack.c.l.b16 %v1165
        %v1220 = vunpack.c.h.b16 %v1165
        %v1221 = vunpack.c.l.b16 %v1166
        %v1222 = vunpack.c.h.b16 %v1166
        %v1223 = vunpack.c.l.b16 %v1167
        %v1224 = vunpack.c.h.b16 %v1167
        %v1225 = vunpack.c.l.b16 %v1168
        %v1226 = vunpack.c.h.b16 %v1168
        %v1227 = vunpack.c.l.b16 %v1169
        %v1228 = vunpack.c.h.b16 %v1169
        %v1229 = vunpack.c.l.b16 %v1170
        %v1230 = vunpack.c.h.b16 %v1170
        %v1231 = vunpack.c.l.b16 %v1171
        %v1232 = vunpack.c.h.b16 %v1171
        %v1233 = vunpack.c.l.b16 %v1172
        %v1234 = vunpack.c.h.b16 %v1172
        %v1235 = vunpack.c.l.b16 %v1173
        %v1236 = vunpack.c.h.b16 %v1173
        %v1237 = vunpack.c.l.b16 %v1174
        %v1238 = vunpack.c.h.b16 %v1174
        %v1239 = vunpack.c.l.b16 %v1175
        %v1240 = vunpack.c.h.b16 %v1175
        %v1241 = vunpack.c.l.b16 %v1176
        %v1242 = vunpack.c.h.b16 %v1176
        %v1243 = vpack.c.b16 %v1209, %v1207
        %v1244 = vpack.c.b16 %v1210, %v1208
        %v1245 = vpack.c.b16 %v1213, %v1211
        %v1246 = vpack.c.b16 %v1214, %v1212
        %v1247 = vpack.c.b16 %v1217, %v1215
        %v1248 = vpack.c.b16 %v1218, %v1216
        %v1249 = vpack.c.b16 %v1221, %v1219
        %v1250 = vpack.c.b16 %v1222, %v1220
        %v1251 = vpack.c.b16 %v1225, %v1223
        %v1252 = vpack.c.b16 %v1226, %v1224
        %v1253 = vpack.c.b16 %v1229, %v1227
        %v1254 = vpack.c.b16 %v1230, %v1228
        %v1255 = vpack.c.b16 %v1233, %v1231
        %v1256 = vpack.c.b16 %v1234, %v1232
        %v1257 = vpack.c.b16 %v1237, %v1235
        %v1258 = vpack.c.b16 %v1238, %v1236
        %v1259 = vpack.c.b16 %v1241, %v1239
        %v1260 = vpack.c.b16 %v1242, %v1240
        %vm1279 = vcmask 130048
        %v1281 = vsel %vm1279, %v1187, 0
        %1283 = vmatpush.bf16.msra.mxu0 %v1257
        %1284 = vmatpush.bf16.msra.mxu0 %v1255
        %1285 = vmatpush.bf16.msra.mxu0 %v1253
        %1286 = vmatpush.bf16.msra.mxu0 %v1251
        %1287 = vmatpush.bf16.msra.mxu0 %v1249
        %1288 = vmatpush.bf16.msra.mxu0 %v1247
        %1289 = vmatpush.bf16.msra.mxu0 %v1245
        %1290 = vmatpush.bf16.msra.mxu0 %v1243
        %1291 = vmatmul.bf16.gmra.mxu0 %v1186
        %v1292 = vpop.f32.mrf.mxu0
        %v1293 = vadd.f32 %v1181, %v1292
        %v1294 = vpop.f32.mrf.mxu0
        %1295 = vdwg.mxu0
        %1296 = vmatpush.bf16.msra.mxu0 0
        %1297 = vmatpush.bf16.msra.mxu0 0
        %1298 = vmatpush.bf16.msra.mxu0 0
        %1299 = vmatpush.bf16.msra.mxu0 0
        %1300 = vmatpush.bf16.msra.mxu0 0
        %1301 = vmatpush.bf16.msra.mxu0 0
        %1302 = vmatpush.bf16.msra.mxu0 0
        %1303 = vmatpush.bf16.msra.mxu0 %v1259
        %1304 = vmatmul.bf16.gmra.mxu0 %v1281
        %v1305 = vpop.f32.mrf.mxu0
        %v1306 = vadd.f32 %v1293, %v1305
        %v1307 = vpop.f32.mrf.mxu0
        %1308 = vdwg.mxu0
        %1309 = vmatpush.bf16.msra.mxu0 %v1258
        %1310 = vmatpush.bf16.msra.mxu0 %v1256
        %1311 = vmatpush.bf16.msra.mxu0 %v1254
        %1312 = vmatpush.bf16.msra.mxu0 %v1252
        %1313 = vmatpush.bf16.msra.mxu0 %v1250
        %1314 = vmatpush.bf16.msra.mxu0 %v1248
        %1315 = vmatpush.bf16.msra.mxu0 %v1246
        %1316 = vmatpush.bf16.msra.mxu0 %v1244
        %1317 = vmatmul.bf16.gmra.mxu0 %v1186
        %v1318 = vpop.f32.mrf.mxu0
        %v1319 = vadd.f32 %v1181, %v1318
        %v1320 = vpop.f32.mrf.mxu0
        %1321 = vdwg.mxu0
        %1322 = vmatpush.bf16.msra.mxu0 0
        %1323 = vmatpush.bf16.msra.mxu0 0
        %1324 = vmatpush.bf16.msra.mxu0 0
        %1325 = vmatpush.bf16.msra.mxu0 0
        %1326 = vmatpush.bf16.msra.mxu0 0
        %1327 = vmatpush.bf16.msra.mxu0 0
        %1328 = vmatpush.bf16.msra.mxu0 0
        %1329 = vmatpush.bf16.msra.mxu0 %v1260
        %1330 = vmatmul.bf16.gmra.mxu0 %v1281
        %v1331 = vpop.f32.mrf.mxu0
        %v1332 = vadd.f32 %v1319, %v1331
        %v1333 = vpop.f32.mrf.mxu0
        %1334 = vdwg.mxu0
        %vm1335 = vcmp.ge.f32.partialorder %v1306, 0.0
        %vm1336 = vcmp.ge.f32.partialorder %v1332, 0.0
        %v1337 = vmul.f32 %v1306, 0.2
        %v1338 = vmul.f32 %v1332, 0.2
        %v1339 = vsel %vm1335, %v1306, %v1337
        %v1340 = vsel %vm1336, %v1332, %v1338
        %1341 = vrot.lane.b32.xlu0 %v1339, 17
        %v1342 = vpop.permute.xlu0 %1341
        %1343 = vrot.lane.b32.xlu0 %v1340, 17
        %v1344 = vpop.permute.xlu0 %1343
        %v1345 = vsel %vm706, %v1342, %v1344
        %v1346 = vsel %vm706, %v1344, %v1342
        %v1347 = vmul.f32 %v1346, %v709
        %v1348 = vmul.f32 %v1345, %v710
        %v1349 = vpack.c.bf16 %v1348, %v1347
        %1350 = vrot.lane.b32.xlu0 %v1339, 16
        %v1351 = vpop.permute.xlu0 %1350
        %1352 = vrot.lane.b32.xlu0 %v1340, 16
        %v1353 = vpop.permute.xlu0 %1352
        %v1354 = vsel %vm723, %v1351, %v1353
        %v1355 = vsel %vm723, %v1353, %v1351
        %v1356 = vmul.f32 %v1355, %v726
        %v1357 = vmul.f32 %v1354, %v727
        %v1358 = vpack.c.bf16 %v1357, %v1356
        %1359 = vrot.lane.b32.xlu0 %v1339, 15
        %v1360 = vpop.permute.xlu0 %1359
        %1361 = vrot.lane.b32.xlu0 %v1340, 15
        %v1362 = vpop.permute.xlu0 %1361
        %v1363 = vsel %vm740, %v1360, %v1362
        %v1364 = vsel %vm740, %v1362, %v1360
        %v1365 = vmul.f32 %v1364, %v743
        %v1366 = vmul.f32 %v1363, %v744
        %v1367 = vpack.c.bf16 %v1366, %v1365
        %1368 = vrot.lane.b32.xlu0 %v1339, 1
        %v1369 = vpop.permute.xlu0 %1368
        %1370 = vrot.lane.b32.xlu0 %v1340, 1
        %v1371 = vpop.permute.xlu0 %1370
        %v1372 = vsel %vm757, %v1369, %v1371
        %v1373 = vsel %vm757, %v1371, %v1369
        %v1374 = vmul.f32 %v1373, %v760
        %v1375 = vmul.f32 %v1372, %v761
        %v1376 = vpack.c.bf16 %v1375, %v1374
        %v1377 = vpack.c.bf16 %v1340, %v1339
        %1378 = vrot.lane.b32.xlu0 %v1339, 127
        %v1379 = vpop.permute.xlu0 %1378
        %1380 = vrot.lane.b32.xlu0 %v1340, 127
        %v1381 = vpop.permute.xlu0 %1380
        %v1382 = vsel %vm780, %v1379, %v1381
        %v1383 = vsel %vm780, %v1381, %v1379
        %v1384 = vmul.f32 %v1382, %v783
        %v1385 = vmul.f32 %v1383, %v784
        %v1386 = vpack.c.bf16 %v1385, %v1384
        %1387 = vrot.lane.b32.xlu0 %v1339, 113
        %v1388 = vpop.permute.xlu0 %1387
        %1389 = vrot.lane.b32.xlu0 %v1340, 113
        %v1390 = vpop.permute.xlu0 %1389
        %v1391 = vsel %vm797, %v1388, %v1390
        %v1392 = vsel %vm797, %v1390, %v1388
        %v1393 = vmul.f32 %v1391, %v800
        %v1394 = vmul.f32 %v1392, %v801
        %v1395 = vpack.c.bf16 %v1394, %v1393
        %1396 = vrot.lane.b32.xlu0 %v1339, 112
        %v1397 = vpop.permute.xlu0 %1396
        %1398 = vrot.lane.b32.xlu0 %v1340, 112
        %v1399 = vpop.permute.xlu0 %1398
        %v1400 = vsel %vm814, %v1397, %v1399
        %v1401 = vsel %vm814, %v1399, %v1397
        %v1402 = vmul.f32 %v1400, %v817
        %v1403 = vmul.f32 %v1401, %v818
        %v1404 = vpack.c.bf16 %v1403, %v1402
        %1405 = vrot.lane.b32.xlu0 %v1339, 111
        %v1406 = vpop.permute.xlu0 %1405
        %1407 = vrot.lane.b32.xlu0 %v1340, 111
        %v1408 = vpop.permute.xlu0 %1407
        %v1409 = vsel %vm831, %v1406, %v1408
        %v1410 = vsel %vm831, %v1408, %v1406
        %v1411 = vmul.f32 %v1409, %v834
        %v1412 = vmul.f32 %v1410, %v835
        %v1413 = vpack.c.bf16 %v1412, %v1411
        %1414 = vst [vmem:[#allocation2 + $0x90] sm:$0xff] %v1349
        %1415 = vst [vmem:[#allocation2 + $0x98] sm:$0xff] %v1358
        %1416 = vst [vmem:[#allocation2 + $0xa0] sm:$0xff] %v1367
        %1417 = vst [vmem:[#allocation2 + $0xa8] sm:$0xff] %v1376
        %1418 = vst [vmem:[#allocation2 + $0xb0] sm:$0xff] %v1377
        %1419 = vst [vmem:[#allocation2 + $0xb8] sm:$0xff] %v1386
        %1420 = vst [vmem:[#allocation2 + $0xc0] sm:$0xff] %v1395
        %1421 = vst [vmem:[#allocation2 + $0xc8] sm:$0xff] %v1404
        %1422 = vst [vmem:[#allocation2 + $0xd0] sm:$0xff] %v1413
        %v1423 = vld [vmem:[%s6] sm:$0xff]
        %v1424 = vld [vmem:[#allocation2] sm:$0xff]
        %v1425 = vld [vmem:[#allocation2 + $0x8] sm:$0xff]
        %v1426 = vld [vmem:[#allocation2 + $0x10] sm:$0xff]
        %v1427 = vld [vmem:[#allocation2 + $0x18] sm:$0xff]
        %v1428 = vld [vmem:[#allocation2 + $0x20] sm:$0xff]
        %v1429 = vld [vmem:[#allocation2 + $0x28] sm:$0xff]
        %v1430 = vld [vmem:[#allocation2 + $0x30] sm:$0xff]
        %v1431 = vld [vmem:[#allocation2 + $0x38] sm:$0xff]
        %v1432 = vld [vmem:[#allocation2 + $0x40] sm:$0xff]
        %v1433 = vld [vmem:[#allocation2 + $0x48] sm:$0xff]
        %v1434 = vld [vmem:[#allocation2 + $0x50] sm:$0xff]
        %v1435 = vld [vmem:[#allocation2 + $0x58] sm:$0xff]
        %v1436 = vld [vmem:[#allocation2 + $0x60] sm:$0xff]
        %v1437 = vld [vmem:[#allocation2 + $0x68] sm:$0xff]
        %v1438 = vld [vmem:[#allocation2 + $0x70] sm:$0xff]
        %v1439 = vld [vmem:[#allocation2 + $0x78] sm:$0xff]
        %v1440 = vld [vmem:[#allocation2 + $0x80] sm:$0xff]
        %v1441 = vld [vmem:[#allocation2 + $0x88] sm:$0xff]
        %v1442 = vld [vmem:[#allocation2 + $0x90] sm:$0xff]
        %v1443 = vld [vmem:[#allocation2 + $0x98] sm:$0xff]
        %v1444 = vld [vmem:[#allocation2 + $0xa0] sm:$0xff]
        %v1445 = vld [vmem:[#allocation2 + $0xa8] sm:$0xff]
        %v1446 = vld [vmem:[#allocation2 + $0xb0] sm:$0xff]
        %v1447 = vld [vmem:[#allocation2 + $0xb8] sm:$0xff]
        %v1448 = vld [vmem:[#allocation2 + $0xc0] sm:$0xff]
        %v1449 = vld [vmem:[#allocation2 + $0xc8] sm:$0xff]
        %v1450 = vld [vmem:[#allocation2 + $0xd0] sm:$0xff]
        %v1451 = vld [vmem:[%s7] sm:$0xff]
        %1453 = vset.pattern.permute.xlu0 0
        %1454 = vperm.xlu0 %1453, %v1451
        %v1455 = vpop.permute.xlu0 %1454
        %v1458 = vunpack.c.l.b16 %v1423
        %v1459 = vunpack.c.h.b16 %v1423
        %v1460 = vpack.c.b16 %v1458, %v1458
        %v1461 = vpack.c.b16 %v1459, %v1459
        %v1490 = vunpack.c.l.b16 %v1424
        %v1491 = vunpack.c.h.b16 %v1424
        %v1492 = vunpack.c.l.b16 %v1425
        %v1493 = vunpack.c.h.b16 %v1425
        %v1494 = vunpack.c.l.b16 %v1426
        %v1495 = vunpack.c.h.b16 %v1426
        %v1496 = vunpack.c.l.b16 %v1427
        %v1497 = vunpack.c.h.b16 %v1427
        %v1498 = vunpack.c.l.b16 %v1428
        %v1499 = vunpack.c.h.b16 %v1428
        %v1500 = vunpack.c.l.b16 %v1429
        %v1501 = vunpack.c.h.b16 %v1429
        %v1502 = vunpack.c.l.b16 %v1430
        %v1503 = vunpack.c.h.b16 %v1430
        %v1504 = vunpack.c.l.b16 %v1431
        %v1505 = vunpack.c.h.b16 %v1431
        %v1506 = vunpack.c.l.b16 %v1432
        %v1507 = vunpack.c.h.b16 %v1432
        %v1508 = vunpack.c.l.b16 %v1433
        %v1509 = vunpack.c.h.b16 %v1433
        %v1510 = vunpack.c.l.b16 %v1434
        %v1511 = vunpack.c.h.b16 %v1434
        %v1512 = vunpack.c.l.b16 %v1435
        %v1513 = vunpack.c.h.b16 %v1435
        %v1514 = vunpack.c.l.b16 %v1436
        %v1515 = vunpack.c.h.b16 %v1436
        %v1516 = vunpack.c.l.b16 %v1437
        %v1517 = vunpack.c.h.b16 %v1437
        %v1518 = vunpack.c.l.b16 %v1438
        %v1519 = vunpack.c.h.b16 %v1438
        %v1520 = vunpack.c.l.b16 %v1439
        %v1521 = vunpack.c.h.b16 %v1439
        %v1522 = vunpack.c.l.b16 %v1440
        %v1523 = vunpack.c.h.b16 %v1440
        %v1524 = vunpack.c.l.b16 %v1441
        %v1525 = vunpack.c.h.b16 %v1441
        %v1526 = vunpack.c.l.b16 %v1442
        %v1527 = vunpack.c.h.b16 %v1442
        %v1528 = vunpack.c.l.b16 %v1443
        %v1529 = vunpack.c.h.b16 %v1443
        %v1530 = vunpack.c.l.b16 %v1444
        %v1531 = vunpack.c.h.b16 %v1444
        %v1532 = vunpack.c.l.b16 %v1445
        %v1533 = vunpack.c.h.b16 %v1445
        %v1534 = vunpack.c.l.b16 %v1446
        %v1535 = vunpack.c.h.b16 %v1446
        %v1536 = vunpack.c.l.b16 %v1447
        %v1537 = vunpack.c.h.b16 %v1447
        %v1538 = vunpack.c.l.b16 %v1448
        %v1539 = vunpack.c.h.b16 %v1448
        %v1540 = vunpack.c.l.b16 %v1449
        %v1541 = vunpack.c.h.b16 %v1449
        %v1542 = vunpack.c.l.b16 %v1450
        %v1543 = vunpack.c.h.b16 %v1450
        %v1544 = vpack.c.b16 %v1492, %v1490
        %v1545 = vpack.c.b16 %v1493, %v1491
        %v1546 = vpack.c.b16 %v1496, %v1494
        %v1547 = vpack.c.b16 %v1497, %v1495
        %v1548 = vpack.c.b16 %v1500, %v1498
        %v1549 = vpack.c.b16 %v1501, %v1499
        %v1550 = vpack.c.b16 %v1504, %v1502
        %v1551 = vpack.c.b16 %v1505, %v1503
        %v1552 = vpack.c.b16 %v1508, %v1506
        %v1553 = vpack.c.b16 %v1509, %v1507
        %v1554 = vpack.c.b16 %v1512, %v1510
        %v1555 = vpack.c.b16 %v1513, %v1511
        %v1556 = vpack.c.b16 %v1516, %v1514
        %v1557 = vpack.c.b16 %v1517, %v1515
        %v1558 = vpack.c.b16 %v1520, %v1518
        %v1559 = vpack.c.b16 %v1521, %v1519
        %v1560 = vpack.c.b16 %v1524, %v1522
        %v1561 = vpack.c.b16 %v1525, %v1523
        %v1562 = vpack.c.b16 %v1528, %v1526
        %v1563 = vpack.c.b16 %v1529, %v1527
        %v1564 = vpack.c.b16 %v1532, %v1530
        %v1565 = vpack.c.b16 %v1533, %v1531
        %v1566 = vpack.c.b16 %v1536, %v1534
        %v1567 = vpack.c.b16 %v1537, %v1535
        %v1568 = vpack.c.b16 %v1540, %v1538
        %v1569 = vpack.c.b16 %v1541, %v1539
        %v1570 = vpack.c.b16 %v1542, %v1542
        %v1571 = vpack.c.b16 %v1543, %v1543
        %vm1598 = vcmask 719872
        %v1600 = vsel %vm1598, %v1461, 0
        %v1603 = vsel %vm899, %v1570, 0
        %v1606 = vsel %vm899, %v1571, 0
        %1608 = vmatpush.bf16.msra.mxu0 %v1558
        %1609 = vmatpush.bf16.msra.mxu0 %v1556
        %1610 = vmatpush.bf16.msra.mxu0 %v1554
        %1611 = vmatpush.bf16.msra.mxu0 %v1552
        %1612 = vmatpush.bf16.msra.mxu0 %v1550
        %1613 = vmatpush.bf16.msra.mxu0 %v1548
        %1614 = vmatpush.bf16.msra.mxu0 %v1546
        %1615 = vmatpush.bf16.msra.mxu0 %v1544
        %1616 = vmatmul.bf16.gmra.mxu0 %v1460
        %v1617 = vpop.f32.mrf.mxu0
        %v1618 = vadd.f32 %v1455, %v1617
        %v1619 = vpop.f32.mrf.mxu0
        %1620 = vdwg.mxu0
        %1621 = vmatpush.bf16.msra.mxu0 0
        %1622 = vmatpush.bf16.msra.mxu0 0
        %1623 = vmatpush.bf16.msra.mxu0 %v1603
        %1624 = vmatpush.bf16.msra.mxu0 %v1568
        %1625 = vmatpush.bf16.msra.mxu0 %v1566
        %1626 = vmatpush.bf16.msra.mxu0 %v1564
        %1627 = vmatpush.bf16.msra.mxu0 %v1562
        %1628 = vmatpush.bf16.msra.mxu0 %v1560
        %1629 = vmatmul.bf16.gmra.mxu0 %v1600
        %v1630 = vpop.f32.mrf.mxu0
        %v1631 = vadd.f32 %v1618, %v1630
        %v1632 = vpop.f32.mrf.mxu0
        %1633 = vdwg.mxu0
        %1634 = vmatpush.bf16.msra.mxu0 %v1559
        %1635 = vmatpush.bf16.msra.mxu0 %v1557
        %1636 = vmatpush.bf16.msra.mxu0 %v1555
        %1637 = vmatpush.bf16.msra.mxu0 %v1553
        %1638 = vmatpush.bf16.msra.mxu0 %v1551
        %1639 = vmatpush.bf16.msra.mxu0 %v1549
        %1640 = vmatpush.bf16.msra.mxu0 %v1547
        %1641 = vmatpush.bf16.msra.mxu0 %v1545
        %1642 = vmatmul.bf16.gmra.mxu0 %v1460
        %v1643 = vpop.f32.mrf.mxu0
        %v1644 = vadd.f32 %v1455, %v1643
        %v1645 = vpop.f32.mrf.mxu0
        %1646 = vdwg.mxu0
        %1647 = vmatpush.bf16.msra.mxu0 0
        %1648 = vmatpush.bf16.msra.mxu0 0
        %1649 = vmatpush.bf16.msra.mxu0 %v1606
        %1650 = vmatpush.bf16.msra.mxu0 %v1569
        %1651 = vmatpush.bf16.msra.mxu0 %v1567
        %1652 = vmatpush.bf16.msra.mxu0 %v1565
        %1653 = vmatpush.bf16.msra.mxu0 %v1563
        %1654 = vmatpush.bf16.msra.mxu0 %v1561
        %1655 = vmatmul.bf16.gmra.mxu0 %v1600
        %v1656 = vpop.f32.mrf.mxu0
        %v1657 = vadd.f32 %v1644, %v1656
        %v1658 = vpop.f32.mrf.mxu0
        %1659 = vdwg.mxu0
        %vm1660 = vcmp.ge.f32.partialorder %v1631, 0.0
        %vm1661 = vcmp.ge.f32.partialorder %v1657, 0.0
        %v1662 = vmul.f32 %v1631, 0.2
        %v1663 = vmul.f32 %v1657, 0.2
        %v1664 = vsel %vm1660, %v1631, %v1662
        %v1665 = vsel %vm1661, %v1657, %v1663
        %1666 = vrot.lane.b32.xlu0 %v1664, 17
        %v1667 = vpop.permute.xlu0 %1666
        %1668 = vrot.lane.b32.xlu0 %v1665, 17
        %v1669 = vpop.permute.xlu0 %1668
        %v1670 = vsel %vm706, %v1667, %v1669
        %v1671 = vsel %vm706, %v1669, %v1667
        %v1672 = vmul.f32 %v1671, %v709
        %v1673 = vmul.f32 %v1670, %v710
        %v1674 = vpack.c.bf16 %v1673, %v1672
        %1675 = vrot.lane.b32.xlu0 %v1664, 16
        %v1676 = vpop.permute.xlu0 %1675
        %1677 = vrot.lane.b32.xlu0 %v1665, 16
        %v1678 = vpop.permute.xlu0 %1677
        %v1679 = vsel %vm723, %v1676, %v1678
        %v1680 = vsel %vm723, %v1678, %v1676
        %v1681 = vmul.f32 %v1680, %v726
        %v1682 = vmul.f32 %v1679, %v727
        %v1683 = vpack.c.bf16 %v1682, %v1681
        %1684 = vrot.lane.b32.xlu0 %v1664, 15
        %v1685 = vpop.permute.xlu0 %1684
        %1686 = vrot.lane.b32.xlu0 %v1665, 15
        %v1687 = vpop.permute.xlu0 %1686
        %v1688 = vsel %vm740, %v1685, %v1687
        %v1689 = vsel %vm740, %v1687, %v1685
        %v1690 = vmul.f32 %v1689, %v743
        %v1691 = vmul.f32 %v1688, %v744
        %v1692 = vpack.c.bf16 %v1691, %v1690
        %1693 = vrot.lane.b32.xlu0 %v1664, 1
        %v1694 = vpop.permute.xlu0 %1693
        %1695 = vrot.lane.b32.xlu0 %v1665, 1
        %v1696 = vpop.permute.xlu0 %1695
        %v1697 = vsel %vm757, %v1694, %v1696
        %v1698 = vsel %vm757, %v1696, %v1694
        %v1699 = vmul.f32 %v1698, %v760
        %v1700 = vmul.f32 %v1697, %v761
        %v1701 = vpack.c.bf16 %v1700, %v1699
        %v1702 = vpack.c.bf16 %v1665, %v1664
        %1703 = vrot.lane.b32.xlu0 %v1664, 127
        %v1704 = vpop.permute.xlu0 %1703
        %1705 = vrot.lane.b32.xlu0 %v1665, 127
        %v1706 = vpop.permute.xlu0 %1705
        %v1707 = vsel %vm780, %v1704, %v1706
        %v1708 = vsel %vm780, %v1706, %v1704
        %v1709 = vmul.f32 %v1707, %v783
        %v1710 = vmul.f32 %v1708, %v784
        %v1711 = vpack.c.bf16 %v1710, %v1709
        %1712 = vrot.lane.b32.xlu0 %v1664, 113
        %v1713 = vpop.permute.xlu0 %1712
        %1714 = vrot.lane.b32.xlu0 %v1665, 113
        %v1715 = vpop.permute.xlu0 %1714
        %v1716 = vsel %vm797, %v1713, %v1715
        %v1717 = vsel %vm797, %v1715, %v1713
        %v1718 = vmul.f32 %v1716, %v800
        %v1719 = vmul.f32 %v1717, %v801
        %v1720 = vpack.c.bf16 %v1719, %v1718
        %1721 = vrot.lane.b32.xlu0 %v1664, 112
        %v1722 = vpop.permute.xlu0 %1721
        %1723 = vrot.lane.b32.xlu0 %v1665, 112
        %v1724 = vpop.permute.xlu0 %1723
        %v1725 = vsel %vm814, %v1722, %v1724
        %v1726 = vsel %vm814, %v1724, %v1722
        %v1727 = vmul.f32 %v1725, %v817
        %v1728 = vmul.f32 %v1726, %v818
        %v1729 = vpack.c.bf16 %v1728, %v1727
        %1730 = vrot.lane.b32.xlu0 %v1664, 111
        %v1731 = vpop.permute.xlu0 %1730
        %1732 = vrot.lane.b32.xlu0 %v1665, 111
        %v1733 = vpop.permute.xlu0 %1732
        %v1734 = vsel %vm831, %v1731, %v1733
        %v1735 = vsel %vm831, %v1733, %v1731
        %v1736 = vmul.f32 %v1734, %v834
        %v1737 = vmul.f32 %v1735, %v835
        %v1738 = vpack.c.bf16 %v1737, %v1736
        %1739 = vst [vmem:[#allocation2 + $0xd8] sm:$0xff] %v1674
        %1740 = vst [vmem:[#allocation2 + $0xe0] sm:$0xff] %v1683
        %1741 = vst [vmem:[#allocation2 + $0xe8] sm:$0xff] %v1692
        %1742 = vst [vmem:[#allocation2 + $0xf0] sm:$0xff] %v1701
        %1743 = vst [vmem:[#allocation2 + $0xf8] sm:$0xff] %v1702
        %1744 = vst [vmem:[#allocation2 + $0x100] sm:$0xff] %v1711
        %1745 = vst [vmem:[#allocation2 + $0x108] sm:$0xff] %v1720
        %1746 = vst [vmem:[#allocation2 + $0x110] sm:$0xff] %v1729
        %1747 = vst [vmem:[#allocation2 + $0x118] sm:$0xff] %v1738
        %v1748 = vld [vmem:[%s8] sm:$0xff]
        %v1749 = vld [vmem:[%s8 + $0x8] sm:$0xf]
        %v1750 = vld [vmem:[%s8 + $0xc] sm:$0xff]
        %v1751 = vld [vmem:[%s8 + $0x14] sm:$0xf]
        %v1752 = vld [vmem:[#allocation2] sm:$0xff]
        %v1753 = vld [vmem:[#allocation2 + $0x8] sm:$0xff]
        %v1754 = vld [vmem:[#allocation2 + $0x10] sm:$0xff]
        %v1755 = vld [vmem:[#allocation2 + $0x18] sm:$0xff]
        %v1756 = vld [vmem:[#allocation2 + $0x20] sm:$0xff]
        %v1757 = vld [vmem:[#allocation2 + $0x28] sm:$0xff]
        %v1758 = vld [vmem:[#allocation2 + $0x30] sm:$0xff]
        %v1759 = vld [vmem:[#allocation2 + $0x38] sm:$0xff]
        %v1760 = vld [vmem:[#allocation2 + $0x40] sm:$0xff]
        %v1761 = vld [vmem:[#allocation2 + $0x48] sm:$0xff]
        %v1762 = vld [vmem:[#allocation2 + $0x50] sm:$0xff]
        %v1763 = vld [vmem:[#allocation2 + $0x58] sm:$0xff]
        %v1764 = vld [vmem:[#allocation2 + $0x60] sm:$0xff]
        %v1765 = vld [vmem:[#allocation2 + $0x68] sm:$0xff]
        %v1766 = vld [vmem:[#allocation2 + $0x70] sm:$0xff]
        %v1767 = vld [vmem:[#allocation2 + $0x78] sm:$0xff]
        %v1768 = vld [vmem:[#allocation2 + $0x80] sm:$0xff]
        %v1769 = vld [vmem:[#allocation2 + $0x88] sm:$0xff]
        %v1770 = vld [vmem:[#allocation2 + $0x90] sm:$0xff]
        %v1771 = vld [vmem:[#allocation2 + $0x98] sm:$0xff]
        %v1772 = vld [vmem:[#allocation2 + $0xa0] sm:$0xff]
        %v1773 = vld [vmem:[#allocation2 + $0xa8] sm:$0xff]
        %v1774 = vld [vmem:[#allocation2 + $0xb0] sm:$0xff]
        %v1775 = vld [vmem:[#allocation2 + $0xb8] sm:$0xff]
        %v1776 = vld [vmem:[#allocation2 + $0xc0] sm:$0xff]
        %v1777 = vld [vmem:[#allocation2 + $0xc8] sm:$0xff]
        %v1778 = vld [vmem:[#allocation2 + $0xd0] sm:$0xff]
        %v1779 = vld [vmem:[#allocation2 + $0xd8] sm:$0xff]
        %v1780 = vld [vmem:[#allocation2 + $0xe0] sm:$0xff]
        %v1781 = vld [vmem:[#allocation2 + $0xe8] sm:$0xff]
        %v1782 = vld [vmem:[#allocation2 + $0xf0] sm:$0xff]
        %v1783 = vld [vmem:[#allocation2 + $0xf8] sm:$0xff]
        %v1784 = vld [vmem:[#allocation2 + $0x100] sm:$0xff]
        %v1785 = vld [vmem:[#allocation2 + $0x108] sm:$0xff]
        %v1786 = vld [vmem:[#allocation2 + $0x110] sm:$0xff]
        %v1787 = vld [vmem:[#allocation2 + $0x118] sm:$0xff]
        %v1788 = vld [vmem:[%s9] sm:$0xff]
        %v1789 = vld [vmem:[%s9 + $0x8] sm:$0xff]
        %1791 = vset.pattern.permute.xlu0 0
        %1792 = vperm.xlu0 %1791, %v1788
        %v1793 = vpop.permute.xlu0 %1792
        %1796 = vset.pattern.permute.xlu0 0
        %1797 = vperm.xlu0 %1796, %v1789
        %v1798 = vpop.permute.xlu0 %1797
        %v1804 = vunpack.c.l.b16 %v1748
        %v1805 = vunpack.c.h.b16 %v1748
        %v1806 = vunpack.c.l.b16 %v1749
        %v1807 = vunpack.c.l.b16 %v1750
        %v1808 = vunpack.c.h.b16 %v1750
        %v1809 = vunpack.c.l.b16 %v1751
        %v1810 = vpack.c.b16 %v1807, %v1804
        %v1811 = vpack.c.b16 %v1808, %v1805
        %v1812 = vpack.c.b16 %v1809, %v1806
        %v1851 = vunpack.c.l.b16 %v1752
        %v1852 = vunpack.c.h.b16 %v1752
        %v1853 = vunpack.c.l.b16 %v1753
        %v1854 = vunpack.c.h.b16 %v1753
        %v1855 = vunpack.c.l.b16 %v1754
        %v1856 = vunpack.c.h.b16 %v1754
        %v1857 = vunpack.c.l.b16 %v1755
        %v1858 = vunpack.c.h.b16 %v1755
        %v1859 = vunpack.c.l.b16 %v1756
        %v1860 = vunpack.c.h.b16 %v1756
        %v1861 = vunpack.c.l.b16 %v1757
        %v1862 = vunpack.c.h.b16 %v1757
        %v1863 = vunpack.c.l.b16 %v1758
        %v1864 = vunpack.c.h.b16 %v1758
        %v1865 = vunpack.c.l.b16 %v1759
        %v1866 = vunpack.c.h.b16 %v1759
        %v1867 = vunpack.c.l.b16 %v1760
        %v1868 = vunpack.c.h.b16 %v1760
        %v1869 = vunpack.c.l.b16 %v1761
        %v1870 = vunpack.c.h.b16 %v1761
        %v1871 = vunpack.c.l.b16 %v1762
        %v1872 = vunpack.c.h.b16 %v1762
        %v1873 = vunpack.c.l.b16 %v1763
        %v1874 = vunpack.c.h.b16 %v1763
        %v1875 = vunpack.c.l.b16 %v1764
        %v1876 = vunpack.c.h.b16 %v1764
        %v1877 = vunpack.c.l.b16 %v1765
        %v1878 = vunpack.c.h.b16 %v1765
        %v1879 = vunpack.c.l.b16 %v1766
        %v1880 = vunpack.c.h.b16 %v1766
        %v1881 = vunpack.c.l.b16 %v1767
        %v1882 = vunpack.c.h.b16 %v1767
        %v1883 = vunpack.c.l.b16 %v1768
        %v1884 = vunpack.c.h.b16 %v1768
        %v1885 = vunpack.c.l.b16 %v1769
        %v1886 = vunpack.c.h.b16 %v1769
        %v1887 = vunpack.c.l.b16 %v1770
        %v1888 = vunpack.c.h.b16 %v1770
        %v1889 = vunpack.c.l.b16 %v1771
        %v1890 = vunpack.c.h.b16 %v1771
        %v1891 = vunpack.c.l.b16 %v1772
        %v1892 = vunpack.c.h.b16 %v1772
        %v1893 = vunpack.c.l.b16 %v1773
        %v1894 = vunpack.c.h.b16 %v1773
        %v1895 = vunpack.c.l.b16 %v1774
        %v1896 = vunpack.c.h.b16 %v1774
        %v1897 = vunpack.c.l.b16 %v1775
        %v1898 = vunpack.c.h.b16 %v1775
        %v1899 = vunpack.c.l.b16 %v1776
        %v1900 = vunpack.c.h.b16 %v1776
        %v1901 = vunpack.c.l.b16 %v1777
        %v1902 = vunpack.c.h.b16 %v1777
        %v1903 = vunpack.c.l.b16 %v1778
        %v1904 = vunpack.c.h.b16 %v1778
        %v1905 = vunpack.c.l.b16 %v1779
        %v1906 = vunpack.c.h.b16 %v1779
        %v1907 = vunpack.c.l.b16 %v1780
        %v1908 = vunpack.c.h.b16 %v1780
        %v1909 = vunpack.c.l.b16 %v1781
        %v1910 = vunpack.c.h.b16 %v1781
        %v1911 = vunpack.c.l.b16 %v1782
        %v1912 = vunpack.c.h.b16 %v1782
        %v1913 = vunpack.c.l.b16 %v1783
        %v1914 = vunpack.c.h.b16 %v1783
        %v1915 = vunpack.c.l.b16 %v1784
        %v1916 = vunpack.c.h.b16 %v1784
        %v1917 = vunpack.c.l.b16 %v1785
        %v1918 = vunpack.c.h.b16 %v1785
        %v1919 = vunpack.c.l.b16 %v1786
        %v1920 = vunpack.c.h.b16 %v1786
        %v1921 = vunpack.c.l.b16 %v1787
        %v1922 = vunpack.c.h.b16 %v1787
        %v1923 = vpack.c.b16 %v1853, %v1851
        %v1924 = vpack.c.b16 %v1854, %v1852
        %v1925 = vpack.c.b16 %v1857, %v1855
        %v1926 = vpack.c.b16 %v1858, %v1856
        %v1927 = vpack.c.b16 %v1861, %v1859
        %v1928 = vpack.c.b16 %v1862, %v1860
        %v1929 = vpack.c.b16 %v1865, %v1863
        %v1930 = vpack.c.b16 %v1866, %v1864
        %v1931 = vpack.c.b16 %v1869, %v1867
        %v1932 = vpack.c.b16 %v1870, %v1868
        %v1933 = vpack.c.b16 %v1873, %v1871
        %v1934 = vpack.c.b16 %v1874, %v1872
        %v1935 = vpack.c.b16 %v1877, %v1875
        %v1936 = vpack.c.b16 %v1878, %v1876
        %v1937 = vpack.c.b16 %v1881, %v1879
        %v1938 = vpack.c.b16 %v1882, %v1880
        %v1939 = vpack.c.b16 %v1885, %v1883
        %v1940 = vpack.c.b16 %v1886, %v1884
        %v1941 = vpack.c.b16 %v1889, %v1887
        %v1942 = vpack.c.b16 %v1890, %v1888
        %v1943 = vpack.c.b16 %v1893, %v1891
        %v1944 = vpack.c.b16 %v1894, %v1892
        %v1945 = vpack.c.b16 %v1897, %v1895
        %v1946 = vpack.c.b16 %v1898, %v1896
        %v1947 = vpack.c.b16 %v1901, %v1899
        %v1948 = vpack.c.b16 %v1902, %v1900
        %v1949 = vpack.c.b16 %v1905, %v1903
        %v1950 = vpack.c.b16 %v1906, %v1904
        %v1951 = vpack.c.b16 %v1909, %v1907
        %v1952 = vpack.c.b16 %v1910, %v1908
        %v1953 = vpack.c.b16 %v1913, %v1911
        %v1954 = vpack.c.b16 %v1914, %v1912
        %v1955 = vpack.c.b16 %v1917, %v1915
        %v1956 = vpack.c.b16 %v1918, %v1916
        %v1957 = vpack.c.b16 %v1921, %v1919
        %v1958 = vpack.c.b16 %v1922, %v1920
        %vm1995 = vcmask 261120
        %v1997 = vsel %vm1995, %v1812, 0
        %1999 = vmatpush.bf16.msra.mxu0 %v1937
        %2000 = vmatpush.bf16.msra.mxu0 %v1935
        %2001 = vmatpush.bf16.msra.mxu0 %v1933
        %2002 = vmatpush.bf16.msra.mxu0 %v1931
        %2003 = vmatpush.bf16.msra.mxu0 %v1929
        %2004 = vmatpush.bf16.msra.mxu0 %v1927
        %2005 = vmatpush.bf16.msra.mxu0 %v1925
        %2006 = vmatpush.bf16.msra.mxu0 %v1923
        %2007 = vmatmul.bf16.gmra.mxu0 %v1810
        %v2008 = vpop.f32.mrf.mxu0
        %v2009 = vadd.f32 %v1793, %v2008
        %v2010 = vpop.f32.mrf.mxu0
        %v2011 = vadd.f32 %v1798, %v2010
        %2012 = vdwg.mxu0
        %2013 = vmatpush.bf16.msra.mxu0 %v1953
        %2014 = vmatpush.bf16.msra.mxu0 %v1951
        %2015 = vmatpush.bf16.msra.mxu0 %v1949
        %2016 = vmatpush.bf16.msra.mxu0 %v1947
        %2017 = vmatpush.bf16.msra.mxu0 %v1945
        %2018 = vmatpush.bf16.msra.mxu0 %v1943
        %2019 = vmatpush.bf16.msra.mxu0 %v1941
        %2020 = vmatpush.bf16.msra.mxu0 %v1939
        %2021 = vmatmul.bf16.gmra.mxu0 %v1811
        %v2022 = vpop.f32.mrf.mxu0
        %v2023 = vadd.f32 %v2009, %v2022
        %v2024 = vpop.f32.mrf.mxu0
        %v2025 = vadd.f32 %v2011, %v2024
        %2026 = vdwg.mxu0
        %2027 = vmatpush.bf16.msra.mxu0 0
        %2028 = vmatpush.bf16.msra.mxu0 0
        %2029 = vmatpush.bf16.msra.mxu0 0
        %2030 = vmatpush.bf16.msra.mxu0 0
        %2031 = vmatpush.bf16.msra.mxu0 0
        %2032 = vmatpush.bf16.msra.mxu0 0
        %2033 = vmatpush.bf16.msra.mxu0 %v1957
        %2034 = vmatpush.bf16.msra.mxu0 %v1955
        %2035 = vmatmul.bf16.gmra.mxu0 %v1997
        %v2036 = vpop.f32.mrf.mxu0
        %v2037 = vadd.f32 %v2023, %v2036
        %v2038 = vpop.f32.mrf.mxu0
        %v2039 = vadd.f32 %v2025, %v2038
        %2040 = vdwg.mxu0
        %2041 = vmatpush.bf16.msra.mxu0 %v1938
        %2042 = vmatpush.bf16.msra.mxu0 %v1936
        %2043 = vmatpush.bf16.msra.mxu0 %v1934
        %2044 = vmatpush.bf16.msra.mxu0 %v1932
        %2045 = vmatpush.bf16.msra.mxu0 %v1930
        %2046 = vmatpush.bf16.msra.mxu0 %v1928
        %2047 = vmatpush.bf16.msra.mxu0 %v1926
        %2048 = vmatpush.bf16.msra.mxu0 %v1924
        %2049 = vmatmul.bf16.gmra.mxu0 %v1810
        %v2050 = vpop.f32.mrf.mxu0
        %v2051 = vadd.f32 %v1793, %v2050
        %v2052 = vpop.f32.mrf.mxu0
        %v2053 = vadd.f32 %v1798, %v2052
        %2054 = vdwg.mxu0
        %2055 = vmatpush.bf16.msra.mxu0 %v1954
        %2056 = vmatpush.bf16.msra.mxu0 %v1952
        %2057 = vmatpush.bf16.msra.mxu0 %v1950
        %2058 = vmatpush.bf16.msra.mxu0 %v1948
        %2059 = vmatpush.bf16.msra.mxu0 %v1946
        %2060 = vmatpush.bf16.msra.mxu0 %v1944
        %2061 = vmatpush.bf16.msra.mxu0 %v1942
        %2062 = vmatpush.bf16.msra.mxu0 %v1940
        %2063 = vmatmul.bf16.gmra.mxu0 %v1811
        %v2064 = vpop.f32.mrf.mxu0
        %v2065 = vadd.f32 %v2051, %v2064
        %v2066 = vpop.f32.mrf.mxu0
        %v2067 = vadd.f32 %v2053, %v2066
        %2068 = vdwg.mxu0
        %2069 = vmatpush.bf16.msra.mxu0 0
        %2070 = vmatpush.bf16.msra.mxu0 0
        %2071 = vmatpush.bf16.msra.mxu0 0
        %2072 = vmatpush.bf16.msra.mxu0 0
        %2073 = vmatpush.bf16.msra.mxu0 0
        %2074 = vmatpush.bf16.msra.mxu0 0
        %2075 = vmatpush.bf16.msra.mxu0 %v1958
        %2076 = vmatpush.bf16.msra.mxu0 %v1956
        %2077 = vmatmul.bf16.gmra.mxu0 %v1997
        %v2078 = vpop.f32.mrf.mxu0
        %v2079 = vadd.f32 %v2065, %v2078
        %v2080 = vpop.f32.mrf.mxu0
        %v2081 = vadd.f32 %v2067, %v2080
        %2082 = vdwg.mxu0
        %vm2083 = vcmp.ge.f32.partialorder %v2037, 0.0
        %vm2084 = vcmp.ge.f32.partialorder %v2079, 0.0
        %vm2085 = vcmp.ge.f32.partialorder %v2039, 0.0
        %vm2086 = vcmp.ge.f32.partialorder %v2081, 0.0
        %v2087 = vmul.f32 %v2037, 0.2
        %v2088 = vmul.f32 %v2079, 0.2
        %v2089 = vmul.f32 %v2039, 0.2
        %v2090 = vmul.f32 %v2081, 0.2
        %v2091 = vsel %vm2083, %v2037, %v2087
        %v2092 = vsel %vm2084, %v2079, %v2088
        %v2093 = vsel %vm2085, %v2039, %v2089
        %v2094 = vsel %vm2086, %v2081, %v2090
        %v2095 = vld [vmem:[%s10] sm:$0xf]
        %v2096 = vld [vmem:[%s11] sm:$0xf]
        %v2097 = vld [vmem:[%s12] sm:$0xff]
        %v2098 = vld [vmem:[%s12 + $0x8] sm:$0xff]
        %v2099 = vld [vmem:[%s13] sm:$0xff]
        %v2100 = vld [vmem:[%s13 + $0x8] sm:$0xff]
        %v2101 = vadd.f32 %v2091, %v2092
        %2102 = vadd.xlane.f32.xlu0 %v2101
        %v2103 = vpop.xlane.xlu0 %2102
        %v2104 = vadd.f32 %v2093, %v2094
        %2105 = vadd.xlane.f32.xlu0 %v2104
        %v2106 = vpop.xlane.xlu0 %2105
        %v2107 = vrcp.pop 256.0
        %v2108 = vmul.f32 256.0, %v2107
        %v2109 = vsub.f32 1.0, %v2108
        %v2110 = vmul.f32 %v2107, %v2109
        %v2111 = vadd.f32 %v2107, %v2110
        %vm2112 = vweird.f32 %v2107
        %v2113 = vsel %vm2112, %v2107, %v2111
        %v2114 = vmul.f32 %v2103, %v2113
        %v2115 = vmul.f32 %v2106, %v2113
        %v2117 = vsel %vm1279, %v2095, 0
        %2119 = vmatpush.msra.mxu0 0.0
        %2120 = vmatpush.msra.mxu0 0.0
        %2121 = vmatpush.msra.mxu0 0.0
        %2122 = vmatpush.msra.mxu0 0.0
        %2123 = vmatpush.msra.mxu0 0.0
        %2124 = vmatpush.msra.mxu0 0.0
        %2125 = vmatpush.msra.mxu0 0.0
        %2126 = vmatpush.msra.mxu0 0.0
        %2127 = vmatpush.msra.mxu0 0.0
        %2128 = vmatpush.msra.mxu0 0.0
        %2129 = vmatpush.msra.mxu0 0.0
        %2130 = vmatpush.msra.mxu0 0.0
        %2131 = vmatpush.msra.mxu0 0.0
        %2132 = vmatpush.msra.mxu0 0.0
        %2133 = vmatpush.msra.mxu0 %v2115
        %2134 = vmatpush.msra.mxu0 %v2114
        %2135 = vmatmul.f32.gmra.mxu0 %v2117
        %v2136 = vpop.f32.mrf.mxu0
        %v2137 = vadd.f32 %v2096, %v2136
        %2138 = vdwg.mxu0
        %v2139 = vmax.f32 %v2137, 0.0
        %vm2140 = vcmask 31744
        %v2142 = vsel %vm2140, %v2097, 0
        %v2145 = vsel %vm2140, %v2098, 0
        %v2148 = vsel %vm899, %v2139, 0
        %2150 = vmatpush.msra.mxu0 0.0
        %2151 = vmatpush.msra.mxu0 0.0
        %2152 = vmatpush.msra.mxu0 0.0
        %2153 = vmatpush.msra.mxu0 0.0
        %2154 = vmatpush.msra.mxu0 0.0
        %2155 = vmatpush.msra.mxu0 0.0
        %2156 = vmatpush.msra.mxu0 0.0
        %2157 = vmatpush.msra.mxu0 0.0
        %2158 = vmatpush.msra.mxu0 0.0
        %2159 = vmatpush.msra.mxu0 0.0
        %2160 = vmatpush.msra.mxu0 0.0
        %2161 = vmatpush.msra.mxu0 0.0
        %2162 = vmatpush.msra.mxu0 0.0
        %2163 = vmatpush.msra.mxu0 0.0
        %2164 = vmatpush.msra.mxu0 0.0
        %2165 = vmatpush.msra.mxu0 %v2148
        %2166 = vmatmul.f32.gmra.mxu0 %v2142
        %v2167 = vpop.f32.mrf.mxu0
        %v2168 = vadd.f32 %v2099, %v2167
        %2169 = vmatmul.f32.gmra.mxu0 %v2145
        %v2170 = vpop.f32.mrf.mxu0
        %v2171 = vadd.f32 %v2100, %v2170
        %2172 = vdwg.mxu0
        %v2173 = vsub.f32 0.0, %v2168
        %v2174 = vsub.f32 0.0, %v2171
        %v2175 = vmul.f32 %v2173, 1.442695
        %v2176 = vpow.pop %v2175
        %v2177 = vmul.f32 %v2174, 1.442695
        %v2178 = vpow.pop %v2177
        %v2179 = vadd.f32 %v2176, 1.0
        %v2180 = vadd.f32 %v2178, 1.0
        %v2181 = vrcp.pop %v2179
        %v2182 = vmul.f32 %v2179, %v2181
        %v2183 = vsub.f32 1.0, %v2182
        %v2184 = vmul.f32 %v2181, %v2183
        %v2185 = vadd.f32 %v2181, %v2184
        %vm2186 = vweird.f32 %v2179
        %vm2187 = vweird.f32 %v2181
        %vm2188 = vmor %vm2186, %vm2187
        %v2189 = vsel %vm2188, %v2181, %v2185
        %v2190 = vand.u32 2147483647, %v2179
        %vm2191 = vcmp.eq.f32.partialorder %v2190, 8.507059e+37
        %v2192 = vand.u32 %v2179, 2147483648
        %v2193 = vor.u32 1.1754944e-38, %v2192
        %v2194 = vsel %vm2191, %v2193, %v2189
        %v2195 = vmul.f32 1.0, %v2194
        %v2196 = vrcp.pop %v2180
        %v2197 = vmul.f32 %v2180, %v2196
        %v2198 = vsub.f32 1.0, %v2197
        %v2199 = vmul.f32 %v2196, %v2198
        %v2200 = vadd.f32 %v2196, %v2199
        %vm2201 = vweird.f32 %v2180
        %vm2202 = vweird.f32 %v2196
        %vm2203 = vmor %vm2201, %vm2202
        %v2204 = vsel %vm2203, %v2196, %v2200
        %v2205 = vand.u32 2147483647, %v2180
        %vm2206 = vcmp.eq.f32.partialorder %v2205, 8.507059e+37
        %v2207 = vand.u32 %v2180, 2147483648
        %v2208 = vor.u32 1.1754944e-38, %v2207
        %v2209 = vsel %vm2206, %v2208, %v2204
        %v2210 = vmul.f32 1.0, %v2209
        %2212 = vset.pattern.permute.xlu0 0
        %2213 = vperm.xlu0 %2212, %v2195
        %v2214 = vpop.permute.xlu0 %2213
        %2217 = vset.pattern.permute.xlu0 0
        %2218 = vperm.xlu0 %2217, %v2210
        %v2219 = vpop.permute.xlu0 %2218
        %v2221 = vmul.f32 %v2091, %v2214
        %v2222 = vmul.f32 %v2092, %v2214
        %v2223 = vmul.f32 %v2093, %v2219
        %v2224 = vmul.f32 %v2094, %v2219
        %v2225 = vadd.f32 %v990, %v2221
        %v2226 = vadd.f32 %v991, %v2222
        %v2227 = vadd.f32 %v992, %v2223
        %v2228 = vadd.f32 %v993, %v2224
        %2229 = vst [vmem:[#allocation3] sm:$0xff] %v2225
        %2230 = vst [vmem:[#allocation3 + $0x8] sm:$0xff] %v2226
        %2231 = vst [vmem:[#allocation3 + $0x10] sm:$0xff] %v2227
        %2232 = vst [vmem:[#allocation3 + $0x18] sm:$0xff] %v2228
      $region113: #{rrdbnet_ca_forward.1} parent=107 // loop_footer
        %s989 = sadd.s32 1, %s985
      $region114: #{rrdbnet_ca_forward.1} parent=107 // loop_footer_branch
        %984 = sbr.rel target = $region110
      $region115: #{rrdbnet_ca_forward.1} parent=107 // loop_exit
        _
      %v2233 = vld [vmem:[#allocation3] sm:$0xff]
      %v2234 = vld [vmem:[#allocation3 + $0x8] sm:$0xff]
      %v2235 = vld [vmem:[#allocation3 + $0x10] sm:$0xff]
      %v2236 = vld [vmem:[#allocation3 + $0x18] sm:$0xff]
      %v2237 = vld [vmem:[%s14] sm:$0xf]
      %v2238 = vld [vmem:[%s15] sm:$0xf]
      %v2239 = vld [vmem:[%s16] sm:$0xff]
      %v2240 = vld [vmem:[%s16 + $0x8] sm:$0xff]
      %v2241 = vld [vmem:[%s17] sm:$0xff]
      %v2242 = vld [vmem:[%s17 + $0x8] sm:$0xff]
      %v2243 = vadd.f32 %v2233, %v2234
      %2244 = vadd.xlane.f32.xlu0 %v2243
      %v2245 = vpop.xlane.xlu0 %2244
      %v2246 = vadd.f32 %v2235, %v2236
      %2247 = vadd.xlane.f32.xlu0 %v2246
      %v2248 = vpop.xlane.xlu0 %2247
      %v2249 = vrcp.pop 256.0
      %v2250 = vmul.f32 256.0, %v2249
      %v2251 = vsub.f32 1.0, %v2250
      %v2252 = vmul.f32 %v2249, %v2251
      %v2253 = vadd.f32 %v2249, %v2252
      %vm2254 = vweird.f32 %v2249
      %v2255 = vsel %vm2254, %v2249, %v2253
      %v2256 = vmul.f32 %v2245, %v2255
      %v2257 = vmul.f32 %v2248, %v2255
      %vm2258 = vcmask 130048
      %v2260 = vsel %vm2258, %v2237, 0
      %2262 = vmatpush.msra.mxu0 0.0
      %2263 = vmatpush.msra.mxu0 0.0
      %2264 = vmatpush.msra.mxu0 0.0
      %2265 = vmatpush.msra.mxu0 0.0
      %2266 = vmatpush.msra.mxu0 0.0
      %2267 = vmatpush.msra.mxu0 0.0
      %2268 = vmatpush.msra.mxu0 0.0
      %2269 = vmatpush.msra.mxu0 0.0
      %2270 = vmatpush.msra.mxu0 0.0
      %2271 = vmatpush.msra.mxu0 0.0
      %2272 = vmatpush.msra.mxu0 0.0
      %2273 = vmatpush.msra.mxu0 0.0
      %2274 = vmatpush.msra.mxu0 0.0
      %2275 = vmatpush.msra.mxu0 0.0
      %2276 = vmatpush.msra.mxu0 %v2257
      %2277 = vmatpush.msra.mxu0 %v2256
      %2278 = vmatmul.f32.gmra.mxu0 %v2260
      %v2279 = vpop.f32.mrf.mxu0
      %v2280 = vadd.f32 %v2238, %v2279
      %2281 = vdwg.mxu0
      %v2282 = vmax.f32 %v2280, 0.0
      %vm2283 = vcmask 31744
      %v2285 = vsel %vm2283, %v2239, 0
      %v2288 = vsel %vm2283, %v2240, 0
      %v2291 = vsel %vm899, %v2282, 0
      %2293 = vmatpush.msra.mxu0 0.0
      %2294 = vmatpush.msra.mxu0 0.0
      %2295 = vmatpush.msra.mxu0 0.0
      %2296 = vmatpush.msra.mxu0 0.0
      %2297 = vmatpush.msra.mxu0 0.0
      %2298 = vmatpush.msra.mxu0 0.0
      %2299 = vmatpush.msra.mxu0 0.0
      %2300 = vmatpush.msra.mxu0 0.0
      %2301 = vmatpush.msra.mxu0 0.0
      %2302 = vmatpush.msra.mxu0 0.0
      %2303 = vmatpush.msra.mxu0 0.0
      %2304 = vmatpush.msra.mxu0 0.0
      %2305 = vmatpush.msra.mxu0 0.0
      %2306 = vmatpush.msra.mxu0 0.0
      %2307 = vmatpush.msra.mxu0 0.0
      %2308 = vmatpush.msra.mxu0 %v2291
      %2309 = vmatmul.f32.gmra.mxu0 %v2285
      %v2310 = vpop.f32.mrf.mxu0
      %v2311 = vadd.f32 %v2241, %v2310
      %2312 = vmatmul.f32.gmra.mxu0 %v2288
      %v2313 = vpop.f32.mrf.mxu0
      %v2314 = vadd.f32 %v2242, %v2313
      %2315 = vdwg.mxu0
      %v2316 = vsub.f32 0.0, %v2311
      %v2317 = vsub.f32 0.0, %v2314
      %v2318 = vmul.f32 %v2316, 1.442695
      %v2319 = vpow.pop %v2318
      %v2320 = vmul.f32 %v2317, 1.442695
      %v2321 = vpow.pop %v2320
      %v2322 = vadd.f32 %v2319, 1.0
      %v2323 = vadd.f32 %v2321, 1.0
      %v2324 = vrcp.pop %v2322
      %v2325 = vmul.f32 %v2322, %v2324
      %v2326 = vsub.f32 1.0, %v2325
      %v2327 = vmul.f32 %v2324, %v2326
      %v2328 = vadd.f32 %v2324, %v2327
      %vm2329 = vweird.f32 %v2322
      %vm2330 = vweird.f32 %v2324
      %vm2331 = vmor %vm2329, %vm2330
      %v2332 = vsel %vm2331, %v2324, %v2328
      %v2333 = vand.u32 2147483647, %v2322
      %vm2334 = vcmp.eq.f32.partialorder %v2333, 8.507059e+37
      %v2335 = vand.u32 %v2322, 2147483648
      %v2336 = vor.u32 1.1754944e-38, %v2335
      %v2337 = vsel %vm2334, %v2336, %v2332
      %v2338 = vmul.f32 1.0, %v2337
      %v2339 = vrcp.pop %v2323
      %v2340 = vmul.f32 %v2323, %v2339
      %v2341 = vsub.f32 1.0, %v2340
      %v2342 = vmul.f32 %v2339, %v2341
      %v2343 = vadd.f32 %v2339, %v2342
      %vm2344 = vweird.f32 %v2323
      %vm2345 = vweird.f32 %v2339
      %vm2346 = vmor %vm2344, %vm2345
      %v2347 = vsel %vm2346, %v2339, %v2343
      %v2348 = vand.u32 2147483647, %v2323
      %vm2349 = vcmp.eq.f32.partialorder %v2348, 8.507059e+37
      %v2350 = vand.u32 %v2323, 2147483648
      %v2351 = vor.u32 1.1754944e-38, %v2350
      %v2352 = vsel %vm2349, %v2351, %v2347
      %v2353 = vmul.f32 1.0, %v2352
      %2355 = vset.pattern.permute.xlu0 0
      %2356 = vperm.xlu0 %2355, %v2338
      %v2357 = vpop.permute.xlu0 %2356
      %2360 = vset.pattern.permute.xlu0 0
      %2361 = vperm.xlu0 %2360, %v2353
      %v2362 = vpop.permute.xlu0 %2361
      %v2364 = vmul.f32 %v2233, %v2357
      %v2365 = vmul.f32 %v2234, %v2357
      %v2366 = vmul.f32 %v2235, %v2362
      %v2367 = vmul.f32 %v2236, %v2362
      %v2368 = vadd.f32 %v962, %v2364
      %v2369 = vadd.f32 %v976, %v2365
      %v2370 = vadd.f32 %v964, %v2366
      %v2371 = vadd.f32 %v978, %v2367
      %v2372 = vld [vmem:[%s18] sm:$0xff]
      %v2373 = vld [vmem:[%s18 + $0x8] sm:$0xff]
      %v2374 = vld [vmem:[%s19] sm:$0xff]
      %v2375 = vld [vmem:[%s19 + $0x8] sm:$0xff]
      %2376 = vrot.lane.b32.xlu0 %v2368, 17
      %v2377 = vpop.permute.xlu0 %2376
      %2378 = vrot.lane.b32.xlu0 %v2370, 17
      %v2379 = vpop.permute.xlu0 %2378
      %2380 = vrot.lane.b32.xlu0 %v2369, 17
      %v2381 = vpop.permute.xlu0 %2380
      %2382 = vrot.lane.b32.xlu0 %v2371, 17
      %v2383 = vpop.permute.xlu0 %2382
      %v2384 = vsel %vm706, %v2377, %v2381
      %v2385 = vsel %vm706, %v2379, %v2383
      %v2386 = vsel %vm706, %v2381, %v2377
      %v2387 = vsel %vm706, %v2383, %v2379
      %v2388 = vmul.f32 %v2386, %v709
      %v2389 = vmul.f32 %v2384, %v710
      %v2390 = vmul.f32 %v2387, %v709
      %v2391 = vmul.f32 %v2385, %v710
      %v2392 = vpack.c.bf16 %v2389, %v2388
      %v2393 = vpack.c.bf16 %v2391, %v2390
      %2394 = vrot.lane.b32.xlu0 %v2368, 16
      %v2395 = vpop.permute.xlu0 %2394
      %2396 = vrot.lane.b32.xlu0 %v2370, 16
      %v2397 = vpop.permute.xlu0 %2396
      %2398 = vrot.lane.b32.xlu0 %v2369, 16
      %v2399 = vpop.permute.xlu0 %2398
      %2400 = vrot.lane.b32.xlu0 %v2371, 16
      %v2401 = vpop.permute.xlu0 %2400
      %v2402 = vsel %vm723, %v2395, %v2399
      %v2403 = vsel %vm723, %v2397, %v2401
      %v2404 = vsel %vm723, %v2399, %v2395
      %v2405 = vsel %vm723, %v2401, %v2397
      %v2406 = vmul.f32 %v2404, %v726
      %v2407 = vmul.f32 %v2402, %v727
      %v2408 = vmul.f32 %v2405, %v726
      %v2409 = vmul.f32 %v2403, %v727
      %v2410 = vpack.c.bf16 %v2407, %v2406
      %v2411 = vpack.c.bf16 %v2409, %v2408
      %2412 = vrot.lane.b32.xlu0 %v2368, 15
      %v2413 = vpop.permute.xlu0 %2412
      %2414 = vrot.lane.b32.xlu0 %v2370, 15
      %v2415 = vpop.permute.xlu0 %2414
      %2416 = vrot.lane.b32.xlu0 %v2369, 15
      %v2417 = vpop.permute.xlu0 %2416
      %2418 = vrot.lane.b32.xlu0 %v2371, 15
      %v2419 = vpop.permute.xlu0 %2418
      %v2420 = vsel %vm740, %v2413, %v2417
      %v2421 = vsel %vm740, %v2415, %v2419
      %v2422 = vsel %vm740, %v2417, %v2413
      %v2423 = vsel %vm740, %v2419, %v2415
      %v2424 = vmul.f32 %v2422, %v743
      %v2425 = vmul.f32 %v2420, %v744
      %v2426 = vmul.f32 %v2423, %v743
      %v2427 = vmul.f32 %v2421, %v744
      %v2428 = vpack.c.bf16 %v2425, %v2424
      %v2429 = vpack.c.bf16 %v2427, %v2426
      %2430 = vrot.lane.b32.xlu0 %v2368, 1
      %v2431 = vpop.permute.xlu0 %2430
      %2432 = vrot.lane.b32.xlu0 %v2370, 1
      %v2433 = vpop.permute.xlu0 %2432
      %2434 = vrot.lane.b32.xlu0 %v2369, 1
      %v2435 = vpop.permute.xlu0 %2434
      %2436 = vrot.lane.b32.xlu0 %v2371, 1
      %v2437 = vpop.permute.xlu0 %2436
      %v2438 = vsel %vm757, %v2431, %v2435
      %v2439 = vsel %vm757, %v2433, %v2437
      %v2440 = vsel %vm757, %v2435, %v2431
      %v2441 = vsel %vm757, %v2437, %v2433
      %v2442 = vmul.f32 %v2440, %v760
      %v2443 = vmul.f32 %v2438, %v761
      %v2444 = vmul.f32 %v2441, %v760
      %v2445 = vmul.f32 %v2439, %v761
      %v2446 = vpack.c.bf16 %v2443, %v2442
      %v2447 = vpack.c.bf16 %v2445, %v2444
      %v2448 = vpack.c.bf16 %v2369, %v2368
      %v2449 = vpack.c.bf16 %v2371, %v2370
      %2450 = vrot.lane.b32.xlu0 %v2368, 127
      %v2451 = vpop.permute.xlu0 %2450
      %2452 = vrot.lane.b32.xlu0 %v2370, 127
      %v2453 = vpop.permute.xlu0 %2452
      %2454 = vrot.lane.b32.xlu0 %v2369, 127
      %v2455 = vpop.permute.xlu0 %2454
      %2456 = vrot.lane.b32.xlu0 %v2371, 127
      %v2457 = vpop.permute.xlu0 %2456
      %v2458 = vsel %vm780, %v2451, %v2455
      %v2459 = vsel %vm780, %v2453, %v2457
      %v2460 = vsel %vm780, %v2455, %v2451
      %v2461 = vsel %vm780, %v2457, %v2453
      %v2462 = vmul.f32 %v2458, %v783
      %v2463 = vmul.f32 %v2460, %v784
      %v2464 = vmul.f32 %v2459, %v783
      %v2465 = vmul.f32 %v2461, %v784
      %v2466 = vpack.c.bf16 %v2463, %v2462
      %v2467 = vpack.c.bf16 %v2465, %v2464
      %2468 = vrot.lane.b32.xlu0 %v2368, 113
      %v2469 = vpop.permute.xlu0 %2468
      %2470 = vrot.lane.b32.xlu0 %v2370, 113
      %v2471 = vpop.permute.xlu0 %2470
      %2472 = vrot.lane.b32.xlu0 %v2369, 113
      %v2473 = vpop.permute.xlu0 %2472
      %2474 = vrot.lane.b32.xlu0 %v2371, 113
      %v2475 = vpop.permute.xlu0 %2474
      %v2476 = vsel %vm797, %v2469, %v2473
      %v2477 = vsel %vm797, %v2471, %v2475
      %v2478 = vsel %vm797, %v2473, %v2469
      %v2479 = vsel %vm797, %v2475, %v2471
      %v2480 = vmul.f32 %v2476, %v800
      %v2481 = vmul.f32 %v2478, %v801
      %v2482 = vmul.f32 %v2477, %v800
      %v2483 = vmul.f32 %v2479, %v801
      %v2484 = vpack.c.bf16 %v2481, %v2480
      %v2485 = vpack.c.bf16 %v2483, %v2482
      %2486 = vrot.lane.b32.xlu0 %v2368, 112
      %v2487 = vpop.permute.xlu0 %2486
      %2488 = vrot.lane.b32.xlu0 %v2370, 112
      %v2489 = vpop.permute.xlu0 %2488
      %2490 = vrot.lane.b32.xlu0 %v2369, 112
      %v2491 = vpop.permute.xlu0 %2490
      %2492 = vrot.lane.b32.xlu0 %v2371, 112
      %v2493 = vpop.permute.xlu0 %2492
      %v2494 = vsel %vm814, %v2487, %v2491
      %v2495 = vsel %vm814, %v2489, %v2493
      %v2496 = vsel %vm814, %v2491, %v2487
      %v2497 = vsel %vm814, %v2493, %v2489
      %v2498 = vmul.f32 %v2494, %v817
      %v2499 = vmul.f32 %v2496, %v818
      %v2500 = vmul.f32 %v2495, %v817
      %v2501 = vmul.f32 %v2497, %v818
      %v2502 = vpack.c.bf16 %v2499, %v2498
      %v2503 = vpack.c.bf16 %v2501, %v2500
      %2504 = vrot.lane.b32.xlu0 %v2368, 111
      %v2505 = vpop.permute.xlu0 %2504
      %2506 = vrot.lane.b32.xlu0 %v2370, 111
      %v2507 = vpop.permute.xlu0 %2506
      %2508 = vrot.lane.b32.xlu0 %v2369, 111
      %v2509 = vpop.permute.xlu0 %2508
      %2510 = vrot.lane.b32.xlu0 %v2371, 111
      %v2511 = vpop.permute.xlu0 %2510
      %v2512 = vsel %vm831, %v2505, %v2509
      %v2513 = vsel %vm831, %v2507, %v2511
      %v2514 = vsel %vm831, %v2509, %v2505
      %v2515 = vsel %vm831, %v2511, %v2507
      %v2516 = vmul.f32 %v2512, %v834
      %v2517 = vmul.f32 %v2514, %v835
      %v2518 = vmul.f32 %v2513, %v834
      %v2519 = vmul.f32 %v2515, %v835
      %v2520 = vpack.c.bf16 %v2517, %v2516
      %v2521 = vpack.c.bf16 %v2519, %v2518
      %v2524 = vunpack.c.l.b16 %v2392
      %v2525 = vunpack.c.h.b16 %v2392
      %v2526 = vunpack.c.l.b16 %v2393
      %v2527 = vunpack.c.h.b16 %v2393
      %v2528 = vpack.c.b16 %v2526, %v2524
      %v2529 = vpack.c.b16 %v2527, %v2525
      %v2534 = vunpack.c.l.b16 %v2410
      %v2535 = vunpack.c.h.b16 %v2410
      %v2536 = vunpack.c.l.b16 %v2411
      %v2537 = vunpack.c.h.b16 %v2411
      %v2538 = vpack.c.b16 %v2536, %v2534
      %v2539 = vpack.c.b16 %v2537, %v2535
      %v2544 = vunpack.c.l.b16 %v2428
      %v2545 = vunpack.c.h.b16 %v2428
      %v2546 = vunpack.c.l.b16 %v2429
      %v2547 = vunpack.c.h.b16 %v2429
      %v2548 = vpack.c.b16 %v2546, %v2544
      %v2549 = vpack.c.b16 %v2547, %v2545
      %v2554 = vunpack.c.l.b16 %v2446
      %v2555 = vunpack.c.h.b16 %v2446
      %v2556 = vunpack.c.l.b16 %v2447
      %v2557 = vunpack.c.h.b16 %v2447
      %v2558 = vpack.c.b16 %v2556, %v2554
      %v2559 = vpack.c.b16 %v2557, %v2555
      %v2564 = vunpack.c.l.b16 %v2448
      %v2565 = vunpack.c.h.b16 %v2448
      %v2566 = vunpack.c.l.b16 %v2449
      %v2567 = vunpack.c.h.b16 %v2449
      %v2568 = vpack.c.b16 %v2566, %v2564
      %v2569 = vpack.c.b16 %v2567, %v2565
      %v2574 = vunpack.c.l.b16 %v2466
      %v2575 = vunpack.c.h.b16 %v2466
      %v2576 = vunpack.c.l.b16 %v2467
      %v2577 = vunpack.c.h.b16 %v2467
      %v2578 = vpack.c.b16 %v2576, %v2574
      %v2579 = vpack.c.b16 %v2577, %v2575
      %v2584 = vunpack.c.l.b16 %v2484
      %v2585 = vunpack.c.h.b16 %v2484
      %v2586 = vunpack.c.l.b16 %v2485
      %v2587 = vunpack.c.h.b16 %v2485
      %v2588 = vpack.c.b16 %v2586, %v2584
      %v2589 = vpack.c.b16 %v2587, %v2585
      %v2594 = vunpack.c.l.b16 %v2502
      %v2595 = vunpack.c.h.b16 %v2502
      %v2596 = vunpack.c.l.b16 %v2503
      %v2597 = vunpack.c.h.b16 %v2503
      %v2598 = vpack.c.b16 %v2596, %v2594
      %v2599 = vpack.c.b16 %v2597, %v2595
      %v2604 = vunpack.c.l.b16 %v2520
      %v2605 = vunpack.c.h.b16 %v2520
      %v2606 = vunpack.c.l.b16 %v2521
      %v2607 = vunpack.c.h.b16 %v2521
      %v2608 = vpack.c.b16 %v2606, %v2604
      %v2609 = vpack.c.b16 %v2607, %v2605
      %2613 = vset.pattern.permute.xlu0 0
      %2614 = vperm.xlu0 %2613, %v2374
      %v2615 = vpop.permute.xlu0 %2614
      %2618 = vset.pattern.permute.xlu0 0
      %2619 = vperm.xlu0 %2618, %v2375
      %v2620 = vpop.permute.xlu0 %2619
      %v2624 = vunpack.c.l.b16 %v2372
      %v2625 = vunpack.c.h.b16 %v2372
      %v2626 = vunpack.c.l.b16 %v2373
      %v2627 = vunpack.c.h.b16 %v2373
      %v2628 = vpack.c.b16 %v2626, %v2624
      %v2629 = vpack.c.b16 %v2627, %v2625
      %v2632 = vsel %vm2258, %v2629, 0
      %2634 = vmatpush.bf16.msra.mxu0 %v2598
      %2635 = vmatpush.bf16.msra.mxu0 %v2588
      %2636 = vmatpush.bf16.msra.mxu0 %v2578
      %2637 = vmatpush.bf16.msra.mxu0 %v2568
      %2638 = vmatpush.bf16.msra.mxu0 %v2558
      %2639 = vmatpush.bf16.msra.mxu0 %v2548
      %2640 = vmatpush.bf16.msra.mxu0 %v2538
      %2641 = vmatpush.bf16.msra.mxu0 %v2528
      %2642 = vmatmul.bf16.gmra.mxu0 %v2628
      %v2643 = vpop.f32.mrf.mxu0
      %v2644 = vadd.f32 %v2615, %v2643
      %v2645 = vpop.f32.mrf.mxu0
      %v2646 = vadd.f32 %v2620, %v2645
      %2647 = vdwg.mxu0
      %2648 = vmatpush.bf16.msra.mxu0 0
      %2649 = vmatpush.bf16.msra.mxu0 0
      %2650 = vmatpush.bf16.msra.mxu0 0
      %2651 = vmatpush.bf16.msra.mxu0 0
      %2652 = vmatpush.bf16.msra.mxu0 0
      %2653 = vmatpush.bf16.msra.mxu0 0
      %2654 = vmatpush.bf16.msra.mxu0 0
      %2655 = vmatpush.bf16.msra.mxu0 %v2608
      %2656 = vmatmul.bf16.gmra.mxu0 %v2632
      %v2657 = vpop.f32.mrf.mxu0
      %v2658 = vadd.f32 %v2644, %v2657
      %v2659 = vpop.f32.mrf.mxu0
      %v2660 = vadd.f32 %v2646, %v2659
      %2661 = vdwg.mxu0
      %2662 = vmatpush.bf16.msra.mxu0 %v2599
      %2663 = vmatpush.bf16.msra.mxu0 %v2589
      %2664 = vmatpush.bf16.msra.mxu0 %v2579
      %2665 = vmatpush.bf16.msra.mxu0 %v2569
      %2666 = vmatpush.bf16.msra.mxu0 %v2559
      %2667 = vmatpush.bf16.msra.mxu0 %v2549
      %2668 = vmatpush.bf16.msra.mxu0 %v2539
      %2669 = vmatpush.bf16.msra.mxu0 %v2529
      %2670 = vmatmul.bf16.gmra.mxu0 %v2628
      %v2671 = vpop.f32.mrf.mxu0
      %v2672 = vadd.f32 %v2615, %v2671
      %v2673 = vpop.f32.mrf.mxu0
      %v2674 = vadd.f32 %v2620, %v2673
      %2675 = vdwg.mxu0
      %2676 = vmatpush.bf16.msra.mxu0 0
      %2677 = vmatpush.bf16.msra.mxu0 0
      %2678 = vmatpush.bf16.msra.mxu0 0
      %2679 = vmatpush.bf16.msra.mxu0 0
      %2680 = vmatpush.bf16.msra.mxu0 0
      %2681 = vmatpush.bf16.msra.mxu0 0
      %2682 = vmatpush.bf16.msra.mxu0 0
      %2683 = vmatpush.bf16.msra.mxu0 %v2609
      %2684 = vmatmul.bf16.gmra.mxu0 %v2632
      %v2685 = vpop.f32.mrf.mxu0
      %v2686 = vadd.f32 %v2672, %v2685
      %v2687 = vpop.f32.mrf.mxu0
      %v2688 = vadd.f32 %v2674, %v2687
      %2689 = vdwg.mxu0
      %v2690 = vadd.f32 %v962, %v2658
      %v2691 = vadd.f32 %v976, %v2686
      %v2692 = vadd.f32 %v964, %v2660
      %v2693 = vadd.f32 %v978, %v2688
      %vm2694 = vcmp.ge.f32.partialorder %v2690, 0.0
      %vm2695 = vcmp.ge.f32.partialorder %v2691, 0.0
      %vm2696 = vcmp.ge.f32.partialorder %v2692, 0.0
      %vm2697 = vcmp.ge.f32.partialorder %v2693, 0.0
      %v2698 = vmul.f32 %v2690, 0.2
      %v2699 = vmul.f32 %v2691, 0.2
      %v2700 = vmul.f32 %v2692, 0.2
      %v2701 = vmul.f32 %v2693, 0.2
      %v2702 = vsel %vm2694, %v2690, %v2698
      %v2703 = vsel %vm2695, %v2691, %v2699
      %v2704 = vsel %vm2696, %v2692, %v2700
      %v2705 = vsel %vm2697, %v2693, %v2701
      %v2706 = vld [vmem:[%s20] sm:$0xf]
      %v2707 = vld [vmem:[%s21] sm:$0xf]
      %2708 = vrot.lane.b32.xlu0 %v2702, 17
      %v2709 = vpop.permute.xlu0 %2708
      %2710 = vrot.lane.b32.xlu0 %v2704, 17
      %v2711 = vpop.permute.xlu0 %2710
      %2712 = vrot.lane.b32.xlu0 %v2703, 17
      %v2713 = vpop.permute.xlu0 %2712
      %2714 = vrot.lane.b32.xlu0 %v2705, 17
      %v2715 = vpop.permute.xlu0 %2714
      %v2716 = vsel %vm706, %v2709, %v2713
      %v2717 = vsel %vm706, %v2711, %v2715
      %v2718 = vsel %vm706, %v2713, %v2709
      %v2719 = vsel %vm706, %v2715, %v2711
      %v2720 = vmul.f32 %v2718, %v709
      %v2721 = vmul.f32 %v2716, %v710
      %v2722 = vmul.f32 %v2719, %v709
      %v2723 = vmul.f32 %v2717, %v710
      %v2724 = vpack.c.bf16 %v2721, %v2720
      %v2725 = vpack.c.bf16 %v2723, %v2722
      %2726 = vrot.lane.b32.xlu0 %v2702, 16
      %v2727 = vpop.permute.xlu0 %2726
      %2728 = vrot.lane.b32.xlu0 %v2704, 16
      %v2729 = vpop.permute.xlu0 %2728
      %2730 = vrot.lane.b32.xlu0 %v2703, 16
      %v2731 = vpop.permute.xlu0 %2730
      %2732 = vrot.lane.b32.xlu0 %v2705, 16
      %v2733 = vpop.permute.xlu0 %2732
      %v2734 = vsel %vm723, %v2727, %v2731
      %v2735 = vsel %vm723, %v2729, %v2733
      %v2736 = vsel %vm723, %v2731, %v2727
      %v2737 = vsel %vm723, %v2733, %v2729
      %v2738 = vmul.f32 %v2736, %v726
      %v2739 = vmul.f32 %v2734, %v727
      %v2740 = vmul.f32 %v2737, %v726
      %v2741 = vmul.f32 %v2735, %v727
      %v2742 = vpack.c.bf16 %v2739, %v2738
      %v2743 = vpack.c.bf16 %v2741, %v2740
      %2744 = vrot.lane.b32.xlu0 %v2702, 15
      %v2745 = vpop.permute.xlu0 %2744
      %2746 = vrot.lane.b32.xlu0 %v2704, 15
      %v2747 = vpop.permute.xlu0 %2746
      %2748 = vrot.lane.b32.xlu0 %v2703, 15
      %v2749 = vpop.permute.xlu0 %2748
      %2750 = vrot.lane.b32.xlu0 %v2705, 15
      %v2751 = vpop.permute.xlu0 %2750
      %v2752 = vsel %vm740, %v2745, %v2749
      %v2753 = vsel %vm740, %v2747, %v2751
      %v2754 = vsel %vm740, %v2749, %v2745
      %v2755 = vsel %vm740, %v2751, %v2747
      %v2756 = vmul.f32 %v2754, %v743
      %v2757 = vmul.f32 %v2752, %v744
      %v2758 = vmul.f32 %v2755, %v743
      %v2759 = vmul.f32 %v2753, %v744
      %v2760 = vpack.c.bf16 %v2757, %v2756
      %v2761 = vpack.c.bf16 %v2759, %v2758
      %2762 = vrot.lane.b32.xlu0 %v2702, 1
      %v2763 = vpop.permute.xlu0 %2762
      %2764 = vrot.lane.b32.xlu0 %v2704, 1
      %v2765 = vpop.permute.xlu0 %2764
      %2766 = vrot.lane.b32.xlu0 %v2703, 1
      %v2767 = vpop.permute.xlu0 %2766
      %2768 = vrot.lane.b32.xlu0 %v2705, 1
      %v2769 = vpop.permute.xlu0 %2768
      %v2770 = vsel %vm757, %v2763, %v2767
      %v2771 = vsel %vm757, %v2765, %v2769
      %v2772 = vsel %vm757, %v2767, %v2763
      %v2773 = vsel %vm757, %v2769, %v2765
      %v2774 = vmul.f32 %v2772, %v760
      %v2775 = vmul.f32 %v2770, %v761
      %v2776 = vmul.f32 %v2773, %v760
      %v2777 = vmul.f32 %v2771, %v761
      %v2778 = vpack.c.bf16 %v2775, %v2774
      %v2779 = vpack.c.bf16 %v2777, %v2776
      %v2780 = vpack.c.bf16 %v2703, %v2702
      %v2781 = vpack.c.bf16 %v2705, %v2704
      %2782 = vrot.lane.b32.xlu0 %v2702, 127
      %v2783 = vpop.permute.xlu0 %2782
      %2784 = vrot.lane.b32.xlu0 %v2704, 127
      %v2785 = vpop.permute.xlu0 %2784
      %2786 = vrot.lane.b32.xlu0 %v2703, 127
      %v2787 = vpop.permute.xlu0 %2786
      %2788 = vrot.lane.b32.xlu0 %v2705, 127
      %v2789 = vpop.permute.xlu0 %2788
      %v2790 = vsel %vm780, %v2783, %v2787
      %v2791 = vsel %vm780, %v2785, %v2789
      %v2792 = vsel %vm780, %v2787, %v2783
      %v2793 = vsel %vm780, %v2789, %v2785
      %v2794 = vmul.f32 %v2790, %v783
      %v2795 = vmul.f32 %v2792, %v784
      %v2796 = vmul.f32 %v2791, %v783
      %v2797 = vmul.f32 %v2793, %v784
      %v2798 = vpack.c.bf16 %v2795, %v2794
      %v2799 = vpack.c.bf16 %v2797, %v2796
      %2800 = vrot.lane.b32.xlu0 %v2702, 113
      %v2801 = vpop.permute.xlu0 %2800
      %2802 = vrot.lane.b32.xlu0 %v2704, 113
      %v2803 = vpop.permute.xlu0 %2802
      %2804 = vrot.lane.b32.xlu0 %v2703, 113
      %v2805 = vpop.permute.xlu0 %2804
      %2806 = vrot.lane.b32.xlu0 %v2705, 113
      %v2807 = vpop.permute.xlu0 %2806
      %v2808 = vsel %vm797, %v2801, %v2805
      %v2809 = vsel %vm797, %v2803, %v2807
      %v2810 = vsel %vm797, %v2805, %v2801
      %v2811 = vsel %vm797, %v2807, %v2803
      %v2812 = vmul.f32 %v2808, %v800
      %v2813 = vmul.f32 %v2810, %v801
      %v2814 = vmul.f32 %v2809, %v800
      %v2815 = vmul.f32 %v2811, %v801
      %v2816 = vpack.c.bf16 %v2813, %v2812
      %v2817 = vpack.c.bf16 %v2815, %v2814
      %2818 = vrot.lane.b32.xlu0 %v2702, 112
      %v2819 = vpop.permute.xlu0 %2818
      %2820 = vrot.lane.b32.xlu0 %v2704, 112
      %v2821 = vpop.permute.xlu0 %2820
      %2822 = vrot.lane.b32.xlu0 %v2703, 112
      %v2823 = vpop.permute.xlu0 %2822
      %2824 = vrot.lane.b32.xlu0 %v2705, 112
      %v2825 = vpop.permute.xlu0 %2824
      %v2826 = vsel %vm814, %v2819, %v2823
      %v2827 = vsel %vm814, %v2821, %v2825
      %v2828 = vsel %vm814, %v2823, %v2819
      %v2829 = vsel %vm814, %v2825, %v2821
      %v2830 = vmul.f32 %v2826, %v817
      %v2831 = vmul.f32 %v2828, %v818
      %v2832 = vmul.f32 %v2827, %v817
      %v2833 = vmul.f32 %v2829, %v818
      %v2834 = vpack.c.bf16 %v2831, %v2830
      %v2835 = vpack.c.bf16 %v2833, %v2832
      %2836 = vrot.lane.b32.xlu0 %v2702, 111
      %v2837 = vpop.permute.xlu0 %2836
      %2838 = vrot.lane.b32.xlu0 %v2704, 111
      %v2839 = vpop.permute.xlu0 %2838
      %2840 = vrot.lane.b32.xlu0 %v2703, 111
      %v2841 = vpop.permute.xlu0 %2840
      %2842 = vrot.lane.b32.xlu0 %v2705, 111
      %v2843 = vpop.permute.xlu0 %2842
      %v2844 = vsel %vm831, %v2837, %v2841
      %v2845 = vsel %vm831, %v2839, %v2843
      %v2846 = vsel %vm831, %v2841, %v2837
      %v2847 = vsel %vm831, %v2843, %v2839
      %v2848 = vmul.f32 %v2844, %v834
      %v2849 = vmul.f32 %v2846, %v835
      %v2850 = vmul.f32 %v2845, %v834
      %v2851 = vmul.f32 %v2847, %v835
      %v2852 = vpack.c.bf16 %v2849, %v2848
      %v2853 = vpack.c.bf16 %v2851, %v2850
      %v2856 = vunpack.c.l.b16 %v2724
      %v2857 = vunpack.c.h.b16 %v2724
      %v2858 = vunpack.c.l.b16 %v2725
      %v2859 = vunpack.c.h.b16 %v2725
      %v2860 = vpack.c.b16 %v2858, %v2856
      %v2861 = vpack.c.b16 %v2859, %v2857
      %v2866 = vunpack.c.l.b16 %v2742
      %v2867 = vunpack.c.h.b16 %v2742
      %v2868 = vunpack.c.l.b16 %v2743
      %v2869 = vunpack.c.h.b16 %v2743
      %v2870 = vpack.c.b16 %v2868, %v2866
      %v2871 = vpack.c.b16 %v2869, %v2867
      %v2876 = vunpack.c.l.b16 %v2760
      %v2877 = vunpack.c.h.b16 %v2760
      %v2878 = vunpack.c.l.b16 %v2761
      %v2879 = vunpack.c.h.b16 %v2761
      %v2880 = vpack.c.b16 %v2878, %v2876
      %v2881 = vpack.c.b16 %v2879, %v2877
      %v2886 = vunpack.c.l.b16 %v2778
      %v2887 = vunpack.c.h.b16 %v2778
      %v2888 = vunpack.c.l.b16 %v2779
      %v2889 = vunpack.c.h.b16 %v2779
      %v2890 = vpack.c.b16 %v2888, %v2886
      %v2891 = vpack.c.b16 %v2889, %v2887
      %v2896 = vunpack.c.l.b16 %v2780
      %v2897 = vunpack.c.h.b16 %v2780
      %v2898 = vunpack.c.l.b16 %v2781
      %v2899 = vunpack.c.h.b16 %v2781
      %v2900 = vpack.c.b16 %v2898, %v2896
      %v2901 = vpack.c.b16 %v2899, %v2897
      %v2906 = vunpack.c.l.b16 %v2798
      %v2907 = vunpack.c.h.b16 %v2798
      %v2908 = vunpack.c.l.b16 %v2799
      %v2909 = vunpack.c.h.b16 %v2799
      %v2910 = vpack.c.b16 %v2908, %v2906
      %v2911 = vpack.c.b16 %v2909, %v2907
      %v2916 = vunpack.c.l.b16 %v2816
      %v2917 = vunpack.c.h.b16 %v2816
      %v2918 = vunpack.c.l.b16 %v2817
      %v2919 = vunpack.c.h.b16 %v2817
      %v2920 = vpack.c.b16 %v2918, %v2916
      %v2921 = vpack.c.b16 %v2919, %v2917
      %v2926 = vunpack.c.l.b16 %v2834
      %v2927 = vunpack.c.h.b16 %v2834
      %v2928 = vunpack.c.l.b16 %v2835
      %v2929 = vunpack.c.h.b16 %v2835
      %v2930 = vpack.c.b16 %v2928, %v2926
      %v2931 = vpack.c.b16 %v2929, %v2927
      %v2936 = vunpack.c.l.b16 %v2852
      %v2937 = vunpack.c.h.b16 %v2852
      %v2938 = vunpack.c.l.b16 %v2853
      %v2939 = vunpack.c.h.b16 %v2853
      %v2940 = vpack.c.b16 %v2938, %v2936
      %v2941 = vpack.c.b16 %v2939, %v2937
      %2945 = vset.pattern.permute.xlu0 0
      %2946 = vperm.xlu0 %2945, %v2707
      %v2947 = vpop.permute.xlu0 %2946
      %2950 = vst [vmem:[#allocation1] ss:$4 sm:$0xff] %v2706
      %v2951 = vld.sshfl [vmem:[#allocation1] sm:$0xff pattern:$0x73625140]
      %v2952 = vld.sshfl [vmem:[#allocation1 + $0x8] sm:$0xff pattern:$0x73625140]
      %v2954 = vsel %vm2258, %v2952, 0
      %2956 = vmatpush.bf16.msra.mxu0 %v2930
      %2957 = vmatpush.bf16.msra.mxu0 %v2920
      %2958 = vmatpush.bf16.msra.mxu0 %v2910
      %2959 = vmatpush.bf16.msra.mxu0 %v2900
      %2960 = vmatpush.bf16.msra.mxu0 %v2890
      %2961 = vmatpush.bf16.msra.mxu0 %v2880
      %2962 = vmatpush.bf16.msra.mxu0 %v2870
      %2963 = vmatpush.bf16.msra.mxu0 %v2860
      %2964 = vmatmul.bf16.gmra.mxu0 %v2951
      %v2965 = vpop.f32.mrf.mxu0
      %v2966 = vadd.f32 %v2947, %v2965
      %v2967 = vpop.f32.mrf.mxu0
      %2968 = vdwg.mxu0
      %2969 = vmatpush.bf16.msra.mxu0 0
      %2970 = vmatpush.bf16.msra.mxu0 0
      %2971 = vmatpush.bf16.msra.mxu0 0
      %2972 = vmatpush.bf16.msra.mxu0 0
      %2973 = vmatpush.bf16.msra.mxu0 0
      %2974 = vmatpush.bf16.msra.mxu0 0
      %2975 = vmatpush.bf16.msra.mxu0 0
      %2976 = vmatpush.bf16.msra.mxu0 %v2940
      %2977 = vmatmul.bf16.gmra.mxu0 %v2954
      %v2978 = vpop.f32.mrf.mxu0
      %v2979 = vadd.f32 %v2966, %v2978
      %v2980 = vpop.f32.mrf.mxu0
      %2981 = vdwg.mxu0
      %2982 = vmatpush.bf16.msra.mxu0 %v2931
      %2983 = vmatpush.bf16.msra.mxu0 %v2921
      %2984 = vmatpush.bf16.msra.mxu0 %v2911
      %2985 = vmatpush.bf16.msra.mxu0 %v2901
      %2986 = vmatpush.bf16.msra.mxu0 %v2891
      %2987 = vmatpush.bf16.msra.mxu0 %v2881
      %2988 = vmatpush.bf16.msra.mxu0 %v2871
      %2989 = vmatpush.bf16.msra.mxu0 %v2861
      %2990 = vmatmul.bf16.gmra.mxu0 %v2951
      %v2991 = vpop.f32.mrf.mxu0
      %v2992 = vadd.f32 %v2947, %v2991
      %v2993 = vpop.f32.mrf.mxu0
      %2994 = vdwg.mxu0
      %2995 = vmatpush.bf16.msra.mxu0 0
      %2996 = vmatpush.bf16.msra.mxu0 0
      %2997 = vmatpush.bf16.msra.mxu0 0
      %2998 = vmatpush.bf16.msra.mxu0 0
      %2999 = vmatpush.bf16.msra.mxu0 0
      %3000 = vmatpush.bf16.msra.mxu0 0
      %3001 = vmatpush.bf16.msra.mxu0 0
      %3002 = vmatpush.bf16.msra.mxu0 %v2941
      %3003 = vmatmul.bf16.gmra.mxu0 %v2954
      %v3004 = vpop.f32.mrf.mxu0
      %v3005 = vadd.f32 %v2992, %v3004
      %v3006 = vpop.f32.mrf.mxu0
      %3007 = vdwg.mxu0
      %v3010 = vrot.slane %v3005, 4
      %v3011 = vsel %vm899, %v2979, %v3010
      %3013 = vst [vmem:[%s683] sm:$0xff] %v3011
      %p3014 = scmp.lt.s32.totalorder %s33, 1
      %s3015 = scalar_select %p3014, %s33, 1
      %s3016 = smul.addr %s3015, 2
      %s3017 = smul.addr %s3016, 4
      %s3018 = scalar_lea.vmem %s22, %s3017
      // Predicated region
      $region116: #{rrdbnet_ca_forward.1} parent=107 // pred_check
        %p3019 = pneg %p518
      $region117: #{rrdbnet_ca_forward.1} parent=107 // pred_check_branch
        %3021 = sbr.rel (%p3019) target = $region119
      $region118: #{rrdbnet_ca_forward.1} parent=107 // pred_region
        _
      $region119: #{rrdbnet_ca_forward.1} parent=107 // pred_fallthru
        _
    $region108: #{rrdbnet_ca_forward.1} parent=5 // pred_fallthru
      _
    %p3022 = scmp.le.s32.totalorder 2, %s28
    // Predicated region
    $region120: #{rrdbnet_ca_forward.1} parent=5 // pred_check
      %p3023 = pneg %p3022
    $region121: #{rrdbnet_ca_forward.1} parent=5 // pred_check_branch
      %3025 = sbr.rel (%p3023) target = $region123
    $region122: #{rrdbnet_ca_forward.1} parent=5 // pred_region
      %s3026 = ssub.s32 %s28, 2
      // Predicated region
      $region124: #{rrdbnet_ca_forward.1} parent=122 // pred_check
        %p3027 = pneg %p524
      $region125: #{rrdbnet_ca_forward.1} parent=122 // pred_check_branch
        %3029 = sbr.rel (%p3027) target = $region127
      $region126: #{rrdbnet_ca_forward.1} parent=122 // pred_region
        %p3030 = scmp.lt.s32.totalorder %s34, 1
        %s3031 = scalar_select %p3030, %s34, 1
        %s3032 = smul.addr %s3031, 2
        %s3033 = smul.addr %s3032, 4
        %s3034 = scalar_lea.vmem %s22, %s3033
      $region127: #{rrdbnet_ca_forward.1} parent=122 // pred_fallthru
        _
    $region123: #{rrdbnet_ca_forward.1} parent=5 // pred_fallthru
      _
  $region6: #{rrdbnet_ca_forward.1} parent=0 // loop_footer
    %s32 = sadd.s32 1, %s28
  $region7: #{rrdbnet_ca_forward.1} parent=0 // loop_footer_branch
    %27 = sbr.rel target = $region3
  $region8: #{rrdbnet_ca_forward.1} parent=0 // loop_exit
    _

</llo_original>
